<compile_context>
chip_gen: v5e
topology: v5e:2x2
jax: 0.10.0
libtpu: 0.0.40
codegen_flags: <defaults>
</compile_context>

<pallas_src>
import functools

import jax
import jax.numpy as jnp
from jax.experimental import pallas as pl
from jax.experimental.pallas import tpu as pltpu

EPS = 1e-5


# --------------------------------------------------------------------------- #
# In-kernel helpers (merged layout: rows on sublanes, W*C on lanes)
# --------------------------------------------------------------------------- #
def _conv_tile(xmain_ref, xtop_ref, xbot_ref, dwm_ref, *, d, th, w, c):
    """Depthwise 3x3 dilated conv of ReLU(ReflectionPad2d_d(x)) for one row tile.

    xmain_ref : (1, TH, W*C)  rows [r0, r0+TH) of x (pre-ReLU)
    xtop_ref  : (1, HB, W*C)  rows just above the tile (last d rows used when t > 0)
    xbot_ref  : (1, HB, W*C)  rows just below the tile (first d rows used, t < T-1)
    dwm_ref   : (3, 3, W*C)   depthwise weights tiled W times along lanes
    Returns (y, res): conv output and the un-activated tile (== residual input x).
    """
    wc = w * c
    t = pl.program_id(1)
    nt = pl.num_programs(1)

    main = xmain_ref[0].astype(jnp.float32)                       # (TH, WC)

    # ---- H direction: real halo rows or in-tile reflection at image edges ----
    top_blk = xtop_ref[0].astype(jnp.float32)
    bot_blk = xbot_ref[0].astype(jnp.float32)
    hb = top_blk.shape[0]
    top_halo = top_blk[hb - d:hb]                                 # rows r0-d .. r0-1
    bot_halo = bot_blk[0:d]                                       # rows r0+TH .. +d-1
    top_refl = jnp.concatenate([main[k:k + 1] for k in range(d, 0, -1)], axis=0)
    bot_refl = jnp.concatenate([main[th - 1 - k:th - k] for k in range(1, d + 1)],
                               axis=0)
    top = jnp.where(t > 0, top_halo, top_refl)
    bot = jnp.where(t < nt - 1, bot_halo, bot_refl)

    # ReLU commutes with reflection padding -> pad first, activate once.
    xr = jnp.maximum(jnp.concatenate([top, main, bot], axis=0), 0.0)  # (TH+2d, WC)

    # ---- W direction: three reflected column views (fused ReflectionPad2d) ----
    left_refl = jnp.concatenate(
        [xr[:, k * c:(k + 1) * c] for k in range(d, 0, -1)], axis=1)        # cols d..1
    right_refl = jnp.concatenate(
        [xr[:, (w - 1 - k) * c:(w - k) * c] for k in range(1, d + 1)], axis=1)
    views = (jnp.concatenate([left_refl, xr[:, :(w - d) * c]], axis=1),     # col j-d
             xr,                                                            # col j
             jnp.concatenate([xr[:, d * c:], right_refl], axis=1))          # col j+d

    dwm = dwm_ref[...].astype(jnp.float32)                        # (3, 3, WC)
    acc = jnp.zeros((th, wc), jnp.float32)
    for kh in range(3):
        for kw in range(3):
            acc = acc + views[kw][kh * d: kh * d + th, :] * dwm[kh, kw, :]
    return acc, main


def _pointwise(y2, pmat, c, wc):
    """1x1 conv (channel mixing) in the merged layout: 2*C-1 lane-rotated FMAs.

    pmat[idx, w*C + co] = pw[co, co + s]  with s = idx - (C-1)  (zero out of range),
    so every wrapped / cross-column lane read is multiplied by a zero coefficient.
    """
    z = jnp.zeros_like(y2)
    for idx in range(2 * c - 1):
        s = (idx - (c - 1)) % wc
        rolled = y2 if s == 0 else jnp.concatenate([y2[:, s:], y2[:, :s]], axis=1)
        z = z + rolled * pmat[idx, :]
    return z


def _accumulate_stats(stats_ref, vals, t):
    """Accumulate per-lane (sum, sum-of-squares) into the resident (1, 2, WC) block."""
    s = jnp.sum(vals, axis=0, keepdims=True)                      # (1, WC)
    q = jnp.sum(vals * vals, axis=0, keepdims=True)               # (1, WC)
    tile = jnp.concatenate([s, q], axis=0)[None]                  # (1, 2, WC)

    @pl.when(t == 0)
    def _():
        stats_ref[...] = jnp.zeros_like(stats_ref)

    stats_ref[...] += tile


# --------------------------------------------------------------------------- #
# Kernels
# --------------------------------------------------------------------------- #
def _stats1_kernel(xmain_ref, xtop_ref, xbot_ref, dwm_ref, stats_ref,
                   *, d, th, w, c):
    y, _ = _conv_tile(xmain_ref, xtop_ref, xbot_ref, dwm_ref, d=d, th=th, w=w, c=c)
    _accumulate_stats(stats_ref, y, pl.program_id(1))


def _stats2_kernel(xmain_ref, xtop_ref, xbot_ref, dwm_ref, aff1_ref, pmat_ref,
                   stats_ref, *, d, th, w, c):
    y, _ = _conv_tile(xmain_ref, xtop_ref, xbot_ref, dwm_ref, d=d, th=th, w=w, c=c)
    aff1 = aff1_ref[...]
    y2 = jnp.maximum(y * aff1[0] + aff1[1], 0.0)
    z = _pointwise(y2, pmat_ref[...], c, w * c)
    _accumulate_stats(stats_ref, z, pl.program_id(1))


def _final_kernel(xmain_ref, xtop_ref, xbot_ref, dwm_ref, aff1_ref, pmat_ref,
                  aff2_ref, out_ref, *, d, th, w, c):
    y, res = _conv_tile(xmain_ref, xtop_ref, xbot_ref, dwm_ref, d=d, th=th, w=w, c=c)
    aff1 = aff1_ref[...]
    aff2 = aff2_ref[...]
    y2 = jnp.maximum(y * aff1[0] + aff1[1], 0.0)
    z = _pointwise(y2, pmat_ref[...], c, w * c)
    out = res + z * aff2[0] + aff2[1]
    out_ref[...] = out[None].astype(out_ref.dtype)                # lane-dense store


# --------------------------------------------------------------------------- #
# Wrapper helpers
# --------------------------------------------------------------------------- #
def _vmem_capacity_bytes():
    try:
        info = pltpu.get_tpu_info()
        return int(getattr(info, "vmem_capacity_bytes", 128 << 20))
    except Exception:                     # conservative default when query fails
        return 128 << 20


def _pick_tile_rows(N, H, W, C, d, vmem_cap):
    """Rows per tile (multiple of 8 dividing H, or H itself), sized per generation."""
    wc_bytes = max(W * C * 4, 1)
    # ~3 MiB row-group tiles on 128 MiB-VMEM parts (v5e/v6e), ~1.5 MiB on v7x (64 MiB).
    target_bytes = (3 << 20) if vmem_cap >= (96 << 20) else (3 << 19)
    target_rows = max(8, target_bytes // wc_bytes)
    hb = min(8 * ((d + 7) // 8), H)       # halo block height (sublane aligned)
    cands = [t for t in range(8, H + 1, 8)
             if H % t == 0 and t % hb == 0 and t > d]
    fits = [t for t in cands if t <= target_rows]
    if fits:
        even = [t for t in fits if (N * (H // t)) % 2 == 0]   # v7x: 2-TC balance
        th = max(even) if even else max(fits)
    elif cands:
        th = min(cands)
    else:
        # TODO(synk): relax the TH | H constraint with a masked partial last tile.
        th = H
    return th, hb


def _bn_affine_merged(stats, gamma, beta, count, w, c):
    """Fold batch stats + BN affine into per-channel (scale, shift), tiled to (2, W*C)."""
    st = jnp.sum(stats, axis=0).reshape(2, w, c).sum(axis=1)      # (2, C)
    mu = st[0] / count
    # NOTE: single-pass E[x^2]-E[x]^2 (biased, training-mode); fine at fp32 here.
    var = jnp.maximum(st[1] / count - mu * mu, 0.0)
    scale = gamma.astype(jnp.float32) * jax.lax.rsqrt(var + EPS)
    shift = beta.astype(jnp.float32) - mu * scale
    return jnp.tile(jnp.stack([scale, shift]), (1, w))            # (2, W*C)


# --------------------------------------------------------------------------- #
# Public entry point
# --------------------------------------------------------------------------- #
@functools.partial(jax.jit, static_argnames=("dilation", "tile_rows"))
def sep_residual_block(x_nchw, dw_weight, pw_weight, gamma1, beta1,
                       gamma2, beta2, dilation=1, tile_rows=None):
    """x_nchw: (N, C, H, W).  Returns (N, C, H, W), same dtype as x."""
    N, C, H, W = x_nchw.shape
    d = int(dilation)
    if not (0 < d < min(H, W)):
        raise ValueError("ReflectionPad2d requires 0 < dilation < min(H, W)")
    WC = W * C

    vmem_cap = _vmem_capacity_bytes()
    if tile_rows is None:
        TH, HB = _pick_tile_rows(N, H, W, C, d, vmem_cap)
    else:
        TH = int(tile_rows)
        HB = min(8 * ((d + 7) // 8), H)
        if H % TH or TH <= d or (TH % 8 and TH != H) or (TH != H and TH % HB):
            raise ValueError("invalid tile_rows")
    T = H // TH
    M = max(TH // HB, 1)                  # halo blocks per main tile
    HBLKS = max(H // HB, 1)

    # ---- wrapper layout prep: NCHW -> merged (N, H, W*C) (lane-dense) ----
    xm = jnp.transpose(x_nchw, (0, 2, 3, 1)).reshape(N, H, WC).astype(jnp.float32)
    # Depthwise weights: dwm[kh, kw, w*C + c] = dw_weight[c, 0, kh, kw]
    dwm = jnp.tile(jnp.transpose(dw_weight[:, 0].astype(jnp.float32), (1, 2, 0)),
                   (1, 1, W))                                     # (3, 3, WC)
    # 1x1 conv as 2C-1 lane-shift coefficient patterns.
    pw_mat = pw_weight[:, :, 0, 0].astype(jnp.float32)            # (Cout, Cin)
    co = jnp.arange(C)
    rows = []
    for s in range(-(C - 1), C):
        ci = co + s
        coef = jnp.where((ci >= 0) & (ci < C),
                         pw_mat[co, jnp.clip(ci, 0, C - 1)], 0.0)
        rows.append(jnp.tile(coef, W))
    pmat = jnp.stack(rows)                                        # (2C-1, WC)

    # ---- block specs ----
    xmain_spec = pl.BlockSpec((1, TH, WC), lambda n, t: (n, t, 0))
    xtop_spec = pl.BlockSpec(
        (1, HB, WC), lambda n, t: (n, jnp.maximum(t * M - 1, 0), 0))
    xbot_spec = pl.BlockSpec(
        (1, HB, WC), lambda n, t: (n, jnp.minimum((t + 1) * M, HBLKS - 1), 0))
    dwm_spec = pl.BlockSpec((3, 3, WC), lambda n, t: (0, 0, 0))
    aff_spec = pl.BlockSpec((2, WC), lambda n, t: (0, 0))
    pmat_spec = pl.BlockSpec((2 * C - 1, WC), lambda n, t: (0, 0))
    stats_spec = pl.BlockSpec((1, 2, WC), lambda n, t: (n, 0, 0))
    out_spec = pl.BlockSpec((1, TH, WC), lambda n, t: (n, t, 0))

    # ---- VMEM budget: tight estimate, capped at 75% of physical VMEM ----
    tile_bytes = (TH + 2 * d) * WC * 4
    est = (2 * (TH + 2 * HB) * WC * 4          # double-buffered xmain/xtop/xbot
           + 2 * TH * WC * 4                   # double-buffered output block
           + 8 * tile_bytes                    # in-kernel fp32 temporaries
           + 4 * (9 + 2 + 2 + 2 * C - 1) * WC * 4)   # resident weights / affines
    vmem_limit = int(min(0.75 * vmem_cap, max(16 << 20, 1.5 * est)))
    cp_stats = pltpu.CompilerParams(
        dimension_semantics=("parallel", "arbitrary"),   # T accumulates in place
        vmem_limit_bytes=vmem_limit)
    cp_final = pltpu.CompilerParams(
        dimension_semantics=("parallel", "parallel"),
        vmem_limit_bytes=vmem_limit)

    grid = (N, T)
    statics = dict(d=d, th=TH, w=W, c=C)
    count = N * H * W

    # Pass 1: BN1 batch statistics of the depthwise-conv output.
    stats1 = pl.pallas_call(
        functools.partial(_stats1_kernel, **statics),
        out_shape=jax.ShapeDtypeStruct((N, 2, WC), jnp.float32), grid=grid,
        in_specs=[xmain_spec, xtop_spec, xbot_spec, dwm_spec],
        out_specs=stats_spec, compiler_params=cp_stats,
    )(xm, xm, xm, dwm)
    aff1 = _bn_affine_merged(stats1, gamma1, beta1, count, W, C)

    # Pass 2: BN2 batch statistics of the pointwise-conv output.
    stats2 = pl.pallas_call(
        functools.partial(_stats2_kernel, **statics),
        out_shape=jax.ShapeDtypeStruct((N, 2, WC), jnp.float32), grid=grid,
        in_specs=[xmain_spec, xtop_spec, xbot_spec, dwm_spec, aff_spec, pmat_spec],
        out_specs=stats_spec, compiler_params=cp_stats,
    )(xm, xm, xm, dwm, aff1, pmat)
    aff2 = _bn_affine_merged(stats2, gamma2, beta2, count, W, C)

    # Pass 3: BN1 affine + ReLU, 1x1 conv, BN2 affine, residual add.
    out_m = pl.pallas_call(
        functools.partial(_final_kernel, **statics),
        out_shape=jax.ShapeDtypeStruct((N, H, WC), jnp.float32), grid=grid,
        in_specs=[xmain_spec, xtop_spec, xbot_spec, dwm_spec, aff_spec, pmat_spec,
                  aff_spec],
        out_specs=out_spec, compiler_params=cp_final,
    )(xm, xm, xm, dwm, aff1, pmat, aff2)

    out = jnp.transpose(out_m.reshape(N, H, W, C), (0, 3, 1, 2))
    return out.astype(x_nchw.dtype)


# --------------------------------------------------------------------------- #
# Pure-JAX reference (mirrors the PyTorch module in training mode)
# --------------------------------------------------------------------------- #
def _ref_forward(x, dw_weight, pw_weight, g1, b1, g2, b2, dilation):
    d = dilation
    C = x.shape[1]
    h = jnp.maximum(x, 0.0)
    hp = jnp.pad(h, ((0, 0), (0, 0), (d, d), (d, d)), mode="reflect")
    y = jax.lax.conv_general_dilated(
        hp, dw_weight, window_strides=(1, 1), padding="VALID",
        rhs_dilation=(d, d), feature_group_count=C,
        dimension_numbers=("NCHW", "OIHW", "NCHW"))

    def bn(t, g, b):
        mu = jnp.mean(t, axis=(0, 2, 3), keepdims=True)
        var = jnp.mean((t - mu) ** 2, axis=(0, 2, 3), keepdims=True)
        return ((t - mu) * jax.lax.rsqrt(var + EPS)
                * g.reshape(1, -1, 1, 1) + b.reshape(1, -1, 1, 1))

    y = bn(y, g1, b1)
    y = jnp.maximum(y, 0.0)
    z = jnp.einsum("oc,nchw->nohw", pw_weight[:, :, 0, 0], y)
    z = bn(z, g2, b2)
    return x + z


if __name__ == "__main__":
    N, C, H, W = 2, 4, 16, 16

    key = jax.random.PRNGKey(0)
    kx, kdw, kpw, kg1, kb1, kg2, kb2 = jax.random.split(key, 7)

    x = jax.random.normal(kx, (N, C, H, W), dtype=jnp.float32)
    dw_weight = jax.random.normal(kdw, (C, 1, 3, 3), dtype=jnp.float32) * 0.3
    pw_weight = jax.random.normal(kpw, (C, C, 1, 1), dtype=jnp.float32) * 0.3
    gamma1 = 1.0 + 0.1 * jax.random.normal(kg1, (C,), dtype=jnp.float32)
    beta1 = 0.1 * jax.random.normal(kb1, (C,), dtype=jnp.float32)
    gamma2 = 1.0 + 0.1 * jax.random.normal(kg2, (C,), dtype=jnp.float32)
    beta2 = 0.1 * jax.random.normal(kb2, (C,), dtype=jnp.float32)

    def check(dilation, tile_rows=None):
        out = sep_residual_block(x, dw_weight, pw_weight, gamma1, beta1,
                                 gamma2, beta2, dilation=dilation,
                                 tile_rows=tile_rows)
        out = jax.block_until_ready(out)
        ref = jax.block_until_ready(
            _ref_forward(x, dw_weight, pw_weight, gamma1, beta1,
                         gamma2, beta2, dilation))
        assert out.shape == (N, C, H, W)
        err = float(jnp.max(jnp.abs(out - ref)))
        assert jnp.allclose(out, ref, atol=2e-3, rtol=2e-3), err

    check(1)                # single row-group tile (in-tile reflection only)
    check(2)                # dilation 2
    check(1, tile_rows=8)   # forced multi-tile: halo blocks + cross-tile BN stats
    check(2, tile_rows=8)
    print("KERNEL_OK")
</pallas_src>

<mosaic_0001>
module attributes {stable_mosaic.version = 11 : i64} {
  func.func @_stats1_kernel(%arg0: i32, %arg1: i32, %arg2: memref<1x16x64xf32, #tpu.memory_space<vmem>>, %arg3: memref<1x8x64xf32, #tpu.memory_space<vmem>>, %arg4: memref<1x8x64xf32, #tpu.memory_space<vmem>>, %arg5: memref<3x3x64xf32, #tpu.memory_space<vmem>>, %arg6: memref<1x2x64xf32, #tpu.memory_space<vmem>>) attributes {dimension_semantics = [#tpu.dimension_semantics<parallel>, #tpu.dimension_semantics<arbitrary>], iteration_bounds = array<i64: 2, 1>, scalar_prefetch = 0 : i64, scratch_operands = 0 : i64, tpu.core_type = #tpu.core_type<tc>, window_params = [{transform_indices = @transform_0, window_bounds = array<i64: 1, 16, 64>}, {transform_indices = @transform_1, window_bounds = array<i64: 1, 8, 64>}, {transform_indices = @transform_2, window_bounds = array<i64: 1, 8, 64>}, {pipeline_mode = #tpu.pipeline_mode<synchronous>, transform_indices = @transform_3, window_bounds = array<i64: 3, 3, 64>}, {transform_indices = @transform_4, window_bounds = array<i64: 1, 2, 64>}]} {
    %c0 = arith.constant 0 : index
    %c0_0 = arith.constant 0 : index
    %c0_1 = arith.constant 0 : index
    %0 = vector.load %arg2[%c0, %c0_0, %c0_1] : memref<1x16x64xf32, #tpu.memory_space<vmem>>, vector<1x16x64xf32>
    %1 = vector.shape_cast %0 : vector<1x16x64xf32> to vector<16x64xf32>
    %c0_2 = arith.constant 0 : index
    %c0_3 = arith.constant 0 : index
    %c0_4 = arith.constant 0 : index
    %2 = vector.load %arg3[%c0_2, %c0_3, %c0_4] : memref<1x8x64xf32, #tpu.memory_space<vmem>>, vector<1x8x64xf32>
    %3 = vector.shape_cast %2 : vector<1x8x64xf32> to vector<8x64xf32>
    %c0_5 = arith.constant 0 : index
    %c0_6 = arith.constant 0 : index
    %c0_7 = arith.constant 0 : index
    %4 = vector.load %arg4[%c0_5, %c0_6, %c0_7] : memref<1x8x64xf32, #tpu.memory_space<vmem>>, vector<1x8x64xf32>
    %5 = vector.shape_cast %4 : vector<1x8x64xf32> to vector<8x64xf32>
    %6 = vector.extract_strided_slice %3 {offsets = [7, 0], sizes = [1, 64], strides = [1, 1]} : vector<8x64xf32> to vector<1x64xf32>
    %7 = vector.extract_strided_slice %5 {offsets = [0, 0], sizes = [1, 64], strides = [1, 1]} : vector<8x64xf32> to vector<1x64xf32>
    %8 = vector.extract_strided_slice %1 {offsets = [1, 0], sizes = [1, 64], strides = [1, 1]} : vector<16x64xf32> to vector<1x64xf32>
    %9 = vector.extract_strided_slice %1 {offsets = [14, 0], sizes = [1, 64], strides = [1, 1]} : vector<16x64xf32> to vector<1x64xf32>
    %c0_i32 = arith.constant 0 : i32
    %10 = arith.cmpi sgt, %arg1, %c0_i32 : i32
    %11 = arith.select %10, %6, %8 : vector<1x64xf32>
    %c0_i32_8 = arith.constant 0 : i32
    %12 = arith.cmpi slt, %arg1, %c0_i32_8 : i32
    %13 = arith.select %12, %7, %9 : vector<1x64xf32>
    %14 = tpu.concatenate %11, %1, %13 in 0 : vector<1x64xf32>, vector<16x64xf32>, vector<1x64xf32> -> vector<18x64xf32>
    %cst = arith.constant 0.000000e+00 : f32
    %15 = vector.broadcast %cst : f32 to vector<18x64xf32>
    %16 = arith.maximumf %14, %15 : vector<18x64xf32>
    %17 = vector.extract_strided_slice %16 {offsets = [0, 4], sizes = [18, 4], strides = [1, 1]} : vector<18x64xf32> to vector<18x4xf32>
    %18 = vector.extract_strided_slice %16 {offsets = [0, 56], sizes = [18, 4], strides = [1, 1]} : vector<18x64xf32> to vector<18x4xf32>
    %19 = vector.extract_strided_slice %16 {offsets = [0, 0], sizes = [18, 60], strides = [1, 1]} : vector<18x64xf32> to vector<18x60xf32>
    %20 = tpu.concatenate %17, %19 in 1 : vector<18x4xf32>, vector<18x60xf32> -> vector<18x64xf32>
    %21 = vector.extract_strided_slice %16 {offsets = [0, 4], sizes = [18, 60], strides = [1, 1]} : vector<18x64xf32> to vector<18x60xf32>
    %22 = tpu.concatenate %21, %18 in 1 : vector<18x60xf32>, vector<18x4xf32> -> vector<18x64xf32>
    %c0_9 = arith.constant 0 : index
    %c0_10 = arith.constant 0 : index
    %c0_11 = arith.constant 0 : index
    %23 = vector.load %arg5[%c0_9, %c0_10, %c0_11] : memref<3x3x64xf32, #tpu.memory_space<vmem>>, vector<3x3x64xf32>
    %cst_12 = arith.constant 0.000000e+00 : f32
    %24 = vector.broadcast %cst_12 : f32 to vector<16x64xf32>
    %25 = vector.extract_strided_slice %20 {offsets = [0, 0], sizes = [16, 64], strides = [1, 1]} : vector<18x64xf32> to vector<16x64xf32>
    %26 = vector.extract_strided_slice %23 {offsets = [0, 0, 0], sizes = [1, 1, 64], strides = [1, 1, 1]} : vector<3x3x64xf32> to vector<1x1x64xf32>
    %27 = vector.shape_cast %26 : vector<1x1x64xf32> to vector<64xf32>
    %28 = vector.shape_cast %27 : vector<64xf32> to vector<1x64xf32>
    %29 = vector.broadcast %28 : vector<1x64xf32> to vector<16x64xf32>
    %30 = arith.mulf %25, %29 : vector<16x64xf32>
    %31 = arith.addf %24, %30 : vector<16x64xf32>
    %32 = vector.extract_strided_slice %16 {offsets = [0, 0], sizes = [16, 64], strides = [1, 1]} : vector<18x64xf32> to vector<16x64xf32>
    %33 = vector.extract_strided_slice %23 {offsets = [0, 1, 0], sizes = [1, 1, 64], strides = [1, 1, 1]} : vector<3x3x64xf32> to vector<1x1x64xf32>
    %34 = vector.shape_cast %33 : vector<1x1x64xf32> to vector<64xf32>
    %35 = vector.shape_cast %34 : vector<64xf32> to vector<1x64xf32>
    %36 = vector.broadcast %35 : vector<1x64xf32> to vector<16x64xf32>
    %37 = arith.mulf %32, %36 : vector<16x64xf32>
    %38 = arith.addf %31, %37 : vector<16x64xf32>
    %39 = vector.extract_strided_slice %22 {offsets = [0, 0], sizes = [16, 64], strides = [1, 1]} : vector<18x64xf32> to vector<16x64xf32>
    %40 = vector.extract_strided_slice %23 {offsets = [0, 2, 0], sizes = [1, 1, 64], strides = [1, 1, 1]} : vector<3x3x64xf32> to vector<1x1x64xf32>
    %41 = vector.shape_cast %40 : vector<1x1x64xf32> to vector<64xf32>
    %42 = vector.shape_cast %41 : vector<64xf32> to vector<1x64xf32>
    %43 = vector.broadcast %42 : vector<1x64xf32> to vector<16x64xf32>
    %44 = arith.mulf %39, %43 : vector<16x64xf32>
    %45 = arith.addf %38, %44 : vector<16x64xf32>
    %46 = vector.extract_strided_slice %20 {offsets = [1, 0], sizes = [16, 64], strides = [1, 1]} : vector<18x64xf32> to vector<16x64xf32>
    %47 = vector.extract_strided_slice %23 {offsets = [1, 0, 0], sizes = [1, 1, 64], strides = [1, 1, 1]} : vector<3x3x64xf32> to vector<1x1x64xf32>
    %48 = vector.shape_cast %47 : vector<1x1x64xf32> to vector<64xf32>
    %49 = vector.shape_cast %48 : vector<64xf32> to vector<1x64xf32>
    %50 = vector.broadcast %49 : vector<1x64xf32> to vector<16x64xf32>
    %51 = arith.mulf %46, %50 : vector<16x64xf32>
    %52 = arith.addf %45, %51 : vector<16x64xf32>
    %53 = vector.extract_strided_slice %16 {offsets = [1, 0], sizes = [16, 64], strides = [1, 1]} : vector<18x64xf32> to vector<16x64xf32>
    %54 = vector.extract_strided_slice %23 {offsets = [1, 1, 0], sizes = [1, 1, 64], strides = [1, 1, 1]} : vector<3x3x64xf32> to vector<1x1x64xf32>
    %55 = vector.shape_cast %54 : vector<1x1x64xf32> to vector<64xf32>
    %56 = vector.shape_cast %55 : vector<64xf32> to vector<1x64xf32>
    %57 = vector.broadcast %56 : vector<1x64xf32> to vector<16x64xf32>
    %58 = arith.mulf %53, %57 : vector<16x64xf32>
    %59 = arith.addf %52, %58 : vector<16x64xf32>
    %60 = vector.extract_strided_slice %22 {offsets = [1, 0], sizes = [16, 64], strides = [1, 1]} : vector<18x64xf32> to vector<16x64xf32>
    %61 = vector.extract_strided_slice %23 {offsets = [1, 2, 0], sizes = [1, 1, 64], strides = [1, 1, 1]} : vector<3x3x64xf32> to vector<1x1x64xf32>
    %62 = vector.shape_cast %61 : vector<1x1x64xf32> to vector<64xf32>
    %63 = vector.shape_cast %62 : vector<64xf32> to vector<1x64xf32>
    %64 = vector.broadcast %63 : vector<1x64xf32> to vector<16x64xf32>
    %65 = arith.mulf %60, %64 : vector<16x64xf32>
    %66 = arith.addf %59, %65 : vector<16x64xf32>
    %67 = vector.extract_strided_slice %20 {offsets = [2, 0], sizes = [16, 64], strides = [1, 1]} : vector<18x64xf32> to vector<16x64xf32>
    %68 = vector.extract_strided_slice %23 {offsets = [2, 0, 0], sizes = [1, 1, 64], strides = [1, 1, 1]} : vector<3x3x64xf32> to vector<1x1x64xf32>
    %69 = vector.shape_cast %68 : vector<1x1x64xf32> to vector<64xf32>
    %70 = vector.shape_cast %69 : vector<64xf32> to vector<1x64xf32>
    %71 = vector.broadcast %70 : vector<1x64xf32> to vector<16x64xf32>
    %72 = arith.mulf %67, %71 : vector<16x64xf32>
    %73 = arith.addf %66, %72 : vector<16x64xf32>
    %74 = vector.extract_strided_slice %16 {offsets = [2, 0], sizes = [16, 64], strides = [1, 1]} : vector<18x64xf32> to vector<16x64xf32>
    %75 = vector.extract_strided_slice %23 {offsets = [2, 1, 0], sizes = [1, 1, 64], strides = [1, 1, 1]} : vector<3x3x64xf32> to vector<1x1x64xf32>
    %76 = vector.shape_cast %75 : vector<1x1x64xf32> to vector<64xf32>
    %77 = vector.shape_cast %76 : vector<64xf32> to vector<1x64xf32>
    %78 = vector.broadcast %77 : vector<1x64xf32> to vector<16x64xf32>
    %79 = arith.mulf %74, %78 : vector<16x64xf32>
    %80 = arith.addf %73, %79 : vector<16x64xf32>
    %81 = vector.extract_strided_slice %22 {offsets = [2, 0], sizes = [16, 64], strides = [1, 1]} : vector<18x64xf32> to vector<16x64xf32>
    %82 = vector.extract_strided_slice %23 {offsets = [2, 2, 0], sizes = [1, 1, 64], strides = [1, 1, 1]} : vector<3x3x64xf32> to vector<1x1x64xf32>
    %83 = vector.shape_cast %82 : vector<1x1x64xf32> to vector<64xf32>
    %84 = vector.shape_cast %83 : vector<64xf32> to vector<1x64xf32>
    %85 = vector.broadcast %84 : vector<1x64xf32> to vector<16x64xf32>
    %86 = arith.mulf %81, %85 : vector<16x64xf32>
    %87 = arith.addf %80, %86 : vector<16x64xf32>
    %cst_13 = arith.constant dense<0.000000e+00> : vector<64xf32>
    %88 = vector.multi_reduction <add>, %87, %cst_13 [0] : vector<16x64xf32> to vector<64xf32>
    %89 = vector.shape_cast %88 : vector<64xf32> to vector<1x64xf32>
    %90 = arith.mulf %87, %87 : vector<16x64xf32>
    %cst_14 = arith.constant dense<0.000000e+00> : vector<64xf32>
    %91 = vector.multi_reduction <add>, %90, %cst_14 [0] : vector<16x64xf32> to vector<64xf32>
    %92 = vector.shape_cast %91 : vector<64xf32> to vector<1x64xf32>
    %93 = tpu.concatenate %89, %92 in 0 : vector<1x64xf32>, vector<1x64xf32> -> vector<2x64xf32>
    %94 = vector.shape_cast %93 : vector<2x64xf32> to vector<1x2x64xf32>
    %c0_i32_15 = arith.constant 0 : i32
    %95 = arith.cmpi eq, %arg1, %c0_i32_15 : i32
    %96 = arith.extui %95 : i1 to i32
    %c0_i32_16 = arith.constant 0 : i32
    %97 = arith.cmpi ne, %96, %c0_i32_16 : i32
    scf.if %97 {
      %cst_23 = arith.constant 0.000000e+00 : f32
      %101 = vector.broadcast %cst_23 : f32 to vector<1x2x64xf32>
      %c0_24 = arith.constant 0 : index
      %c0_25 = arith.constant 0 : index
      %c0_26 = arith.constant 0 : index
      %102 = vector.load %arg6[%c0_24, %c0_25, %c0_26] : memref<1x2x64xf32, #tpu.memory_space<vmem>>, vector<1x2x64xf32>
      tpu.vector_store %arg6[%c0_24, %c0_25, %c0_26], %101 {strides = array<i32>} : memref<1x2x64xf32, #tpu.memory_space<vmem>>, vector<1x2x64xf32>,
    } else {
    }
    %c0_17 = arith.constant 0 : index
    %c0_18 = arith.constant 0 : index
    %c0_19 = arith.constant 0 : index
    %98 = vector.load %arg6[%c0_17, %c0_18, %c0_19] : memref<1x2x64xf32, #tpu.memory_space<vmem>>, vector<1x2x64xf32>
    %99 = arith.addf %98, %94 : vector<1x2x64xf32>
    %c0_20 = arith.constant 0 : index
    %c0_21 = arith.constant 0 : index
    %c0_22 = arith.constant 0 : index
    %100 = vector.load %arg6[%c0_20, %c0_21, %c0_22] : memref<1x2x64xf32, #tpu.memory_space<vmem>>, vector<1x2x64xf32>
    tpu.vector_store %arg6[%c0_20, %c0_21, %c0_22], %99 {strides = array<i32>} : memref<1x2x64xf32, #tpu.memory_space<vmem>>, vector<1x2x64xf32>,
    return
  }
  func.func @transform_0(%arg0: i32, %arg1: i32) -> (i32, i32, i32) {
    %c0_i32 = arith.constant 0 : i32
    %c0_i32_0 = arith.constant 0 : i32
    return %arg0, %arg1, %c0_i32 : i32, i32, i32
  }
  func.func @transform_1(%arg0: i32, %arg1: i32) -> (i32, i32, i32) {
    %c2_i32 = arith.constant 2 : i32
    %0 = arith.muli %arg1, %c2_i32 : i32
    %c1_i32 = arith.constant 1 : i32
    %1 = arith.subi %0, %c1_i32 : i32
    %c0_i32 = arith.constant 0 : i32
    %2 = arith.maxsi %1, %c0_i32 : i32
    %c0_i32_0 = arith.constant 0 : i32
    %c0_i32_1 = arith.constant 0 : i32
    return %arg0, %2, %c0_i32_0 : i32, i32, i32
  }
  func.func @transform_2(%arg0: i32, %arg1: i32) -> (i32, i32, i32) {
    %c1_i32 = arith.constant 1 : i32
    %0 = arith.addi %arg1, %c1_i32 : i32
    %c2_i32 = arith.constant 2 : i32
    %1 = arith.muli %0, %c2_i32 : i32
    %c1_i32_0 = arith.constant 1 : i32
    %2 = arith.minsi %1, %c1_i32_0 : i32
    %c0_i32 = arith.constant 0 : i32
    %c0_i32_1 = arith.constant 0 : i32
    return %arg0, %2, %c0_i32 : i32, i32, i32
  }
  func.func @transform_3(%arg0: i32, %arg1: i32) -> (i32, i32, i32) {
    %c0_i32 = arith.constant 0 : i32
    %c0_i32_0 = arith.constant 0 : i32
    %c0_i32_1 = arith.constant 0 : i32
    %c0_i32_2 = arith.constant 0 : i32
    return %c0_i32, %c0_i32_0, %c0_i32_1 : i32, i32, i32
  }
  func.func @transform_4(%arg0: i32, %arg1: i32) -> (i32, i32, i32) {
    %c0_i32 = arith.constant 0 : i32
    %c0_i32_0 = arith.constant 0 : i32
    %c0_i32_1 = arith.constant 0 : i32
    return %arg0, %c0_i32, %c0_i32_0 : i32, i32, i32
  }
}

module attributes {stable_mosaic.version = 11 : i64} {
  func.func @_final_kernel(%arg0: i32, %arg1: i32, %arg2: memref<1x16x64xf32, #tpu.memory_space<vmem>>, %arg3: memref<1x8x64xf32, #tpu.memory_space<vmem>>, %arg4: memref<1x8x64xf32, #tpu.memory_space<vmem>>, %arg5: memref<3x3x64xf32, #tpu.memory_space<vmem>>, %arg6: memref<2x64xf32, #tpu.memory_space<vmem>>, %arg7: memref<7x64xf32, #tpu.memory_space<vmem>>, %arg8: memref<2x64xf32, #tpu.memory_space<vmem>>, %arg9: memref<1x16x64xf32, #tpu.memory_space<vmem>>) attributes {dimension_semantics = [#tpu.dimension_semantics<parallel>, #tpu.dimension_semantics<parallel>], iteration_bounds = array<i64: 2, 1>, scalar_prefetch = 0 : i64, scratch_operands = 0 : i64, tpu.core_type = #tpu.core_type<tc>, window_params = [{transform_indices = @transform_0, window_bounds = array<i64: 1, 16, 64>}, {transform_indices = @transform_1, window_bounds = array<i64: 1, 8, 64>}, {transform_indices = @transform_2, window_bounds = array<i64: 1, 8, 64>}, {pipeline_mode = #tpu.pipeline_mode<synchronous>, transform_indices = @transform_3, window_bounds = array<i64: 3, 3, 64>}, {pipeline_mode = #tpu.pipeline_mode<synchronous>, transform_indices = @transform_4, window_bounds = array<i64: 2, 64>}, {pipeline_mode = #tpu.pipeline_mode<synchronous>, transform_indices = @transform_5, window_bounds = array<i64: 7, 64>}, {pipeline_mode = #tpu.pipeline_mode<synchronous>, transform_indices = @transform_6, window_bounds = array<i64: 2, 64>}, {transform_indices = @transform_7, window_bounds = array<i64: 1, 16, 64>}]} {
    %c0 = arith.constant 0 : index
    %c0_0 = arith.constant 0 : index
    %c0_1 = arith.constant 0 : index
    %0 = vector.load %arg2[%c0, %c0_0, %c0_1] : memref<1x16x64xf32, #tpu.memory_space<vmem>>, vector<1x16x64xf32>
    %1 = vector.shape_cast %0 : vector<1x16x64xf32> to vector<16x64xf32>
    %c0_2 = arith.constant 0 : index
    %c0_3 = arith.constant 0 : index
    %c0_4 = arith.constant 0 : index
    %2 = vector.load %arg3[%c0_2, %c0_3, %c0_4] : memref<1x8x64xf32, #tpu.memory_space<vmem>>, vector<1x8x64xf32>
    %3 = vector.shape_cast %2 : vector<1x8x64xf32> to vector<8x64xf32>
    %c0_5 = arith.constant 0 : index
    %c0_6 = arith.constant 0 : index
    %c0_7 = arith.constant 0 : index
    %4 = vector.load %arg4[%c0_5, %c0_6, %c0_7] : memref<1x8x64xf32, #tpu.memory_space<vmem>>, vector<1x8x64xf32>
    %5 = vector.shape_cast %4 : vector<1x8x64xf32> to vector<8x64xf32>
    %6 = vector.extract_strided_slice %3 {offsets = [7, 0], sizes = [1, 64], strides = [1, 1]} : vector<8x64xf32> to vector<1x64xf32>
    %7 = vector.extract_strided_slice %5 {offsets = [0, 0], sizes = [1, 64], strides = [1, 1]} : vector<8x64xf32> to vector<1x64xf32>
    %8 = vector.extract_strided_slice %1 {offsets = [1, 0], sizes = [1, 64], strides = [1, 1]} : vector<16x64xf32> to vector<1x64xf32>
    %9 = vector.extract_strided_slice %1 {offsets = [14, 0], sizes = [1, 64], strides = [1, 1]} : vector<16x64xf32> to vector<1x64xf32>
    %c0_i32 = arith.constant 0 : i32
    %10 = arith.cmpi sgt, %arg1, %c0_i32 : i32
    %11 = arith.select %10, %6, %8 : vector<1x64xf32>
    %c0_i32_8 = arith.constant 0 : i32
    %12 = arith.cmpi slt, %arg1, %c0_i32_8 : i32
    %13 = arith.select %12, %7, %9 : vector<1x64xf32>
    %14 = tpu.concatenate %11, %1, %13 in 0 : vector<1x64xf32>, vector<16x64xf32>, vector<1x64xf32> -> vector<18x64xf32>
    %cst = arith.constant 0.000000e+00 : f32
    %15 = vector.broadcast %cst : f32 to vector<18x64xf32>
    %16 = arith.maximumf %14, %15 : vector<18x64xf32>
    %17 = vector.extract_strided_slice %16 {offsets = [0, 4], sizes = [18, 4], strides = [1, 1]} : vector<18x64xf32> to vector<18x4xf32>
    %18 = vector.extract_strided_slice %16 {offsets = [0, 56], sizes = [18, 4], strides = [1, 1]} : vector<18x64xf32> to vector<18x4xf32>
    %19 = vector.extract_strided_slice %16 {offsets = [0, 0], sizes = [18, 60], strides = [1, 1]} : vector<18x64xf32> to vector<18x60xf32>
    %20 = tpu.concatenate %17, %19 in 1 : vector<18x4xf32>, vector<18x60xf32> -> vector<18x64xf32>
    %21 = vector.extract_strided_slice %16 {offsets = [0, 4], sizes = [18, 60], strides = [1, 1]} : vector<18x64xf32> to vector<18x60xf32>
    %22 = tpu.concatenate %21, %18 in 1 : vector<18x60xf32>, vector<18x4xf32> -> vector<18x64xf32>
    %c0_9 = arith.constant 0 : index
    %c0_10 = arith.constant 0 : index
    %c0_11 = arith.constant 0 : index
    %23 = vector.load %arg5[%c0_9, %c0_10, %c0_11] : memref<3x3x64xf32, #tpu.memory_space<vmem>>, vector<3x3x64xf32>
    %cst_12 = arith.constant 0.000000e+00 : f32
    %24 = vector.broadcast %cst_12 : f32 to vector<16x64xf32>
    %25 = vector.extract_strided_slice %20 {offsets = [0, 0], sizes = [16, 64], strides = [1, 1]} : vector<18x64xf32> to vector<16x64xf32>
    %26 = vector.extract_strided_slice %23 {offsets = [0, 0, 0], sizes = [1, 1, 64], strides = [1, 1, 1]} : vector<3x3x64xf32> to vector<1x1x64xf32>
    %27 = vector.shape_cast %26 : vector<1x1x64xf32> to vector<64xf32>
    %28 = vector.shape_cast %27 : vector<64xf32> to vector<1x64xf32>
    %29 = vector.broadcast %28 : vector<1x64xf32> to vector<16x64xf32>
    %30 = arith.mulf %25, %29 : vector<16x64xf32>
    %31 = arith.addf %24, %30 : vector<16x64xf32>
    %32 = vector.extract_strided_slice %16 {offsets = [0, 0], sizes = [16, 64], strides = [1, 1]} : vector<18x64xf32> to vector<16x64xf32>
    %33 = vector.extract_strided_slice %23 {offsets = [0, 1, 0], sizes = [1, 1, 64], strides = [1, 1, 1]} : vector<3x3x64xf32> to vector<1x1x64xf32>
    %34 = vector.shape_cast %33 : vector<1x1x64xf32> to vector<64xf32>
    %35 = vector.shape_cast %34 : vector<64xf32> to vector<1x64xf32>
    %36 = vector.broadcast %35 : vector<1x64xf32> to vector<16x64xf32>
    %37 = arith.mulf %32, %36 : vector<16x64xf32>
    %38 = arith.addf %31, %37 : vector<16x64xf32>
    %39 = vector.extract_strided_slice %22 {offsets = [0, 0], sizes = [16, 64], strides = [1, 1]} : vector<18x64xf32> to vector<16x64xf32>
    %40 = vector.extract_strided_slice %23 {offsets = [0, 2, 0], sizes = [1, 1, 64], strides = [1, 1, 1]} : vector<3x3x64xf32> to vector<1x1x64xf32>
    %41 = vector.shape_cast %40 : vector<1x1x64xf32> to vector<64xf32>
    %42 = vector.shape_cast %41 : vector<64xf32> to vector<1x64xf32>
    %43 = vector.broadcast %42 : vector<1x64xf32> to vector<16x64xf32>
    %44 = arith.mulf %39, %43 : vector<16x64xf32>
    %45 = arith.addf %38, %44 : vector<16x64xf32>
    %46 = vector.extract_strided_slice %20 {offsets = [1, 0], sizes = [16, 64], strides = [1, 1]} : vector<18x64xf32> to vector<16x64xf32>
    %47 = vector.extract_strided_slice %23 {offsets = [1, 0, 0], sizes = [1, 1, 64], strides = [1, 1, 1]} : vector<3x3x64xf32> to vector<1x1x64xf32>
    %48 = vector.shape_cast %47 : vector<1x1x64xf32> to vector<64xf32>
    %49 = vector.shape_cast %48 : vector<64xf32> to vector<1x64xf32>
    %50 = vector.broadcast %49 : vector<1x64xf32> to vector<16x64xf32>
    %51 = arith.mulf %46, %50 : vector<16x64xf32>
    %52 = arith.addf %45, %51 : vector<16x64xf32>
    %53 = vector.extract_strided_slice %16 {offsets = [1, 0], sizes = [16, 64], strides = [1, 1]} : vector<18x64xf32> to vector<16x64xf32>
    %54 = vector.extract_strided_slice %23 {offsets = [1, 1, 0], sizes = [1, 1, 64], strides = [1, 1, 1]} : vector<3x3x64xf32> to vector<1x1x64xf32>
    %55 = vector.shape_cast %54 : vector<1x1x64xf32> to vector<64xf32>
    %56 = vector.shape_cast %55 : vector<64xf32> to vector<1x64xf32>
    %57 = vector.broadcast %56 : vector<1x64xf32> to vector<16x64xf32>
    %58 = arith.mulf %53, %57 : vector<16x64xf32>
    %59 = arith.addf %52, %58 : vector<16x64xf32>
    %60 = vector.extract_strided_slice %22 {offsets = [1, 0], sizes = [16, 64], strides = [1, 1]} : vector<18x64xf32> to vector<16x64xf32>
    %61 = vector.extract_strided_slice %23 {offsets = [1, 2, 0], sizes = [1, 1, 64], strides = [1, 1, 1]} : vector<3x3x64xf32> to vector<1x1x64xf32>
    %62 = vector.shape_cast %61 : vector<1x1x64xf32> to vector<64xf32>
    %63 = vector.shape_cast %62 : vector<64xf32> to vector<1x64xf32>
    %64 = vector.broadcast %63 : vector<1x64xf32> to vector<16x64xf32>
    %65 = arith.mulf %60, %64 : vector<16x64xf32>
    %66 = arith.addf %59, %65 : vector<16x64xf32>
    %67 = vector.extract_strided_slice %20 {offsets = [2, 0], sizes = [16, 64], strides = [1, 1]} : vector<18x64xf32> to vector<16x64xf32>
    %68 = vector.extract_strided_slice %23 {offsets = [2, 0, 0], sizes = [1, 1, 64], strides = [1, 1, 1]} : vector<3x3x64xf32> to vector<1x1x64xf32>
    %69 = vector.shape_cast %68 : vector<1x1x64xf32> to vector<64xf32>
    %70 = vector.shape_cast %69 : vector<64xf32> to vector<1x64xf32>
    %71 = vector.broadcast %70 : vector<1x64xf32> to vector<16x64xf32>
    %72 = arith.mulf %67, %71 : vector<16x64xf32>
    %73 = arith.addf %66, %72 : vector<16x64xf32>
    %74 = vector.extract_strided_slice %16 {offsets = [2, 0], sizes = [16, 64], strides = [1, 1]} : vector<18x64xf32> to vector<16x64xf32>
    %75 = vector.extract_strided_slice %23 {offsets = [2, 1, 0], sizes = [1, 1, 64], strides = [1, 1, 1]} : vector<3x3x64xf32> to vector<1x1x64xf32>
    %76 = vector.shape_cast %75 : vector<1x1x64xf32> to vector<64xf32>
    %77 = vector.shape_cast %76 : vector<64xf32> to vector<1x64xf32>
    %78 = vector.broadcast %77 : vector<1x64xf32> to vector<16x64xf32>
    %79 = arith.mulf %74, %78 : vector<16x64xf32>
    %80 = arith.addf %73, %79 : vector<16x64xf32>
    %81 = vector.extract_strided_slice %22 {offsets = [2, 0], sizes = [16, 64], strides = [1, 1]} : vector<18x64xf32> to vector<16x64xf32>
    %82 = vector.extract_strided_slice %23 {offsets = [2, 2, 0], sizes = [1, 1, 64], strides = [1, 1, 1]} : vector<3x3x64xf32> to vector<1x1x64xf32>
    %83 = vector.shape_cast %82 : vector<1x1x64xf32> to vector<64xf32>
    %84 = vector.shape_cast %83 : vector<64xf32> to vector<1x64xf32>
    %85 = vector.broadcast %84 : vector<1x64xf32> to vector<16x64xf32>
    %86 = arith.mulf %81, %85 : vector<16x64xf32>
    %87 = arith.addf %80, %86 : vector<16x64xf32>
    %c0_13 = arith.constant 0 : index
    %c0_14 = arith.constant 0 : index
    %88 = vector.load %arg6[%c0_13, %c0_14] : memref<2x64xf32, #tpu.memory_space<vmem>>, vector<2x64xf32>
    %c0_15 = arith.constant 0 : index
    %c0_16 = arith.constant 0 : index
    %89 = vector.load %arg8[%c0_15, %c0_16] : memref<2x64xf32, #tpu.memory_space<vmem>>, vector<2x64xf32>
    %90 = vector.extract_strided_slice %88 {offsets = [0, 0], sizes = [1, 64], strides = [1, 1]} : vector<2x64xf32> to vector<1x64xf32>
    %91 = vector.shape_cast %90 : vector<1x64xf32> to vector<64xf32>
    %92 = vector.shape_cast %91 : vector<64xf32> to vector<1x64xf32>
    %93 = vector.broadcast %92 : vector<1x64xf32> to vector<16x64xf32>
    %94 = arith.mulf %87, %93 : vector<16x64xf32>
    %95 = vector.extract_strided_slice %88 {offsets = [1, 0], sizes = [1, 64], strides = [1, 1]} : vector<2x64xf32> to vector<1x64xf32>
    %96 = vector.shape_cast %95 : vector<1x64xf32> to vector<64xf32>
    %97 = vector.shape_cast %96 : vector<64xf32> to vector<1x64xf32>
    %98 = vector.broadcast %97 : vector<1x64xf32> to vector<16x64xf32>
    %99 = arith.addf %94, %98 : vector<16x64xf32>
    %cst_17 = arith.constant 0.000000e+00 : f32
    %100 = vector.broadcast %cst_17 : f32 to vector<16x64xf32>
    %101 = arith.maximumf %99, %100 : vector<16x64xf32>
    %c0_18 = arith.constant 0 : index
    %c0_19 = arith.constant 0 : index
    %102 = vector.load %arg7[%c0_18, %c0_19] : memref<7x64xf32, #tpu.memory_space<vmem>>, vector<7x64xf32>
    %cst_20 = arith.constant 0.000000e+00 : f32
    %103 = vector.broadcast %cst_20 : f32 to vector<16x64xf32>
    %104 = vector.extract_strided_slice %101 {offsets = [0, 61], sizes = [16, 3], strides = [1, 1]} : vector<16x64xf32> to vector<16x3xf32>
    %105 = vector.extract_strided_slice %101 {offsets = [0, 0], sizes = [16, 61], strides = [1, 1]} : vector<16x64xf32> to vector<16x61xf32>
    %106 = tpu.concatenate %104, %105 in 1 : vector<16x3xf32>, vector<16x61xf32> -> vector<16x64xf32>
    %107 = vector.extract_strided_slice %102 {offsets = [0, 0], sizes = [1, 64], strides = [1, 1]} : vector<7x64xf32> to vector<1x64xf32>
    %108 = vector.shape_cast %107 : vector<1x64xf32> to vector<64xf32>
    %109 = vector.shape_cast %108 : vector<64xf32> to vector<1x64xf32>
    %110 = vector.broadcast %109 : vector<1x64xf32> to vector<16x64xf32>
    %111 = arith.mulf %106, %110 : vector<16x64xf32>
    %112 = arith.addf %103, %111 : vector<16x64xf32>
    %113 = vector.extract_strided_slice %101 {offsets = [0, 62], sizes = [16, 2], strides = [1, 1]} : vector<16x64xf32> to vector<16x2xf32>
    %114 = vector.extract_strided_slice %101 {offsets = [0, 0], sizes = [16, 62], strides = [1, 1]} : vector<16x64xf32> to vector<16x62xf32>
    %115 = tpu.concatenate %113, %114 in 1 : vector<16x2xf32>, vector<16x62xf32> -> vector<16x64xf32>
    %116 = vector.extract_strided_slice %102 {offsets = [1, 0], sizes = [1, 64], strides = [1, 1]} : vector<7x64xf32> to vector<1x64xf32>
    %117 = vector.shape_cast %116 : vector<1x64xf32> to vector<64xf32>
    %118 = vector.shape_cast %117 : vector<64xf32> to vector<1x64xf32>
    %119 = vector.broadcast %118 : vector<1x64xf32> to vector<16x64xf32>
    %120 = arith.mulf %115, %119 : vector<16x64xf32>
    %121 = arith.addf %112, %120 : vector<16x64xf32>
    %122 = vector.extract_strided_slice %101 {offsets = [0, 63], sizes = [16, 1], strides = [1, 1]} : vector<16x64xf32> to vector<16x1xf32>
    %123 = vector.extract_strided_slice %101 {offsets = [0, 0], sizes = [16, 63], strides = [1, 1]} : vector<16x64xf32> to vector<16x63xf32>
    %124 = tpu.concatenate %122, %123 in 1 : vector<16x1xf32>, vector<16x63xf32> -> vector<16x64xf32>
    %125 = vector.extract_strided_slice %102 {offsets = [2, 0], sizes = [1, 64], strides = [1, 1]} : vector<7x64xf32> to vector<1x64xf32>
    %126 = vector.shape_cast %125 : vector<1x64xf32> to vector<64xf32>
    %127 = vector.shape_cast %126 : vector<64xf32> to vector<1x64xf32>
    %128 = vector.broadcast %127 : vector<1x64xf32> to vector<16x64xf32>
    %129 = arith.mulf %124, %128 : vector<16x64xf32>
    %130 = arith.addf %121, %129 : vector<16x64xf32>
    %131 = vector.extract_strided_slice %102 {offsets = [3, 0], sizes = [1, 64], strides = [1, 1]} : vector<7x64xf32> to vector<1x64xf32>
    %132 = vector.shape_cast %131 : vector<1x64xf32> to vector<64xf32>
    %133 = vector.shape_cast %132 : vector<64xf32> to vector<1x64xf32>
    %134 = vector.broadcast %133 : vector<1x64xf32> to vector<16x64xf32>
    %135 = arith.mulf %101, %134 : vector<16x64xf32>
    %136 = arith.addf %130, %135 : vector<16x64xf32>
    %137 = vector.extract_strided_slice %101 {offsets = [0, 1], sizes = [16, 63], strides = [1, 1]} : vector<16x64xf32> to vector<16x63xf32>
    %138 = vector.extract_strided_slice %101 {offsets = [0, 0], sizes = [16, 1], strides = [1, 1]} : vector<16x64xf32> to vector<16x1xf32>
    %139 = tpu.concatenate %137, %138 in 1 : vector<16x63xf32>, vector<16x1xf32> -> vector<16x64xf32>
    %140 = vector.extract_strided_slice %102 {offsets = [4, 0], sizes = [1, 64], strides = [1, 1]} : vector<7x64xf32> to vector<1x64xf32>
    %141 = vector.shape_cast %140 : vector<1x64xf32> to vector<64xf32>
    %142 = vector.shape_cast %141 : vector<64xf32> to vector<1x64xf32>
    %143 = vector.broadcast %142 : vector<1x64xf32> to vector<16x64xf32>
    %144 = arith.mulf %139, %143 : vector<16x64xf32>
    %145 = arith.addf %136, %144 : vector<16x64xf32>
    %146 = vector.extract_strided_slice %101 {offsets = [0, 2], sizes = [16, 62], strides = [1, 1]} : vector<16x64xf32> to vector<16x62xf32>
    %147 = vector.extract_strided_slice %101 {offsets = [0, 0], sizes = [16, 2], strides = [1, 1]} : vector<16x64xf32> to vector<16x2xf32>
    %148 = tpu.concatenate %146, %147 in 1 : vector<16x62xf32>, vector<16x2xf32> -> vector<16x64xf32>
    %149 = vector.extract_strided_slice %102 {offsets = [5, 0], sizes = [1, 64], strides = [1, 1]} : vector<7x64xf32> to vector<1x64xf32>
    %150 = vector.shape_cast %149 : vector<1x64xf32> to vector<64xf32>
    %151 = vector.shape_cast %150 : vector<64xf32> to vector<1x64xf32>
    %152 = vector.broadcast %151 : vector<1x64xf32> to vector<16x64xf32>
    %153 = arith.mulf %148, %152 : vector<16x64xf32>
    %154 = arith.addf %145, %153 : vector<16x64xf32>
    %155 = vector.extract_strided_slice %101 {offsets = [0, 3], sizes = [16, 61], strides = [1, 1]} : vector<16x64xf32> to vector<16x61xf32>
    %156 = vector.extract_strided_slice %101 {offsets = [0, 0], sizes = [16, 3], strides = [1, 1]} : vector<16x64xf32> to vector<16x3xf32>
    %157 = tpu.concatenate %155, %156 in 1 : vector<16x61xf32>, vector<16x3xf32> -> vector<16x64xf32>
    %158 = vector.extract_strided_slice %102 {offsets = [6, 0], sizes = [1, 64], strides = [1, 1]} : vector<7x64xf32> to vector<1x64xf32>
    %159 = vector.shape_cast %158 : vector<1x64xf32> to vector<64xf32>
    %160 = vector.shape_cast %159 : vector<64xf32> to vector<1x64xf32>
    %161 = vector.broadcast %160 : vector<1x64xf32> to vector<16x64xf32>
    %162 = arith.mulf %157, %161 : vector<16x64xf32>
    %163 = arith.addf %154, %162 : vector<16x64xf32>
    %164 = vector.extract_strided_slice %89 {offsets = [0, 0], sizes = [1, 64], strides = [1, 1]} : vector<2x64xf32> to vector<1x64xf32>
    %165 = vector.shape_cast %164 : vector<1x64xf32> to vector<64xf32>
    %166 = vector.shape_cast %165 : vector<64xf32> to vector<1x64xf32>
    %167 = vector.broadcast %166 : vector<1x64xf32> to vector<16x64xf32>
    %168 = arith.mulf %163, %167 : vector<16x64xf32>
    %169 = arith.addf %1, %168 : vector<16x64xf32>
    %170 = vector.extract_strided_slice %89 {offsets = [1, 0], sizes = [1, 64], strides = [1, 1]} : vector<2x64xf32> to vector<1x64xf32>
    %171 = vector.shape_cast %170 : vector<1x64xf32> to vector<64xf32>
    %172 = vector.shape_cast %171 : vector<64xf32> to vector<1x64xf32>
    %173 = vector.broadcast %172 : vector<1x64xf32> to vector<16x64xf32>
    %174 = arith.addf %169, %173 : vector<16x64xf32>
    %175 = vector.shape_cast %174 : vector<16x64xf32> to vector<1x16x64xf32>
    %c0_21 = arith.constant 0 : index
    %c0_22 = arith.constant 0 : index
    %c0_23 = arith.constant 0 : index
    %176 = vector.load %arg9[%c0_21, %c0_22, %c0_23] : memref<1x16x64xf32, #tpu.memory_space<vmem>>, vector<1x16x64xf32>
    tpu.vector_store %arg9[%c0_21, %c0_22, %c0_23], %175 {strides = array<i32>} : memref<1x16x64xf32, #tpu.memory_space<vmem>>, vector<1x16x64xf32>,
    return
  }
  func.func @transform_0(%arg0: i32, %arg1: i32) -> (i32, i32, i32) {
    %c0_i32 = arith.constant 0 : i32
    %c0_i32_0 = arith.constant 0 : i32
    return %arg0, %arg1, %c0_i32 : i32, i32, i32
  }
  func.func @transform_1(%arg0: i32, %arg1: i32) -> (i32, i32, i32) {
    %c2_i32 = arith.constant 2 : i32
    %0 = arith.muli %arg1, %c2_i32 : i32
    %c1_i32 = arith.constant 1 : i32
    %1 = arith.subi %0, %c1_i32 : i32
    %c0_i32 = arith.constant 0 : i32
    %2 = arith.maxsi %1, %c0_i32 : i32
    %c0_i32_0 = arith.constant 0 : i32
    %c0_i32_1 = arith.constant 0 : i32
    return %arg0, %2, %c0_i32_0 : i32, i32, i32
  }
  func.func @transform_2(%arg0: i32, %arg1: i32) -> (i32, i32, i32) {
    %c1_i32 = arith.constant 1 : i32
    %0 = arith.addi %arg1, %c1_i32 : i32
    %c2_i32 = arith.constant 2 : i32
    %1 = arith.muli %0, %c2_i32 : i32
    %c1_i32_0 = arith.constant 1 : i32
    %2 = arith.minsi %1, %c1_i32_0 : i32
    %c0_i32 = arith.constant 0 : i32
    %c0_i32_1 = arith.constant 0 : i32
    return %arg0, %2, %c0_i32 : i32, i32, i32
  }
  func.func @transform_3(%arg0: i32, %arg1: i32) -> (i32, i32, i32) {
    %c0_i32 = arith.constant 0 : i32
    %c0_i32_0 = arith.constant 0 : i32
    %c0_i32_1 = arith.constant 0 : i32
    %c0_i32_2 = arith.constant 0 : i32
    return %c0_i32, %c0_i32_0, %c0_i32_1 : i32, i32, i32
  }
  func.func @transform_4(%arg0: i32, %arg1: i32) -> (i32, i32) {
    %c0_i32 = arith.constant 0 : i32
    %c0_i32_0 = arith.constant 0 : i32
    %c0_i32_1 = arith.constant 0 : i32
    return %c0_i32, %c0_i32_0 : i32, i32
  }
  func.func @transform_5(%arg0: i32, %arg1: i32) -> (i32, i32) {
    %c0_i32 = arith.constant 0 : i32
    %c0_i32_0 = arith.constant 0 : i32
    %c0_i32_1 = arith.constant 0 : i32
    return %c0_i32, %c0_i32_0 : i32, i32
  }
  func.func @transform_6(%arg0: i32, %arg1: i32) -> (i32, i32) {
    %c0_i32 = arith.constant 0 : i32
    %c0_i32_0 = arith.constant 0 : i32
    %c0_i32_1 = arith.constant 0 : i32
    return %c0_i32, %c0_i32_0 : i32, i32
  }
  func.func @transform_7(%arg0: i32, %arg1: i32) -> (i32, i32, i32) {
    %c0_i32 = arith.constant 0 : i32
    %c0_i32_0 = arith.constant 0 : i32
    return %arg0, %arg1, %c0_i32 : i32, i32, i32
  }
}

module attributes {stable_mosaic.version = 11 : i64} {
  func.func @_stats2_kernel(%arg0: i32, %arg1: i32, %arg2: memref<1x16x64xf32, #tpu.memory_space<vmem>>, %arg3: memref<1x8x64xf32, #tpu.memory_space<vmem>>, %arg4: memref<1x8x64xf32, #tpu.memory_space<vmem>>, %arg5: memref<3x3x64xf32, #tpu.memory_space<vmem>>, %arg6: memref<2x64xf32, #tpu.memory_space<vmem>>, %arg7: memref<7x64xf32, #tpu.memory_space<vmem>>, %arg8: memref<1x2x64xf32, #tpu.memory_space<vmem>>) attributes {dimension_semantics = [#tpu.dimension_semantics<parallel>, #tpu.dimension_semantics<arbitrary>], iteration_bounds = array<i64: 2, 1>, scalar_prefetch = 0 : i64, scratch_operands = 0 : i64, tpu.core_type = #tpu.core_type<tc>, window_params = [{transform_indices = @transform_0, window_bounds = array<i64: 1, 16, 64>}, {transform_indices = @transform_1, window_bounds = array<i64: 1, 8, 64>}, {transform_indices = @transform_2, window_bounds = array<i64: 1, 8, 64>}, {pipeline_mode = #tpu.pipeline_mode<synchronous>, transform_indices = @transform_3, window_bounds = array<i64: 3, 3, 64>}, {pipeline_mode = #tpu.pipeline_mode<synchronous>, transform_indices = @transform_4, window_bounds = array<i64: 2, 64>}, {pipeline_mode = #tpu.pipeline_mode<synchronous>, transform_indices = @transform_5, window_bounds = array<i64: 7, 64>}, {transform_indices = @transform_6, window_bounds = array<i64: 1, 2, 64>}]} {
    %c0 = arith.constant 0 : index
    %c0_0 = arith.constant 0 : index
    %c0_1 = arith.constant 0 : index
    %0 = vector.load %arg2[%c0, %c0_0, %c0_1] : memref<1x16x64xf32, #tpu.memory_space<vmem>>, vector<1x16x64xf32>
    %1 = vector.shape_cast %0 : vector<1x16x64xf32> to vector<16x64xf32>
    %c0_2 = arith.constant 0 : index
    %c0_3 = arith.constant 0 : index
    %c0_4 = arith.constant 0 : index
    %2 = vector.load %arg3[%c0_2, %c0_3, %c0_4] : memref<1x8x64xf32, #tpu.memory_space<vmem>>, vector<1x8x64xf32>
    %3 = vector.shape_cast %2 : vector<1x8x64xf32> to vector<8x64xf32>
    %c0_5 = arith.constant 0 : index
    %c0_6 = arith.constant 0 : index
    %c0_7 = arith.constant 0 : index
    %4 = vector.load %arg4[%c0_5, %c0_6, %c0_7] : memref<1x8x64xf32, #tpu.memory_space<vmem>>, vector<1x8x64xf32>
    %5 = vector.shape_cast %4 : vector<1x8x64xf32> to vector<8x64xf32>
    %6 = vector.extract_strided_slice %3 {offsets = [7, 0], sizes = [1, 64], strides = [1, 1]} : vector<8x64xf32> to vector<1x64xf32>
    %7 = vector.extract_strided_slice %5 {offsets = [0, 0], sizes = [1, 64], strides = [1, 1]} : vector<8x64xf32> to vector<1x64xf32>
    %8 = vector.extract_strided_slice %1 {offsets = [1, 0], sizes = [1, 64], strides = [1, 1]} : vector<16x64xf32> to vector<1x64xf32>
    %9 = vector.extract_strided_slice %1 {offsets = [14, 0], sizes = [1, 64], strides = [1, 1]} : vector<16x64xf32> to vector<1x64xf32>
    %c0_i32 = arith.constant 0 : i32
    %10 = arith.cmpi sgt, %arg1, %c0_i32 : i32
    %11 = arith.select %10, %6, %8 : vector<1x64xf32>
    %c0_i32_8 = arith.constant 0 : i32
    %12 = arith.cmpi slt, %arg1, %c0_i32_8 : i32
    %13 = arith.select %12, %7, %9 : vector<1x64xf32>
    %14 = tpu.concatenate %11, %1, %13 in 0 : vector<1x64xf32>, vector<16x64xf32>, vector<1x64xf32> -> vector<18x64xf32>
    %cst = arith.constant 0.000000e+00 : f32
    %15 = vector.broadcast %cst : f32 to vector<18x64xf32>
    %16 = arith.maximumf %14, %15 : vector<18x64xf32>
    %17 = vector.extract_strided_slice %16 {offsets = [0, 4], sizes = [18, 4], strides = [1, 1]} : vector<18x64xf32> to vector<18x4xf32>
    %18 = vector.extract_strided_slice %16 {offsets = [0, 56], sizes = [18, 4], strides = [1, 1]} : vector<18x64xf32> to vector<18x4xf32>
    %19 = vector.extract_strided_slice %16 {offsets = [0, 0], sizes = [18, 60], strides = [1, 1]} : vector<18x64xf32> to vector<18x60xf32>
    %20 = tpu.concatenate %17, %19 in 1 : vector<18x4xf32>, vector<18x60xf32> -> vector<18x64xf32>
    %21 = vector.extract_strided_slice %16 {offsets = [0, 4], sizes = [18, 60], strides = [1, 1]} : vector<18x64xf32> to vector<18x60xf32>
    %22 = tpu.concatenate %21, %18 in 1 : vector<18x60xf32>, vector<18x4xf32> -> vector<18x64xf32>
    %c0_9 = arith.constant 0 : index
    %c0_10 = arith.constant 0 : index
    %c0_11 = arith.constant 0 : index
    %23 = vector.load %arg5[%c0_9, %c0_10, %c0_11] : memref<3x3x64xf32, #tpu.memory_space<vmem>>, vector<3x3x64xf32>
    %cst_12 = arith.constant 0.000000e+00 : f32
    %24 = vector.broadcast %cst_12 : f32 to vector<16x64xf32>
    %25 = vector.extract_strided_slice %20 {offsets = [0, 0], sizes = [16, 64], strides = [1, 1]} : vector<18x64xf32> to vector<16x64xf32>
    %26 = vector.extract_strided_slice %23 {offsets = [0, 0, 0], sizes = [1, 1, 64], strides = [1, 1, 1]} : vector<3x3x64xf32> to vector<1x1x64xf32>
    %27 = vector.shape_cast %26 : vector<1x1x64xf32> to vector<64xf32>
    %28 = vector.shape_cast %27 : vector<64xf32> to vector<1x64xf32>
    %29 = vector.broadcast %28 : vector<1x64xf32> to vector<16x64xf32>
    %30 = arith.mulf %25, %29 : vector<16x64xf32>
    %31 = arith.addf %24, %30 : vector<16x64xf32>
    %32 = vector.extract_strided_slice %16 {offsets = [0, 0], sizes = [16, 64], strides = [1, 1]} : vector<18x64xf32> to vector<16x64xf32>
    %33 = vector.extract_strided_slice %23 {offsets = [0, 1, 0], sizes = [1, 1, 64], strides = [1, 1, 1]} : vector<3x3x64xf32> to vector<1x1x64xf32>
    %34 = vector.shape_cast %33 : vector<1x1x64xf32> to vector<64xf32>
    %35 = vector.shape_cast %34 : vector<64xf32> to vector<1x64xf32>
    %36 = vector.broadcast %35 : vector<1x64xf32> to vector<16x64xf32>
    %37 = arith.mulf %32, %36 : vector<16x64xf32>
    %38 = arith.addf %31, %37 : vector<16x64xf32>
    %39 = vector.extract_strided_slice %22 {offsets = [0, 0], sizes = [16, 64], strides = [1, 1]} : vector<18x64xf32> to vector<16x64xf32>
    %40 = vector.extract_strided_slice %23 {offsets = [0, 2, 0], sizes = [1, 1, 64], strides = [1, 1, 1]} : vector<3x3x64xf32> to vector<1x1x64xf32>
    %41 = vector.shape_cast %40 : vector<1x1x64xf32> to vector<64xf32>
    %42 = vector.shape_cast %41 : vector<64xf32> to vector<1x64xf32>
    %43 = vector.broadcast %42 : vector<1x64xf32> to vector<16x64xf32>
    %44 = arith.mulf %39, %43 : vector<16x64xf32>
    %45 = arith.addf %38, %44 : vector<16x64xf32>
    %46 = vector.extract_strided_slice %20 {offsets = [1, 0], sizes = [16, 64], strides = [1, 1]} : vector<18x64xf32> to vector<16x64xf32>
    %47 = vector.extract_strided_slice %23 {offsets = [1, 0, 0], sizes = [1, 1, 64], strides = [1, 1, 1]} : vector<3x3x64xf32> to vector<1x1x64xf32>
    %48 = vector.shape_cast %47 : vector<1x1x64xf32> to vector<64xf32>
    %49 = vector.shape_cast %48 : vector<64xf32> to vector<1x64xf32>
    %50 = vector.broadcast %49 : vector<1x64xf32> to vector<16x64xf32>
    %51 = arith.mulf %46, %50 : vector<16x64xf32>
    %52 = arith.addf %45, %51 : vector<16x64xf32>
    %53 = vector.extract_strided_slice %16 {offsets = [1, 0], sizes = [16, 64], strides = [1, 1]} : vector<18x64xf32> to vector<16x64xf32>
    %54 = vector.extract_strided_slice %23 {offsets = [1, 1, 0], sizes = [1, 1, 64], strides = [1, 1, 1]} : vector<3x3x64xf32> to vector<1x1x64xf32>
    %55 = vector.shape_cast %54 : vector<1x1x64xf32> to vector<64xf32>
    %56 = vector.shape_cast %55 : vector<64xf32> to vector<1x64xf32>
    %57 = vector.broadcast %56 : vector<1x64xf32> to vector<16x64xf32>
    %58 = arith.mulf %53, %57 : vector<16x64xf32>
    %59 = arith.addf %52, %58 : vector<16x64xf32>
    %60 = vector.extract_strided_slice %22 {offsets = [1, 0], sizes = [16, 64], strides = [1, 1]} : vector<18x64xf32> to vector<16x64xf32>
    %61 = vector.extract_strided_slice %23 {offsets = [1, 2, 0], sizes = [1, 1, 64], strides = [1, 1, 1]} : vector<3x3x64xf32> to vector<1x1x64xf32>
    %62 = vector.shape_cast %61 : vector<1x1x64xf32> to vector<64xf32>
    %63 = vector.shape_cast %62 : vector<64xf32> to vector<1x64xf32>
    %64 = vector.broadcast %63 : vector<1x64xf32> to vector<16x64xf32>
    %65 = arith.mulf %60, %64 : vector<16x64xf32>
    %66 = arith.addf %59, %65 : vector<16x64xf32>
    %67 = vector.extract_strided_slice %20 {offsets = [2, 0], sizes = [16, 64], strides = [1, 1]} : vector<18x64xf32> to vector<16x64xf32>
    %68 = vector.extract_strided_slice %23 {offsets = [2, 0, 0], sizes = [1, 1, 64], strides = [1, 1, 1]} : vector<3x3x64xf32> to vector<1x1x64xf32>
    %69 = vector.shape_cast %68 : vector<1x1x64xf32> to vector<64xf32>
    %70 = vector.shape_cast %69 : vector<64xf32> to vector<1x64xf32>
    %71 = vector.broadcast %70 : vector<1x64xf32> to vector<16x64xf32>
    %72 = arith.mulf %67, %71 : vector<16x64xf32>
    %73 = arith.addf %66, %72 : vector<16x64xf32>
    %74 = vector.extract_strided_slice %16 {offsets = [2, 0], sizes = [16, 64], strides = [1, 1]} : vector<18x64xf32> to vector<16x64xf32>
    %75 = vector.extract_strided_slice %23 {offsets = [2, 1, 0], sizes = [1, 1, 64], strides = [1, 1, 1]} : vector<3x3x64xf32> to vector<1x1x64xf32>
    %76 = vector.shape_cast %75 : vector<1x1x64xf32> to vector<64xf32>
    %77 = vector.shape_cast %76 : vector<64xf32> to vector<1x64xf32>
    %78 = vector.broadcast %77 : vector<1x64xf32> to vector<16x64xf32>
    %79 = arith.mulf %74, %78 : vector<16x64xf32>
    %80 = arith.addf %73, %79 : vector<16x64xf32>
    %81 = vector.extract_strided_slice %22 {offsets = [2, 0], sizes = [16, 64], strides = [1, 1]} : vector<18x64xf32> to vector<16x64xf32>
    %82 = vector.extract_strided_slice %23 {offsets = [2, 2, 0], sizes = [1, 1, 64], strides = [1, 1, 1]} : vector<3x3x64xf32> to vector<1x1x64xf32>
    %83 = vector.shape_cast %82 : vector<1x1x64xf32> to vector<64xf32>
    %84 = vector.shape_cast %83 : vector<64xf32> to vector<1x64xf32>
    %85 = vector.broadcast %84 : vector<1x64xf32> to vector<16x64xf32>
    %86 = arith.mulf %81, %85 : vector<16x64xf32>
    %87 = arith.addf %80, %86 : vector<16x64xf32>
    %c0_13 = arith.constant 0 : index
    %c0_14 = arith.constant 0 : index
    %88 = vector.load %arg6[%c0_13, %c0_14] : memref<2x64xf32, #tpu.memory_space<vmem>>, vector<2x64xf32>
    %89 = vector.extract_strided_slice %88 {offsets = [0, 0], sizes = [1, 64], strides = [1, 1]} : vector<2x64xf32> to vector<1x64xf32>
    %90 = vector.shape_cast %89 : vector<1x64xf32> to vector<64xf32>
    %91 = vector.shape_cast %90 : vector<64xf32> to vector<1x64xf32>
    %92 = vector.broadcast %91 : vector<1x64xf32> to vector<16x64xf32>
    %93 = arith.mulf %87, %92 : vector<16x64xf32>
    %94 = vector.extract_strided_slice %88 {offsets = [1, 0], sizes = [1, 64], strides = [1, 1]} : vector<2x64xf32> to vector<1x64xf32>
    %95 = vector.shape_cast %94 : vector<1x64xf32> to vector<64xf32>
    %96 = vector.shape_cast %95 : vector<64xf32> to vector<1x64xf32>
    %97 = vector.broadcast %96 : vector<1x64xf32> to vector<16x64xf32>
    %98 = arith.addf %93, %97 : vector<16x64xf32>
    %cst_15 = arith.constant 0.000000e+00 : f32
    %99 = vector.broadcast %cst_15 : f32 to vector<16x64xf32>
    %100 = arith.maximumf %98, %99 : vector<16x64xf32>
    %c0_16 = arith.constant 0 : index
    %c0_17 = arith.constant 0 : index
    %101 = vector.load %arg7[%c0_16, %c0_17] : memref<7x64xf32, #tpu.memory_space<vmem>>, vector<7x64xf32>
    %cst_18 = arith.constant 0.000000e+00 : f32
    %102 = vector.broadcast %cst_18 : f32 to vector<16x64xf32>
    %103 = vector.extract_strided_slice %100 {offsets = [0, 61], sizes = [16, 3], strides = [1, 1]} : vector<16x64xf32> to vector<16x3xf32>
    %104 = vector.extract_strided_slice %100 {offsets = [0, 0], sizes = [16, 61], strides = [1, 1]} : vector<16x64xf32> to vector<16x61xf32>
    %105 = tpu.concatenate %103, %104 in 1 : vector<16x3xf32>, vector<16x61xf32> -> vector<16x64xf32>
    %106 = vector.extract_strided_slice %101 {offsets = [0, 0], sizes = [1, 64], strides = [1, 1]} : vector<7x64xf32> to vector<1x64xf32>
    %107 = vector.shape_cast %106 : vector<1x64xf32> to vector<64xf32>
    %108 = vector.shape_cast %107 : vector<64xf32> to vector<1x64xf32>
    %109 = vector.broadcast %108 : vector<1x64xf32> to vector<16x64xf32>
    %110 = arith.mulf %105, %109 : vector<16x64xf32>
    %111 = arith.addf %102, %110 : vector<16x64xf32>
    %112 = vector.extract_strided_slice %100 {offsets = [0, 62], sizes = [16, 2], strides = [1, 1]} : vector<16x64xf32> to vector<16x2xf32>
    %113 = vector.extract_strided_slice %100 {offsets = [0, 0], sizes = [16, 62], strides = [1, 1]} : vector<16x64xf32> to vector<16x62xf32>
    %114 = tpu.concatenate %112, %113 in 1 : vector<16x2xf32>, vector<16x62xf32> -> vector<16x64xf32>
    %115 = vector.extract_strided_slice %101 {offsets = [1, 0], sizes = [1, 64], strides = [1, 1]} : vector<7x64xf32> to vector<1x64xf32>
    %116 = vector.shape_cast %115 : vector<1x64xf32> to vector<64xf32>
    %117 = vector.shape_cast %116 : vector<64xf32> to vector<1x64xf32>
    %118 = vector.broadcast %117 : vector<1x64xf32> to vector<16x64xf32>
    %119 = arith.mulf %114, %118 : vector<16x64xf32>
    %120 = arith.addf %111, %119 : vector<16x64xf32>
    %121 = vector.extract_strided_slice %100 {offsets = [0, 63], sizes = [16, 1], strides = [1, 1]} : vector<16x64xf32> to vector<16x1xf32>
    %122 = vector.extract_strided_slice %100 {offsets = [0, 0], sizes = [16, 63], strides = [1, 1]} : vector<16x64xf32> to vector<16x63xf32>
    %123 = tpu.concatenate %121, %122 in 1 : vector<16x1xf32>, vector<16x63xf32> -> vector<16x64xf32>
    %124 = vector.extract_strided_slice %101 {offsets = [2, 0], sizes = [1, 64], strides = [1, 1]} : vector<7x64xf32> to vector<1x64xf32>
    %125 = vector.shape_cast %124 : vector<1x64xf32> to vector<64xf32>
    %126 = vector.shape_cast %125 : vector<64xf32> to vector<1x64xf32>
    %127 = vector.broadcast %126 : vector<1x64xf32> to vector<16x64xf32>
    %128 = arith.mulf %123, %127 : vector<16x64xf32>
    %129 = arith.addf %120, %128 : vector<16x64xf32>
    %130 = vector.extract_strided_slice %101 {offsets = [3, 0], sizes = [1, 64], strides = [1, 1]} : vector<7x64xf32> to vector<1x64xf32>
    %131 = vector.shape_cast %130 : vector<1x64xf32> to vector<64xf32>
    %132 = vector.shape_cast %131 : vector<64xf32> to vector<1x64xf32>
    %133 = vector.broadcast %132 : vector<1x64xf32> to vector<16x64xf32>
    %134 = arith.mulf %100, %133 : vector<16x64xf32>
    %135 = arith.addf %129, %134 : vector<16x64xf32>
    %136 = vector.extract_strided_slice %100 {offsets = [0, 1], sizes = [16, 63], strides = [1, 1]} : vector<16x64xf32> to vector<16x63xf32>
    %137 = vector.extract_strided_slice %100 {offsets = [0, 0], sizes = [16, 1], strides = [1, 1]} : vector<16x64xf32> to vector<16x1xf32>
    %138 = tpu.concatenate %136, %137 in 1 : vector<16x63xf32>, vector<16x1xf32> -> vector<16x64xf32>
    %139 = vector.extract_strided_slice %101 {offsets = [4, 0], sizes = [1, 64], strides = [1, 1]} : vector<7x64xf32> to vector<1x64xf32>
    %140 = vector.shape_cast %139 : vector<1x64xf32> to vector<64xf32>
    %141 = vector.shape_cast %140 : vector<64xf32> to vector<1x64xf32>
    %142 = vector.broadcast %141 : vector<1x64xf32> to vector<16x64xf32>
    %143 = arith.mulf %138, %142 : vector<16x64xf32>
    %144 = arith.addf %135, %143 : vector<16x64xf32>
    %145 = vector.extract_strided_slice %100 {offsets = [0, 2], sizes = [16, 62], strides = [1, 1]} : vector<16x64xf32> to vector<16x62xf32>
    %146 = vector.extract_strided_slice %100 {offsets = [0, 0], sizes = [16, 2], strides = [1, 1]} : vector<16x64xf32> to vector<16x2xf32>
    %147 = tpu.concatenate %145, %146 in 1 : vector<16x62xf32>, vector<16x2xf32> -> vector<16x64xf32>
    %148 = vector.extract_strided_slice %101 {offsets = [5, 0], sizes = [1, 64], strides = [1, 1]} : vector<7x64xf32> to vector<1x64xf32>
    %149 = vector.shape_cast %148 : vector<1x64xf32> to vector<64xf32>
    %150 = vector.shape_cast %149 : vector<64xf32> to vector<1x64xf32>
    %151 = vector.broadcast %150 : vector<1x64xf32> to vector<16x64xf32>
    %152 = arith.mulf %147, %151 : vector<16x64xf32>
    %153 = arith.addf %144, %152 : vector<16x64xf32>
    %154 = vector.extract_strided_slice %100 {offsets = [0, 3], sizes = [16, 61], strides = [1, 1]} : vector<16x64xf32> to vector<16x61xf32>
    %155 = vector.extract_strided_slice %100 {offsets = [0, 0], sizes = [16, 3], strides = [1, 1]} : vector<16x64xf32> to vector<16x3xf32>
    %156 = tpu.concatenate %154, %155 in 1 : vector<16x61xf32>, vector<16x3xf32> -> vector<16x64xf32>
    %157 = vector.extract_strided_slice %101 {offsets = [6, 0], sizes = [1, 64], strides = [1, 1]} : vector<7x64xf32> to vector<1x64xf32>
    %158 = vector.shape_cast %157 : vector<1x64xf32> to vector<64xf32>
    %159 = vector.shape_cast %158 : vector<64xf32> to vector<1x64xf32>
    %160 = vector.broadcast %159 : vector<1x64xf32> to vector<16x64xf32>
    %161 = arith.mulf %156, %160 : vector<16x64xf32>
    %162 = arith.addf %153, %161 : vector<16x64xf32>
    %cst_19 = arith.constant dense<0.000000e+00> : vector<64xf32>
    %163 = vector.multi_reduction <add>, %162, %cst_19 [0] : vector<16x64xf32> to vector<64xf32>
    %164 = vector.shape_cast %163 : vector<64xf32> to vector<1x64xf32>
    %165 = arith.mulf %162, %162 : vector<16x64xf32>
    %cst_20 = arith.constant dense<0.000000e+00> : vector<64xf32>
    %166 = vector.multi_reduction <add>, %165, %cst_20 [0] : vector<16x64xf32> to vector<64xf32>
    %167 = vector.shape_cast %166 : vector<64xf32> to vector<1x64xf32>
    %168 = tpu.concatenate %164, %167 in 0 : vector<1x64xf32>, vector<1x64xf32> -> vector<2x64xf32>
    %169 = vector.shape_cast %168 : vector<2x64xf32> to vector<1x2x64xf32>
    %c0_i32_21 = arith.constant 0 : i32
    %170 = arith.cmpi eq, %arg1, %c0_i32_21 : i32
    %171 = arith.extui %170 : i1 to i32
    %c0_i32_22 = arith.constant 0 : i32
    %172 = arith.cmpi ne, %171, %c0_i32_22 : i32
    scf.if %172 {
      %cst_29 = arith.constant 0.000000e+00 : f32
      %176 = vector.broadcast %cst_29 : f32 to vector<1x2x64xf32>
      %c0_30 = arith.constant 0 : index
      %c0_31 = arith.constant 0 : index
      %c0_32 = arith.constant 0 : index
      %177 = vector.load %arg8[%c0_30, %c0_31, %c0_32] : memref<1x2x64xf32, #tpu.memory_space<vmem>>, vector<1x2x64xf32>
      tpu.vector_store %arg8[%c0_30, %c0_31, %c0_32], %176 {strides = array<i32>} : memref<1x2x64xf32, #tpu.memory_space<vmem>>, vector<1x2x64xf32>,
    } else {
    }
    %c0_23 = arith.constant 0 : index
    %c0_24 = arith.constant 0 : index
    %c0_25 = arith.constant 0 : index
    %173 = vector.load %arg8[%c0_23, %c0_24, %c0_25] : memref<1x2x64xf32, #tpu.memory_space<vmem>>, vector<1x2x64xf32>
    %174 = arith.addf %173, %169 : vector<1x2x64xf32>
    %c0_26 = arith.constant 0 : index
    %c0_27 = arith.constant 0 : index
    %c0_28 = arith.constant 0 : index
    %175 = vector.load %arg8[%c0_26, %c0_27, %c0_28] : memref<1x2x64xf32, #tpu.memory_space<vmem>>, vector<1x2x64xf32>
    tpu.vector_store %arg8[%c0_26, %c0_27, %c0_28], %174 {strides = array<i32>} : memref<1x2x64xf32, #tpu.memory_space<vmem>>, vector<1x2x64xf32>,
    return
  }
  func.func @transform_0(%arg0: i32, %arg1: i32) -> (i32, i32, i32) {
    %c0_i32 = arith.constant 0 : i32
    %c0_i32_0 = arith.constant 0 : i32
    return %arg0, %arg1, %c0_i32 : i32, i32, i32
  }
  func.func @transform_1(%arg0: i32, %arg1: i32) -> (i32, i32, i32) {
    %c2_i32 = arith.constant 2 : i32
    %0 = arith.muli %arg1, %c2_i32 : i32
    %c1_i32 = arith.constant 1 : i32
    %1 = arith.subi %0, %c1_i32 : i32
    %c0_i32 = arith.constant 0 : i32
    %2 = arith.maxsi %1, %c0_i32 : i32
    %c0_i32_0 = arith.constant 0 : i32
    %c0_i32_1 = arith.constant 0 : i32
    return %arg0, %2, %c0_i32_0 : i32, i32, i32
  }
  func.func @transform_2(%arg0: i32, %arg1: i32) -> (i32, i32, i32) {
    %c1_i32 = arith.constant 1 : i32
    %0 = arith.addi %arg1, %c1_i32 : i32
    %c2_i32 = arith.constant 2 : i32
    %1 = arith.muli %0, %c2_i32 : i32
    %c1_i32_0 = arith.constant 1 : i32
    %2 = arith.minsi %1, %c1_i32_0 : i32
    %c0_i32 = arith.constant 0 : i32
    %c0_i32_1 = arith.constant 0 : i32
    return %arg0, %2, %c0_i32 : i32, i32, i32
  }
  func.func @transform_3(%arg0: i32, %arg1: i32) -> (i32, i32, i32) {
    %c0_i32 = arith.constant 0 : i32
    %c0_i32_0 = arith.constant 0 : i32
    %c0_i32_1 = arith.constant 0 : i32
    %c0_i32_2 = arith.constant 0 : i32
    return %c0_i32, %c0_i32_0, %c0_i32_1 : i32, i32, i32
  }
  func.func @transform_4(%arg0: i32, %arg1: i32) -> (i32, i32) {
    %c0_i32 = arith.constant 0 : i32
    %c0_i32_0 = arith.constant 0 : i32
    %c0_i32_1 = arith.constant 0 : i32
    return %c0_i32, %c0_i32_0 : i32, i32
  }
  func.func @transform_5(%arg0: i32, %arg1: i32) -> (i32, i32) {
    %c0_i32 = arith.constant 0 : i32
    %c0_i32_0 = arith.constant 0 : i32
    %c0_i32_1 = arith.constant 0 : i32
    return %c0_i32, %c0_i32_0 : i32, i32
  }
  func.func @transform_6(%arg0: i32, %arg1: i32) -> (i32, i32, i32) {
    %c0_i32 = arith.constant 0 : i32
    %c0_i32_0 = arith.constant 0 : i32
    %c0_i32_1 = arith.constant 0 : i32
    return %arg0, %c0_i32, %c0_i32_0 : i32, i32, i32
  }
}

</mosaic_0001>

<llo_original>
// kernel: tile.58
$region0: #{tile.58}
  #allocation0 [shape = 's32[1]{0}', space=sflag, size = 0x4, scoped, tag = 'scoped memory for tile.58']
  %s0 = inlined_call_operand.vmem [shape: f32[4], index: 0, kind: input, shape index: {}]
  %s1 = inlined_call_operand.vmem [shape: f32[16,4], index: 1, kind: output, shape index: {}]
  // Predicated region
  $region2: #{tile.58} parent=0 // pred_check
    _
  $region3: #{tile.58} parent=0 // pred_check_branch
    %3 = sbr.rel (0) target = $region5
  $region4: #{tile.58} parent=0 // pred_region
    _
  $region5: #{tile.58} parent=0 // pred_fallthru
    _
  %v4 = vld [vmem:[%s0] ss:$0 sm:$0xff]
  %5 = vst [vmem:[%s1] sm:$0xff] %v4
  %s6 = scalar_lea.vmem %s1, 8
  %7 = vst [vmem:[%s6] sm:$0xff] %v4

// kernel: tile.83
$region0: #{tile.83}
  %s0 = inlined_call_operand.vmem [shape: f32[16,4], index: 0, kind: input, shape index: {}]
  %s1 = inlined_call_operand.vmem [shape: f32[1,64], index: 1, kind: output, shape index: {}]
  $region1: #{tile.83} parent=0
    #allocation0 [shape = 'u8[4096]{0}', space=vmem, size = 0x1000, scoped, tag = 'scoped mem for output reshape']
    %v2 = vld [vmem:[%s0] sm:$0x1]
    %vm3 = vcmask 31744
    %4 = vst.msk [vmem:[#allocation0] sm:$0x1] %vm3, %v2
    %s5 = scalar_lea.vmem %s0, 15
    %v6 = vld [vmem:[%s5] sm:$0x1]
    %7 = vrot.lane.b32.xlu0 %v6, 60
    %v8 = vpop.permute.xlu0 %7
    %vm9 = vcmask 523744
    %10 = vst.msk [vmem:[#allocation0] sm:$0x1] %vm9, %v8
    %s11 = scalar_lea.vmem %s0, 14
    %v12 = vld [vmem:[%s11] sm:$0x1]
    %13 = vrot.lane.b32.xlu0 %v12, 56
    %v14 = vpop.permute.xlu0 %13
    %vm15 = vcmask 490944
    %16 = vst.msk [vmem:[#allocation0] sm:$0x1] %vm15, %v14
    %s17 = scalar_lea.vmem %s0, 13
    %v18 = vld [vmem:[%s17] sm:$0x1]
    %19 = vrot.lane.b32.xlu0 %v18, 52
    %v20 = vpop.permute.xlu0 %19
    %vm21 = vcmask 458144
    %22 = vst.msk [vmem:[#allocation0] sm:$0x1] %vm21, %v20
    %s23 = scalar_lea.vmem %s0, 12
    %v24 = vld [vmem:[%s23] sm:$0x1]
    %25 = vrot.lane.b32.xlu0 %v24, 48
    %v26 = vpop.permute.xlu0 %25
    %vm27 = vcmask 425344
    %28 = vst.msk [vmem:[#allocation0] sm:$0x1] %vm27, %v26
    %s29 = scalar_lea.vmem %s0, 11
    %v30 = vld [vmem:[%s29] sm:$0x1]
    %31 = vrot.lane.b32.xlu0 %v30, 44
    %v32 = vpop.permute.xlu0 %31
    %vm33 = vcmask 392544
    %34 = vst.msk [vmem:[#allocation0] sm:$0x1] %vm33, %v32
    %s35 = scalar_lea.vmem %s0, 10
    %v36 = vld [vmem:[%s35] sm:$0x1]
    %37 = vrot.lane.b32.xlu0 %v36, 40
    %v38 = vpop.permute.xlu0 %37
    %vm39 = vcmask 359744
    %40 = vst.msk [vmem:[#allocation0] sm:$0x1] %vm39, %v38
    %s41 = scalar_lea.vmem %s0, 9
    %v42 = vld [vmem:[%s41] sm:$0x1]
    %43 = vrot.lane.b32.xlu0 %v42, 36
    %v44 = vpop.permute.xlu0 %43
    %vm45 = vcmask 326944
    %46 = vst.msk [vmem:[#allocation0] sm:$0x1] %vm45, %v44
    %s47 = scalar_lea.vmem %s0, 8
    %v48 = vld [vmem:[%s47] sm:$0x1]
    %49 = vrot.lane.b32.xlu0 %v48, 32
    %v50 = vpop.permute.xlu0 %49
    %vm51 = vcmask 294144
    %52 = vst.msk [vmem:[#allocation0] sm:$0x1] %vm51, %v50
    %s53 = scalar_lea.vmem %s0, 7
    %v54 = vld [vmem:[%s53] sm:$0x1]
    %55 = vrot.lane.b32.xlu0 %v54, 28
    %v56 = vpop.permute.xlu0 %55
    %vm57 = vcmask 261344
    %58 = vst.msk [vmem:[#allocation0] sm:$0x1] %vm57, %v56
    %s59 = scalar_lea.vmem %s0, 6
    %v60 = vld [vmem:[%s59] sm:$0x1]
    %61 = vrot.lane.b32.xlu0 %v60, 24
    %v62 = vpop.permute.xlu0 %61
    %vm63 = vcmask 228544
    %64 = vst.msk [vmem:[#allocation0] sm:$0x1] %vm63, %v62
    %s65 = scalar_lea.vmem %s0, 5
    %v66 = vld [vmem:[%s65] sm:$0x1]
    %67 = vrot.lane.b32.xlu0 %v66, 20
    %v68 = vpop.permute.xlu0 %67
    %vm69 = vcmask 195744
    %70 = vst.msk [vmem:[#allocation0] sm:$0x1] %vm69, %v68
    %s71 = scalar_lea.vmem %s0, 4
    %v72 = vld [vmem:[%s71] sm:$0x1]
    %73 = vrot.lane.b32.xlu0 %v72, 16
    %v74 = vpop.permute.xlu0 %73
    %vm75 = vcmask 162944
    %76 = vst.msk [vmem:[#allocation0] sm:$0x1] %vm75, %v74
    %s77 = scalar_lea.vmem %s0, 3
    %v78 = vld [vmem:[%s77] sm:$0x1]
    %79 = vrot.lane.b32.xlu0 %v78, 12
    %v80 = vpop.permute.xlu0 %79
    %vm81 = vcmask 130144
    %82 = vst.msk [vmem:[#allocation0] sm:$0x1] %vm81, %v80
    %s83 = scalar_lea.vmem %s0, 2
    %v84 = vld [vmem:[%s83] sm:$0x1]
    %85 = vrot.lane.b32.xlu0 %v84, 8
    %v86 = vpop.permute.xlu0 %85
    %vm87 = vcmask 97344
    %88 = vst.msk [vmem:[#allocation0] sm:$0x1] %vm87, %v86
    %s89 = scalar_lea.vmem %s0, 1
    %v90 = vld [vmem:[%s89] sm:$0x1]
    %91 = vrot.lane.b32.xlu0 %v90, 4
    %v92 = vpop.permute.xlu0 %91
    %vm93 = vcmask 64544
    %94 = vst.msk [vmem:[#allocation0] sm:$0x1] %vm93, %v92
    %s96 = ssub.s32 2, 1
    %v97 = vld [vmem:[#allocation0] sm:%s96]
    %s99 = ssub.s32 2, 1
    %100 = vst [vmem:[%s1] sm:%s99] %v97

// kernel: tile.54
$region0: #{tile.54}
  %s0 = inlined_call_operand.vmem [shape: f32[3,3,16,4], index: 0, kind: input, shape index: {}]
  %s1 = inlined_call_operand.vmem [shape: f32[3,3,64], index: 1, kind: output, shape index: {}]
  $region1: #{tile.54} parent=0
    #allocation0 [shape = 'u8[12288]{0}', space=vmem, size = 0x3000, scoped, tag = 'scoped mem for output reshape']
    %s2 = smov 3
    %v3 = vld [vmem:[%s0] ss:$16 sm:%s2]
    %s4 = smov 12
    %v5 = vld [vmem:[%s0] ss:$16 sm:%s4]
    %vm6 = vcmask 1043458
    %v7 = vsel %vm6, %v5, %v3
    %s8 = smov 48
    %v9 = vld [vmem:[%s0] ss:$16 sm:%s8]
    %vm10 = vcmask 1045508
    %v11 = vsel %vm10, %v9, %v7
    %s12 = smov 192
    %v13 = vld [vmem:[%s0] ss:$16 sm:%s12]
    %vm14 = vcmask 1047558
    %v15 = vsel %vm14, %v13, %v11
    %vm16 = vcmask 31744
    %17 = vst.msk [vmem:[#allocation0] sm:$0x7] %vm16, %v15
    %s18 = scalar_lea.vmem [#allocation0], 5
    %19 = vst.msk [vmem:[%s18] sm:$0x38] %vm16, %v15
    %s20 = scalar_lea.vmem [#allocation0], 10
    %21 = vst.msk [vmem:[%s20] sm:$0xc0] %vm16, %v15
    %s22 = scalar_lea.vmem %s0, 128
    %v23 = vld [vmem:[%s22] sm:$0x1]
    %vm24 = vcmask 31744
    %s25 = scalar_lea.vmem [#allocation0], 18
    %26 = vst.msk [vmem:[%s25] sm:$0x1] %vm24, %v23
    %s27 = scalar_lea.vmem %s0, 15
    %s28 = smov 3
    %v29 = vld [vmem:[%s27] ss:$16 sm:%s28]
    %s30 = scalar_lea.vmem %s0, 15
    %s31 = smov 12
    %v32 = vld [vmem:[%s30] ss:$16 sm:%s31]
    %vm33 = vcmask 1043458
    %v34 = vsel %vm33, %v32, %v29
    %s35 = scalar_lea.vmem %s0, 15
    %s36 = smov 48
    %v37 = vld [vmem:[%s35] ss:$16 sm:%s36]
    %vm38 = vcmask 1045508
    %v39 = vsel %vm38, %v37, %v34
    %s40 = scalar_lea.vmem %s0, 15
    %s41 = smov 192
    %v42 = vld [vmem:[%s40] ss:$16 sm:%s41]
    %vm43 = vcmask 1047558
    %v44 = vsel %vm43, %v42, %v39
    %45 = vrot.lane.b32.xlu0 %v44, 60
    %v46 = vpop.permute.xlu0 %45
    %vm47 = vcmask 523744
    %48 = vst.msk [vmem:[#allocation0] sm:$0x7] %vm47, %v46
    %s49 = scalar_lea.vmem [#allocation0], 5
    %50 = vst.msk [vmem:[%s49] sm:$0x38] %vm47, %v46
    %s51 = scalar_lea.vmem [#allocation0], 10
    %52 = vst.msk [vmem:[%s51] sm:$0xc0] %vm47, %v46
    %s53 = scalar_lea.vmem %s0, 143
    %v54 = vld [vmem:[%s53] sm:$0x1]
    %55 = vrot.lane.b32.xlu0 %v54, 60
    %v56 = vpop.permute.xlu0 %55
    %vm57 = vcmask 523744
    %s58 = scalar_lea.vmem [#allocation0], 18
    %59 = vst.msk [vmem:[%s58] sm:$0x1] %vm57, %v56
    %s60 = scalar_lea.vmem %s0, 14
    %s61 = smov 3
    %v62 = vld [vmem:[%s60] ss:$16 sm:%s61]
    %s63 = scalar_lea.vmem %s0, 14
    %s64 = smov 12
    %v65 = vld [vmem:[%s63] ss:$16 sm:%s64]
    %vm66 = vcmask 1043458
    %v67 = vsel %vm66, %v65, %v62
    %s68 = scalar_lea.vmem %s0, 14
    %s69 = smov 48
    %v70 = vld [vmem:[%s68] ss:$16 sm:%s69]
    %vm71 = vcmask 1045508
    %v72 = vsel %vm71, %v70, %v67
    %s73 = scalar_lea.vmem %s0, 14
    %s74 = smov 192
    %v75 = vld [vmem:[%s73] ss:$16 sm:%s74]
    %vm76 = vcmask 1047558
    %v77 = vsel %vm76, %v75, %v72
    %78 = vrot.lane.b32.xlu0 %v77, 56
    %v79 = vpop.permute.xlu0 %78
    %vm80 = vcmask 490944
    %81 = vst.msk [vmem:[#allocation0] sm:$0x7] %vm80, %v79
    %s82 = scalar_lea.vmem [#allocation0], 5
    %83 = vst.msk [vmem:[%s82] sm:$0x38] %vm80, %v79
    %s84 = scalar_lea.vmem [#allocation0], 10
    %85 = vst.msk [vmem:[%s84] sm:$0xc0] %vm80, %v79
    %s86 = scalar_lea.vmem %s0, 142
    %v87 = vld [vmem:[%s86] sm:$0x1]
    %88 = vrot.lane.b32.xlu0 %v87, 56
    %v89 = vpop.permute.xlu0 %88
    %vm90 = vcmask 490944
    %s91 = scalar_lea.vmem [#allocation0], 18
    %92 = vst.msk [vmem:[%s91] sm:$0x1] %vm90, %v89
    %s93 = scalar_lea.vmem %s0, 13
    %s94 = smov 3
    %v95 = vld [vmem:[%s93] ss:$16 sm:%s94]
    %s96 = scalar_lea.vmem %s0, 13
    %s97 = smov 12
    %v98 = vld [vmem:[%s96] ss:$16 sm:%s97]
    %vm99 = vcmask 1043458
    %v100 = vsel %vm99, %v98, %v95
    %s101 = scalar_lea.vmem %s0, 13
    %s102 = smov 48
    %v103 = vld [vmem:[%s101] ss:$16 sm:%s102]
    %vm104 = vcmask 1045508
    %v105 = vsel %vm104, %v103, %v100
    %s106 = scalar_lea.vmem %s0, 13
    %s107 = smov 192
    %v108 = vld [vmem:[%s106] ss:$16 sm:%s107]
    %vm109 = vcmask 1047558
    %v110 = vsel %vm109, %v108, %v105
    %111 = vrot.lane.b32.xlu0 %v110, 52
    %v112 = vpop.permute.xlu0 %111
    %vm113 = vcmask 458144
    %114 = vst.msk [vmem:[#allocation0] sm:$0x7] %vm113, %v112
    %s115 = scalar_lea.vmem [#allocation0], 5
    %116 = vst.msk [vmem:[%s115] sm:$0x38] %vm113, %v112
    %s117 = scalar_lea.vmem [#allocation0], 10
    %118 = vst.msk [vmem:[%s117] sm:$0xc0] %vm113, %v112
    %s119 = scalar_lea.vmem %s0, 141
    %v120 = vld [vmem:[%s119] sm:$0x1]
    %121 = vrot.lane.b32.xlu0 %v120, 52
    %v122 = vpop.permute.xlu0 %121
    %vm123 = vcmask 458144
    %s124 = scalar_lea.vmem [#allocation0], 18
    %125 = vst.msk [vmem:[%s124] sm:$0x1] %vm123, %v122
    %s126 = scalar_lea.vmem %s0, 12
    %s127 = smov 3
    %v128 = vld [vmem:[%s126] ss:$16 sm:%s127]
    %s129 = scalar_lea.vmem %s0, 12
    %s130 = smov 12
    %v131 = vld [vmem:[%s129] ss:$16 sm:%s130]
    %vm132 = vcmask 1043458
    %v133 = vsel %vm132, %v131, %v128
    %s134 = scalar_lea.vmem %s0, 12
    %s135 = smov 48
    %v136 = vld [vmem:[%s134] ss:$16 sm:%s135]
    %vm137 = vcmask 1045508
    %v138 = vsel %vm137, %v136, %v133
    %s139 = scalar_lea.vmem %s0, 12
    %s140 = smov 192
    %v141 = vld [vmem:[%s139] ss:$16 sm:%s140]
    %vm142 = vcmask 1047558
    %v143 = vsel %vm142, %v141, %v138
    %144 = vrot.lane.b32.xlu0 %v143, 48
    %v145 = vpop.permute.xlu0 %144
    %vm146 = vcmask 425344
    %147 = vst.msk [vmem:[#allocation0] sm:$0x7] %vm146, %v145
    %s148 = scalar_lea.vmem [#allocation0], 5
    %149 = vst.msk [vmem:[%s148] sm:$0x38] %vm146, %v145
    %s150 = scalar_lea.vmem [#allocation0], 10
    %151 = vst.msk [vmem:[%s150] sm:$0xc0] %vm146, %v145
    %s152 = scalar_lea.vmem %s0, 140
    %v153 = vld [vmem:[%s152] sm:$0x1]
    %154 = vrot.lane.b32.xlu0 %v153, 48
    %v155 = vpop.permute.xlu0 %154
    %vm156 = vcmask 425344
    %s157 = scalar_lea.vmem [#allocation0], 18
    %158 = vst.msk [vmem:[%s157] sm:$0x1] %vm156, %v155
    %s159 = scalar_lea.vmem %s0, 11
    %s160 = smov 3
    %v161 = vld [vmem:[%s159] ss:$16 sm:%s160]
    %s162 = scalar_lea.vmem %s0, 11
    %s163 = smov 12
    %v164 = vld [vmem:[%s162] ss:$16 sm:%s163]
    %vm165 = vcmask 1043458
    %v166 = vsel %vm165, %v164, %v161
    %s167 = scalar_lea.vmem %s0, 11
    %s168 = smov 48
    %v169 = vld [vmem:[%s167] ss:$16 sm:%s168]
    %vm170 = vcmask 1045508
    %v171 = vsel %vm170, %v169, %v166
    %s172 = scalar_lea.vmem %s0, 11
    %s173 = smov 192
    %v174 = vld [vmem:[%s172] ss:$16 sm:%s173]
    %vm175 = vcmask 1047558
    %v176 = vsel %vm175, %v174, %v171
    %177 = vrot.lane.b32.xlu0 %v176, 44
    %v178 = vpop.permute.xlu0 %177
    %vm179 = vcmask 392544
    %180 = vst.msk [vmem:[#allocation0] sm:$0x7] %vm179, %v178
    %s181 = scalar_lea.vmem [#allocation0], 5
    %182 = vst.msk [vmem:[%s181] sm:$0x38] %vm179, %v178
    %s183 = scalar_lea.vmem [#allocation0], 10
    %184 = vst.msk [vmem:[%s183] sm:$0xc0] %vm179, %v178
    %s185 = scalar_lea.vmem %s0, 139
    %v186 = vld [vmem:[%s185] sm:$0x1]
    %187 = vrot.lane.b32.xlu0 %v186, 44
    %v188 = vpop.permute.xlu0 %187
    %vm189 = vcmask 392544
    %s190 = scalar_lea.vmem [#allocation0], 18
    %191 = vst.msk [vmem:[%s190] sm:$0x1] %vm189, %v188
    %s192 = scalar_lea.vmem %s0, 10
    %s193 = smov 3
    %v194 = vld [vmem:[%s192] ss:$16 sm:%s193]
    %s195 = scalar_lea.vmem %s0, 10
    %s196 = smov 12
    %v197 = vld [vmem:[%s195] ss:$16 sm:%s196]
    %vm198 = vcmask 1043458
    %v199 = vsel %vm198, %v197, %v194
    %s200 = scalar_lea.vmem %s0, 10
    %s201 = smov 48
    %v202 = vld [vmem:[%s200] ss:$16 sm:%s201]
    %vm203 = vcmask 1045508
    %v204 = vsel %vm203, %v202, %v199
    %s205 = scalar_lea.vmem %s0, 10
    %s206 = smov 192
    %v207 = vld [vmem:[%s205] ss:$16 sm:%s206]
    %vm208 = vcmask 1047558
    %v209 = vsel %vm208, %v207, %v204
    %210 = vrot.lane.b32.xlu0 %v209, 40
    %v211 = vpop.permute.xlu0 %210
    %vm212 = vcmask 359744
    %213 = vst.msk [vmem:[#allocation0] sm:$0x7] %vm212, %v211
    %s214 = scalar_lea.vmem [#allocation0], 5
    %215 = vst.msk [vmem:[%s214] sm:$0x38] %vm212, %v211
    %s216 = scalar_lea.vmem [#allocation0], 10
    %217 = vst.msk [vmem:[%s216] sm:$0xc0] %vm212, %v211
    %s218 = scalar_lea.vmem %s0, 138
    %v219 = vld [vmem:[%s218] sm:$0x1]
    %220 = vrot.lane.b32.xlu0 %v219, 40
    %v221 = vpop.permute.xlu0 %220
    %vm222 = vcmask 359744
    %s223 = scalar_lea.vmem [#allocation0], 18
    %224 = vst.msk [vmem:[%s223] sm:$0x1] %vm222, %v221
    %s225 = scalar_lea.vmem %s0, 9
    %s226 = smov 3
    %v227 = vld [vmem:[%s225] ss:$16 sm:%s226]
    %s228 = scalar_lea.vmem %s0, 9
    %s229 = smov 12
    %v230 = vld [vmem:[%s228] ss:$16 sm:%s229]
    %vm231 = vcmask 1043458
    %v232 = vsel %vm231, %v230, %v227
    %s233 = scalar_lea.vmem %s0, 9
    %s234 = smov 48
    %v235 = vld [vmem:[%s233] ss:$16 sm:%s234]
    %vm236 = vcmask 1045508
    %v237 = vsel %vm236, %v235, %v232
    %s238 = scalar_lea.vmem %s0, 9
    %s239 = smov 192
    %v240 = vld [vmem:[%s238] ss:$16 sm:%s239]
    %vm241 = vcmask 1047558
    %v242 = vsel %vm241, %v240, %v237
    %243 = vrot.lane.b32.xlu0 %v242, 36
    %v244 = vpop.permute.xlu0 %243
    %vm245 = vcmask 326944
    %246 = vst.msk [vmem:[#allocation0] sm:$0x7] %vm245, %v244
    %s247 = scalar_lea.vmem [#allocation0], 5
    %248 = vst.msk [vmem:[%s247] sm:$0x38] %vm245, %v244
    %s249 = scalar_lea.vmem [#allocation0], 10
    %250 = vst.msk [vmem:[%s249] sm:$0xc0] %vm245, %v244
    %s251 = scalar_lea.vmem %s0, 137
    %v252 = vld [vmem:[%s251] sm:$0x1]
    %253 = vrot.lane.b32.xlu0 %v252, 36
    %v254 = vpop.permute.xlu0 %253
    %vm255 = vcmask 326944
    %s256 = scalar_lea.vmem [#allocation0], 18
    %257 = vst.msk [vmem:[%s256] sm:$0x1] %vm255, %v254
    %s258 = scalar_lea.vmem %s0, 8
    %s259 = smov 3
    %v260 = vld [vmem:[%s258] ss:$16 sm:%s259]
    %s261 = scalar_lea.vmem %s0, 8
    %s262 = smov 12
    %v263 = vld [vmem:[%s261] ss:$16 sm:%s262]
    %vm264 = vcmask 1043458
    %v265 = vsel %vm264, %v263, %v260
    %s266 = scalar_lea.vmem %s0, 8
    %s267 = smov 48
    %v268 = vld [vmem:[%s266] ss:$16 sm:%s267]
    %vm269 = vcmask 1045508
    %v270 = vsel %vm269, %v268, %v265
    %s271 = scalar_lea.vmem %s0, 8
    %s272 = smov 192
    %v273 = vld [vmem:[%s271] ss:$16 sm:%s272]
    %vm274 = vcmask 1047558
    %v275 = vsel %vm274, %v273, %v270
    %276 = vrot.lane.b32.xlu0 %v275, 32
    %v277 = vpop.permute.xlu0 %276
    %vm278 = vcmask 294144
    %279 = vst.msk [vmem:[#allocation0] sm:$0x7] %vm278, %v277
    %s280 = scalar_lea.vmem [#allocation0], 5
    %281 = vst.msk [vmem:[%s280] sm:$0x38] %vm278, %v277
    %s282 = scalar_lea.vmem [#allocation0], 10
    %283 = vst.msk [vmem:[%s282] sm:$0xc0] %vm278, %v277
    %s284 = scalar_lea.vmem %s0, 136
    %v285 = vld [vmem:[%s284] sm:$0x1]
    %286 = vrot.lane.b32.xlu0 %v285, 32
    %v287 = vpop.permute.xlu0 %286
    %vm288 = vcmask 294144
    %s289 = scalar_lea.vmem [#allocation0], 18
    %290 = vst.msk [vmem:[%s289] sm:$0x1] %vm288, %v287
    %s291 = scalar_lea.vmem %s0, 7
    %s292 = smov 3
    %v293 = vld [vmem:[%s291] ss:$16 sm:%s292]
    %s294 = scalar_lea.vmem %s0, 7
    %s295 = smov 12
    %v296 = vld [vmem:[%s294] ss:$16 sm:%s295]
    %vm297 = vcmask 1043458
    %v298 = vsel %vm297, %v296, %v293
    %s299 = scalar_lea.vmem %s0, 7
    %s300 = smov 48
    %v301 = vld [vmem:[%s299] ss:$16 sm:%s300]
    %vm302 = vcmask 1045508
    %v303 = vsel %vm302, %v301, %v298
    %s304 = scalar_lea.vmem %s0, 7
    %s305 = smov 192
    %v306 = vld [vmem:[%s304] ss:$16 sm:%s305]
    %vm307 = vcmask 1047558
    %v308 = vsel %vm307, %v306, %v303
    %309 = vrot.lane.b32.xlu0 %v308, 28
    %v310 = vpop.permute.xlu0 %309
    %vm311 = vcmask 261344
    %312 = vst.msk [vmem:[#allocation0] sm:$0x7] %vm311, %v310
    %s313 = scalar_lea.vmem [#allocation0], 5
    %314 = vst.msk [vmem:[%s313] sm:$0x38] %vm311, %v310
    %s315 = scalar_lea.vmem [#allocation0], 10
    %316 = vst.msk [vmem:[%s315] sm:$0xc0] %vm311, %v310
    %s317 = scalar_lea.vmem %s0, 135
    %v318 = vld [vmem:[%s317] sm:$0x1]
    %319 = vrot.lane.b32.xlu0 %v318, 28
    %v320 = vpop.permute.xlu0 %319
    %vm321 = vcmask 261344
    %s322 = scalar_lea.vmem [#allocation0], 18
    %323 = vst.msk [vmem:[%s322] sm:$0x1] %vm321, %v320
    %s324 = scalar_lea.vmem %s0, 6
    %s325 = smov 3
    %v326 = vld [vmem:[%s324] ss:$16 sm:%s325]
    %s327 = scalar_lea.vmem %s0, 6
    %s328 = smov 12
    %v329 = vld [vmem:[%s327] ss:$16 sm:%s328]
    %vm330 = vcmask 1043458
    %v331 = vsel %vm330, %v329, %v326
    %s332 = scalar_lea.vmem %s0, 6
    %s333 = smov 48
    %v334 = vld [vmem:[%s332] ss:$16 sm:%s333]
    %vm335 = vcmask 1045508
    %v336 = vsel %vm335, %v334, %v331
    %s337 = scalar_lea.vmem %s0, 6
    %s338 = smov 192
    %v339 = vld [vmem:[%s337] ss:$16 sm:%s338]
    %vm340 = vcmask 1047558
    %v341 = vsel %vm340, %v339, %v336
    %342 = vrot.lane.b32.xlu0 %v341, 24
    %v343 = vpop.permute.xlu0 %342
    %vm344 = vcmask 228544
    %345 = vst.msk [vmem:[#allocation0] sm:$0x7] %vm344, %v343
    %s346 = scalar_lea.vmem [#allocation0], 5
    %347 = vst.msk [vmem:[%s346] sm:$0x38] %vm344, %v343
    %s348 = scalar_lea.vmem [#allocation0], 10
    %349 = vst.msk [vmem:[%s348] sm:$0xc0] %vm344, %v343
    %s350 = scalar_lea.vmem %s0, 134
    %v351 = vld [vmem:[%s350] sm:$0x1]
    %352 = vrot.lane.b32.xlu0 %v351, 24
    %v353 = vpop.permute.xlu0 %352
    %vm354 = vcmask 228544
    %s355 = scalar_lea.vmem [#allocation0], 18
    %356 = vst.msk [vmem:[%s355] sm:$0x1] %vm354, %v353
    %s357 = scalar_lea.vmem %s0, 5
    %s358 = smov 3
    %v359 = vld [vmem:[%s357] ss:$16 sm:%s358]
    %s360 = scalar_lea.vmem %s0, 5
    %s361 = smov 12
    %v362 = vld [vmem:[%s360] ss:$16 sm:%s361]
    %vm363 = vcmask 1043458
    %v364 = vsel %vm363, %v362, %v359
    %s365 = scalar_lea.vmem %s0, 5
    %s366 = smov 48
    %v367 = vld [vmem:[%s365] ss:$16 sm:%s366]
    %vm368 = vcmask 1045508
    %v369 = vsel %vm368, %v367, %v364
    %s370 = scalar_lea.vmem %s0, 5
    %s371 = smov 192
    %v372 = vld [vmem:[%s370] ss:$16 sm:%s371]
    %vm373 = vcmask 1047558
    %v374 = vsel %vm373, %v372, %v369
    %375 = vrot.lane.b32.xlu0 %v374, 20
    %v376 = vpop.permute.xlu0 %375
    %vm377 = vcmask 195744
    %378 = vst.msk [vmem:[#allocation0] sm:$0x7] %vm377, %v376
    %s379 = scalar_lea.vmem [#allocation0], 5
    %380 = vst.msk [vmem:[%s379] sm:$0x38] %vm377, %v376
    %s381 = scalar_lea.vmem [#allocation0], 10
    %382 = vst.msk [vmem:[%s381] sm:$0xc0] %vm377, %v376
    %s383 = scalar_lea.vmem %s0, 133
    %v384 = vld [vmem:[%s383] sm:$0x1]
    %385 = vrot.lane.b32.xlu0 %v384, 20
    %v386 = vpop.permute.xlu0 %385
    %vm387 = vcmask 195744
    %s388 = scalar_lea.vmem [#allocation0], 18
    %389 = vst.msk [vmem:[%s388] sm:$0x1] %vm387, %v386
    %s390 = scalar_lea.vmem %s0, 4
    %s391 = smov 3
    %v392 = vld [vmem:[%s390] ss:$16 sm:%s391]
    %s393 = scalar_lea.vmem %s0, 4
    %s394 = smov 12
    %v395 = vld [vmem:[%s393] ss:$16 sm:%s394]
    %vm396 = vcmask 1043458
    %v397 = vsel %vm396, %v395, %v392
    %s398 = scalar_lea.vmem %s0, 4
    %s399 = smov 48
    %v400 = vld [vmem:[%s398] ss:$16 sm:%s399]
    %vm401 = vcmask 1045508
    %v402 = vsel %vm401, %v400, %v397
    %s403 = scalar_lea.vmem %s0, 4
    %s404 = smov 192
    %v405 = vld [vmem:[%s403] ss:$16 sm:%s404]
    %vm406 = vcmask 1047558
    %v407 = vsel %vm406, %v405, %v402
    %408 = vrot.lane.b32.xlu0 %v407, 16
    %v409 = vpop.permute.xlu0 %408
    %vm410 = vcmask 162944
    %411 = vst.msk [vmem:[#allocation0] sm:$0x7] %vm410, %v409
    %s412 = scalar_lea.vmem [#allocation0], 5
    %413 = vst.msk [vmem:[%s412] sm:$0x38] %vm410, %v409
    %s414 = scalar_lea.vmem [#allocation0], 10
    %415 = vst.msk [vmem:[%s414] sm:$0xc0] %vm410, %v409
    %s416 = scalar_lea.vmem %s0, 132
    %v417 = vld [vmem:[%s416] sm:$0x1]
    %418 = vrot.lane.b32.xlu0 %v417, 16
    %v419 = vpop.permute.xlu0 %418
    %vm420 = vcmask 162944
    %s421 = scalar_lea.vmem [#allocation0], 18
    %422 = vst.msk [vmem:[%s421] sm:$0x1] %vm420, %v419
    %s423 = scalar_lea.vmem %s0, 3
    %s424 = smov 3
    %v425 = vld [vmem:[%s423] ss:$16 sm:%s424]
    %s426 = scalar_lea.vmem %s0, 3
    %s427 = smov 12
    %v428 = vld [vmem:[%s426] ss:$16 sm:%s427]
    %vm429 = vcmask 1043458
    %v430 = vsel %vm429, %v428, %v425
    %s431 = scalar_lea.vmem %s0, 3
    %s432 = smov 48
    %v433 = vld [vmem:[%s431] ss:$16 sm:%s432]
    %vm434 = vcmask 1045508
    %v435 = vsel %vm434, %v433, %v430
    %s436 = scalar_lea.vmem %s0, 3
    %s437 = smov 192
    %v438 = vld [vmem:[%s436] ss:$16 sm:%s437]
    %vm439 = vcmask 1047558
    %v440 = vsel %vm439, %v438, %v435
    %441 = vrot.lane.b32.xlu0 %v440, 12
    %v442 = vpop.permute.xlu0 %441
    %vm443 = vcmask 130144
    %444 = vst.msk [vmem:[#allocation0] sm:$0x7] %vm443, %v442
    %s445 = scalar_lea.vmem [#allocation0], 5
    %446 = vst.msk [vmem:[%s445] sm:$0x38] %vm443, %v442
    %s447 = scalar_lea.vmem [#allocation0], 10
    %448 = vst.msk [vmem:[%s447] sm:$0xc0] %vm443, %v442
    %s449 = scalar_lea.vmem %s0, 131
    %v450 = vld [vmem:[%s449] sm:$0x1]
    %451 = vrot.lane.b32.xlu0 %v450, 12
    %v452 = vpop.permute.xlu0 %451
    %vm453 = vcmask 130144
    %s454 = scalar_lea.vmem [#allocation0], 18
    %455 = vst.msk [vmem:[%s454] sm:$0x1] %vm453, %v452
    %s456 = scalar_lea.vmem %s0, 2
    %s457 = smov 3
    %v458 = vld [vmem:[%s456] ss:$16 sm:%s457]
    %s459 = scalar_lea.vmem %s0, 2
    %s460 = smov 12
    %v461 = vld [vmem:[%s459] ss:$16 sm:%s460]
    %vm462 = vcmask 1043458
    %v463 = vsel %vm462, %v461, %v458
    %s464 = scalar_lea.vmem %s0, 2
    %s465 = smov 48
    %v466 = vld [vmem:[%s464] ss:$16 sm:%s465]
    %vm467 = vcmask 1045508
    %v468 = vsel %vm467, %v466, %v463
    %s469 = scalar_lea.vmem %s0, 2
    %s470 = smov 192
    %v471 = vld [vmem:[%s469] ss:$16 sm:%s470]
    %vm472 = vcmask 1047558
    %v473 = vsel %vm472, %v471, %v468
    %474 = vrot.lane.b32.xlu0 %v473, 8
    %v475 = vpop.permute.xlu0 %474
    %vm476 = vcmask 97344
    %477 = vst.msk [vmem:[#allocation0] sm:$0x7] %vm476, %v475
    %s478 = scalar_lea.vmem [#allocation0], 5
    %479 = vst.msk [vmem:[%s478] sm:$0x38] %vm476, %v475
    %s480 = scalar_lea.vmem [#allocation0], 10
    %481 = vst.msk [vmem:[%s480] sm:$0xc0] %vm476, %v475
    %s482 = scalar_lea.vmem %s0, 130
    %v483 = vld [vmem:[%s482] sm:$0x1]
    %484 = vrot.lane.b32.xlu0 %v483, 8
    %v485 = vpop.permute.xlu0 %484
    %vm486 = vcmask 97344
    %s487 = scalar_lea.vmem [#allocation0], 18
    %488 = vst.msk [vmem:[%s487] sm:$0x1] %vm486, %v485
    %s489 = scalar_lea.vmem %s0, 1
    %s490 = smov 3
    %v491 = vld [vmem:[%s489] ss:$16 sm:%s490]
    %s492 = scalar_lea.vmem %s0, 1
    %s493 = smov 12
    %v494 = vld [vmem:[%s492] ss:$16 sm:%s493]
    %vm495 = vcmask 1043458
    %v496 = vsel %vm495, %v494, %v491
    %s497 = scalar_lea.vmem %s0, 1
    %s498 = smov 48
    %v499 = vld [vmem:[%s497] ss:$16 sm:%s498]
    %vm500 = vcmask 1045508
    %v501 = vsel %vm500, %v499, %v496
    %s502 = scalar_lea.vmem %s0, 1
    %s503 = smov 192
    %v504 = vld [vmem:[%s502] ss:$16 sm:%s503]
    %vm505 = vcmask 1047558
    %v506 = vsel %vm505, %v504, %v501
    %507 = vrot.lane.b32.xlu0 %v506, 4
    %v508 = vpop.permute.xlu0 %507
    %vm509 = vcmask 64544
    %510 = vst.msk [vmem:[#allocation0] sm:$0x7] %vm509, %v508
    %s511 = scalar_lea.vmem [#allocation0], 5
    %512 = vst.msk [vmem:[%s511] sm:$0x38] %vm509, %v508
    %s513 = scalar_lea.vmem [#allocation0], 10
    %514 = vst.msk [vmem:[%s513] sm:$0xc0] %vm509, %v508
    %s515 = scalar_lea.vmem %s0, 129
    %v516 = vld [vmem:[%s515] sm:$0x1]
    %517 = vrot.lane.b32.xlu0 %v516, 4
    %v518 = vpop.permute.xlu0 %517
    %vm519 = vcmask 64544
    %s520 = scalar_lea.vmem [#allocation0], 18
    %521 = vst.msk [vmem:[%s520] sm:$0x1] %vm519, %v518
    %s523 = ssub.s32 16, 1
    %v524 = vld [vmem:[#allocation0] sm:%s523]
    %s526 = ssub.s32 16, 1
    %527 = vst [vmem:[%s1] sm:%s526] %v524
    %s528 = scalar_lea.vmem [#allocation0], 8
    %v529 = vld [vmem:[%s528] sm:%s523]
    %s531 = ssub.s32 16, 1
    %s532 = scalar_lea.vmem %s1, 4
    %533 = vst [vmem:[%s532] sm:%s531] %v529
    %s534 = scalar_lea.vmem [#allocation0], 16
    %v535 = vld [vmem:[%s534] sm:%s523]
    %s537 = ssub.s32 16, 1
    %s538 = scalar_lea.vmem %s1, 8
    %539 = vst [vmem:[%s538] sm:%s537] %v535

// kernel: tile.94
$region0: #{tile.94}
  %s0 = inlined_call_operand.vmem [shape: f32[2,16,4], index: 0, kind: input, shape index: {}]
  %s1 = inlined_call_operand.vmem [shape: f32[2,64], index: 1, kind: output, shape index: {}]
  $region1: #{tile.94} parent=0
    #allocation0 [shape = 'u8[4096]{0}', space=vmem, size = 0x1000, scoped, tag = 'scoped mem for output reshape']
    %s2 = smov 3
    %v3 = vld [vmem:[%s0] ss:$16 sm:%s2]
    %vm4 = vcmask 31744
    %5 = vst.msk [vmem:[#allocation0] sm:$0x3] %vm4, %v3
    %s6 = scalar_lea.vmem %s0, 15
    %s7 = smov 3
    %v8 = vld [vmem:[%s6] ss:$16 sm:%s7]
    %9 = vrot.lane.b32.xlu0 %v8, 60
    %v10 = vpop.permute.xlu0 %9
    %vm11 = vcmask 523744
    %12 = vst.msk [vmem:[#allocation0] sm:$0x3] %vm11, %v10
    %s13 = scalar_lea.vmem %s0, 14
    %s14 = smov 3
    %v15 = vld [vmem:[%s13] ss:$16 sm:%s14]
    %16 = vrot.lane.b32.xlu0 %v15, 56
    %v17 = vpop.permute.xlu0 %16
    %vm18 = vcmask 490944
    %19 = vst.msk [vmem:[#allocation0] sm:$0x3] %vm18, %v17
    %s20 = scalar_lea.vmem %s0, 13
    %s21 = smov 3
    %v22 = vld [vmem:[%s20] ss:$16 sm:%s21]
    %23 = vrot.lane.b32.xlu0 %v22, 52
    %v24 = vpop.permute.xlu0 %23
    %vm25 = vcmask 458144
    %26 = vst.msk [vmem:[#allocation0] sm:$0x3] %vm25, %v24
    %s27 = scalar_lea.vmem %s0, 12
    %s28 = smov 3
    %v29 = vld [vmem:[%s27] ss:$16 sm:%s28]
    %30 = vrot.lane.b32.xlu0 %v29, 48
    %v31 = vpop.permute.xlu0 %30
    %vm32 = vcmask 425344
    %33 = vst.msk [vmem:[#allocation0] sm:$0x3] %vm32, %v31
    %s34 = scalar_lea.vmem %s0, 11
    %s35 = smov 3
    %v36 = vld [vmem:[%s34] ss:$16 sm:%s35]
    %37 = vrot.lane.b32.xlu0 %v36, 44
    %v38 = vpop.permute.xlu0 %37
    %vm39 = vcmask 392544
    %40 = vst.msk [vmem:[#allocation0] sm:$0x3] %vm39, %v38
    %s41 = scalar_lea.vmem %s0, 10
    %s42 = smov 3
    %v43 = vld [vmem:[%s41] ss:$16 sm:%s42]
    %44 = vrot.lane.b32.xlu0 %v43, 40
    %v45 = vpop.permute.xlu0 %44
    %vm46 = vcmask 359744
    %47 = vst.msk [vmem:[#allocation0] sm:$0x3] %vm46, %v45
    %s48 = scalar_lea.vmem %s0, 9
    %s49 = smov 3
    %v50 = vld [vmem:[%s48] ss:$16 sm:%s49]
    %51 = vrot.lane.b32.xlu0 %v50, 36
    %v52 = vpop.permute.xlu0 %51
    %vm53 = vcmask 326944
    %54 = vst.msk [vmem:[#allocation0] sm:$0x3] %vm53, %v52
    %s55 = scalar_lea.vmem %s0, 8
    %s56 = smov 3
    %v57 = vld [vmem:[%s55] ss:$16 sm:%s56]
    %58 = vrot.lane.b32.xlu0 %v57, 32
    %v59 = vpop.permute.xlu0 %58
    %vm60 = vcmask 294144
    %61 = vst.msk [vmem:[#allocation0] sm:$0x3] %vm60, %v59
    %s62 = scalar_lea.vmem %s0, 7
    %s63 = smov 3
    %v64 = vld [vmem:[%s62] ss:$16 sm:%s63]
    %65 = vrot.lane.b32.xlu0 %v64, 28
    %v66 = vpop.permute.xlu0 %65
    %vm67 = vcmask 261344
    %68 = vst.msk [vmem:[#allocation0] sm:$0x3] %vm67, %v66
    %s69 = scalar_lea.vmem %s0, 6
    %s70 = smov 3
    %v71 = vld [vmem:[%s69] ss:$16 sm:%s70]
    %72 = vrot.lane.b32.xlu0 %v71, 24
    %v73 = vpop.permute.xlu0 %72
    %vm74 = vcmask 228544
    %75 = vst.msk [vmem:[#allocation0] sm:$0x3] %vm74, %v73
    %s76 = scalar_lea.vmem %s0, 5
    %s77 = smov 3
    %v78 = vld [vmem:[%s76] ss:$16 sm:%s77]
    %79 = vrot.lane.b32.xlu0 %v78, 20
    %v80 = vpop.permute.xlu0 %79
    %vm81 = vcmask 195744
    %82 = vst.msk [vmem:[#allocation0] sm:$0x3] %vm81, %v80
    %s83 = scalar_lea.vmem %s0, 4
    %s84 = smov 3
    %v85 = vld [vmem:[%s83] ss:$16 sm:%s84]
    %86 = vrot.lane.b32.xlu0 %v85, 16
    %v87 = vpop.permute.xlu0 %86
    %vm88 = vcmask 162944
    %89 = vst.msk [vmem:[#allocation0] sm:$0x3] %vm88, %v87
    %s90 = scalar_lea.vmem %s0, 3
    %s91 = smov 3
    %v92 = vld [vmem:[%s90] ss:$16 sm:%s91]
    %93 = vrot.lane.b32.xlu0 %v92, 12
    %v94 = vpop.permute.xlu0 %93
    %vm95 = vcmask 130144
    %96 = vst.msk [vmem:[#allocation0] sm:$0x3] %vm95, %v94
    %s97 = scalar_lea.vmem %s0, 2
    %s98 = smov 3
    %v99 = vld [vmem:[%s97] ss:$16 sm:%s98]
    %100 = vrot.lane.b32.xlu0 %v99, 8
    %v101 = vpop.permute.xlu0 %100
    %vm102 = vcmask 97344
    %103 = vst.msk [vmem:[#allocation0] sm:$0x3] %vm102, %v101
    %s104 = scalar_lea.vmem %s0, 1
    %s105 = smov 3
    %v106 = vld [vmem:[%s104] ss:$16 sm:%s105]
    %107 = vrot.lane.b32.xlu0 %v106, 4
    %v108 = vpop.permute.xlu0 %107
    %vm109 = vcmask 64544
    %110 = vst.msk [vmem:[#allocation0] sm:$0x3] %vm109, %v108
    %s112 = ssub.s32 4, 1
    %v113 = vld [vmem:[#allocation0] sm:%s112]
    %s115 = ssub.s32 4, 1
    %116 = vst [vmem:[%s1] sm:%s115] %v113

// kernel: sep_residual_block.4
$region0: #{sep_residual_block.4}
  #allocation0 [shape = 'u32[]', space=smem, size = 0x4, offset = 0x4, fixed_abs, tag = 'smem constant byte address 0x4 - core index']
  #allocation1 [shape = 'u32[72,128]{1,0:T(1,128)}', space=vmem, size = 0x9000, scoped, tag = 'internal scratch']
  %s0 = inlined_call_operand.vmem [shape: f32[2,16,64], index: 0, kind: input, shape index: {}, may-alias: {0,1,2}]
  %s1 = inlined_call_operand.vmem [shape: f32[2,16,64], index: 1, kind: input, shape index: {}, may-alias: {0,1,2}]
  %s2 = inlined_call_operand.vmem [shape: f32[2,16,64], index: 2, kind: input, shape index: {}, may-alias: {0,1,2}]
  %s3 = inlined_call_operand.vmem [shape: f32[3,3,64], index: 3, kind: input, shape index: {}]
  %s4 = inlined_call_operand.vmem [shape: f32[2,64], index: 4, kind: input, shape index: {}]
  %s5 = inlined_call_operand.vmem [shape: f32[7,64], index: 5, kind: input, shape index: {}]
  %s6 = inlined_call_operand.vmem [shape: f32[2,2,64], index: 6, kind: output, shape index: {}]
  %s7 = sld [smem:[#allocation0]]
  $region61: #{sep_residual_block.4} parent=0
    _
  %s9 = ssub.s32 1, %s7
  %s10 = scalar_select 0, %s9, %s7
  loop: start=0, step=1, limit=4
  $region2: #{sep_residual_block.4} parent=0 // loop_pre_header
    _
  $region3: #{sep_residual_block.4} parent=0 // loop_header
    %s12 = sphi 0, %s16
    %p13 = scmp.ge.s32.totalorder %s12, 4
    %s19 = sphi 0, %s31
    %s20 = sphi 0, %s27
    %s21 = sphi 0, %s19
    %s22 = sphi 0, %s20
    %s23 = sphi 0, %s21
    %s24 = sphi 0, %s22
    %s36 = sphi 0, %s38
    %s39 = sphi 0, %s36
    %s40 = sphi 0, %s39
    %s56 = sphi 0, %s40
    %s72 = sphi 0, %s74
    %s75 = sphi 0, %s72
    %s76 = sphi 0, %s75
    %s92 = sphi 0, %s76
    %s108 = sphi 0, %s110
    %s111 = sphi 0, %s108
    %s112 = sphi 0, %s111
    %s128 = sphi 0, %s112
    %s132 = sphi 0, %s132
    %s134 = sphi 0, %s132
    %s135 = sphi 0, %s134
    %s149 = sphi 0, %s135
    %s153 = sphi 0, %s153
    %s155 = sphi 0, %s153
    %s156 = sphi 0, %s155
    %s170 = sphi 0, %s156
    %s174 = sphi 0, %s174
    %s176 = sphi 0, %s174
    %s177 = sphi 0, %s176
    %s191 = sphi 0, %s177
    %s197 = sphi 0, %s199
    %s200 = sphi 0, %s197
    %s201 = sphi 0, %s200
    %s217 = sphi 0, %s201
  $region4: #{sep_residual_block.4} parent=0 // loop_header_branch
    %15 = sbr.rel (%p13) target = $region8
  $region5: #{sep_residual_block.4} parent=0 // loop_body
    %s17 = ssub.s32 %s12, 1
    %s18 = ssub.s32 %s12, 2
    %s25 = sadd.s32 1, %s20
    %p26 = scmp.ge.s32.totalorder %s25, 1
    %s27 = scalar_select %p26, 0, %s25
    %s28 = sadd.s32 1, %s19
    %s29 = scalar_select %p26, %s28, %s19
    %p30 = scmp.ge.s32.totalorder %s29, 2
    %s31 = scalar_select %p30, 0, %s29
    %s32 = ssub.s32 %s19, %s31
    %s33 = ssub.s32 %s20, %s27
    %s34 = sor.u32 %s32, %s33
    %p35 = scmp.eq.s32.totalorder %s34, 0
    %s37 = sadd.s32 %s36, 1
    %s38 = scalar_select %p35, %s36, %s37
    %p41 = pneg %p35
    %p42 = scmp.eq.s32.totalorder %s12, 1
    %p43 = por %p41, %p42
    %p44 = scmp.ne.s32.totalorder %s36, %s39
    %p45 = scmp.eq.s32.totalorder %s12, 0
    %p46 = por %p44, %p45
    %p47 = scmp.ne.s32.totalorder %s36, %s39
    %p48 = scmp.eq.s32.totalorder %s17, 1
    %p49 = por %p47, %p48
    %p50 = scmp.ne.s32.totalorder %s39, %s40
    %p51 = scmp.eq.s32.totalorder %s17, 0
    %p52 = por %p50, %p51
    %p53 = scmp.ne.s32.totalorder %s39, %s40
    %p54 = scmp.eq.s32.totalorder %s18, 1
    %p55 = por %p53, %p54
    %p57 = scmp.ne.s32.totalorder %s40, %s56
    %p58 = scmp.eq.s32.totalorder %s18, 0
    %p59 = por %p57, %p58
    %s60 = smul.u32 %s20, 2
    %s61 = ssub.s32 %s60, 1
    %p62 = scmp.gt.s32.totalorder %s61, 0
    %s63 = scalar_select %p62, %s61, 0
    %s64 = smul.u32 %s27, 2
    %s65 = ssub.s32 %s64, 1
    %p66 = scmp.gt.s32.totalorder %s65, 0
    %s67 = scalar_select %p66, %s65, 0
    %s68 = ssub.s32 %s19, %s31
    %s69 = ssub.s32 %s63, %s67
    %s70 = sor.u32 %s68, %s69
    %p71 = scmp.eq.s32.totalorder %s70, 0
    %s73 = sadd.s32 %s72, 1
    %s74 = scalar_select %p71, %s72, %s73
    %p77 = pneg %p71
    %p78 = scmp.eq.s32.totalorder %s12, 1
    %p79 = por %p77, %p78
    %p80 = scmp.ne.s32.totalorder %s72, %s75
    %p81 = scmp.eq.s32.totalorder %s12, 0
    %p82 = por %p80, %p81
    %p83 = scmp.ne.s32.totalorder %s72, %s75
    %p84 = scmp.eq.s32.totalorder %s17, 1
    %p85 = por %p83, %p84
    %p86 = scmp.ne.s32.totalorder %s75, %s76
    %p87 = scmp.eq.s32.totalorder %s17, 0
    %p88 = por %p86, %p87
    %p89 = scmp.ne.s32.totalorder %s75, %s76
    %p90 = scmp.eq.s32.totalorder %s18, 1
    %p91 = por %p89, %p90
    %p93 = scmp.ne.s32.totalorder %s76, %s92
    %p94 = scmp.eq.s32.totalorder %s18, 0
    %p95 = por %p93, %p94
    %s96 = sadd.s32 %s20, 1
    %s97 = smul.u32 %s96, 2
    %p98 = scmp.lt.s32.totalorder %s97, 1
    %s99 = scalar_select %p98, %s97, 1
    %s100 = sadd.s32 %s27, 1
    %s101 = smul.u32 %s100, 2
    %p102 = scmp.lt.s32.totalorder %s101, 1
    %s103 = scalar_select %p102, %s101, 1
    %s104 = ssub.s32 %s19, %s31
    %s105 = ssub.s32 %s99, %s103
    %s106 = sor.u32 %s104, %s105
    %p107 = scmp.eq.s32.totalorder %s106, 0
    %s109 = sadd.s32 %s108, 1
    %s110 = scalar_select %p107, %s108, %s109
    %p113 = pneg %p107
    %p114 = scmp.eq.s32.totalorder %s12, 1
    %p115 = por %p113, %p114
    %p116 = scmp.ne.s32.totalorder %s108, %s111
    %p117 = scmp.eq.s32.totalorder %s12, 0
    %p118 = por %p116, %p117
    %p119 = scmp.ne.s32.totalorder %s108, %s111
    %p120 = scmp.eq.s32.totalorder %s17, 1
    %p121 = por %p119, %p120
    %p122 = scmp.ne.s32.totalorder %s111, %s112
    %p123 = scmp.eq.s32.totalorder %s17, 0
    %p124 = por %p122, %p123
    %p125 = scmp.ne.s32.totalorder %s111, %s112
    %p126 = scmp.eq.s32.totalorder %s18, 1
    %p127 = por %p125, %p126
    %p129 = scmp.ne.s32.totalorder %s112, %s128
    %p130 = scmp.eq.s32.totalorder %s18, 0
    %p131 = por %p129, %p130
    %s133 = sadd.s32 %s132, 1
    %p136 = scmp.eq.s32.totalorder %s12, 1
    %p137 = scmp.ne.s32.totalorder %s132, %s134
    %p138 = scmp.eq.s32.totalorder %s12, 0
    %p139 = por %p137, %p138
    %p140 = scmp.ne.s32.totalorder %s132, %s134
    %p141 = scmp.eq.s32.totalorder %s17, 1
    %p142 = por %p140, %p141
    %p143 = scmp.ne.s32.totalorder %s134, %s135
    %p144 = scmp.eq.s32.totalorder %s17, 0
    %p145 = por %p143, %p144
    %p146 = scmp.ne.s32.totalorder %s134, %s135
    %p147 = scmp.eq.s32.totalorder %s18, 1
    %p148 = por %p146, %p147
    %p150 = scmp.ne.s32.totalorder %s135, %s149
    %p151 = scmp.eq.s32.totalorder %s18, 0
    %p152 = por %p150, %p151
    %s154 = sadd.s32 %s153, 1
    %p157 = scmp.eq.s32.totalorder %s12, 1
    %p158 = scmp.ne.s32.totalorder %s153, %s155
    %p159 = scmp.eq.s32.totalorder %s12, 0
    %p160 = por %p158, %p159
    %p161 = scmp.ne.s32.totalorder %s153, %s155
    %p162 = scmp.eq.s32.totalorder %s17, 1
    %p163 = por %p161, %p162
    %p164 = scmp.ne.s32.totalorder %s155, %s156
    %p165 = scmp.eq.s32.totalorder %s17, 0
    %p166 = por %p164, %p165
    %p167 = scmp.ne.s32.totalorder %s155, %s156
    %p168 = scmp.eq.s32.totalorder %s18, 1
    %p169 = por %p167, %p168
    %p171 = scmp.ne.s32.totalorder %s156, %s170
    %p172 = scmp.eq.s32.totalorder %s18, 0
    %p173 = por %p171, %p172
    %s175 = sadd.s32 %s174, 1
    %p178 = scmp.eq.s32.totalorder %s12, 1
    %p179 = scmp.ne.s32.totalorder %s174, %s176
    %p180 = scmp.eq.s32.totalorder %s12, 0
    %p181 = por %p179, %p180
    %p182 = scmp.ne.s32.totalorder %s174, %s176
    %p183 = scmp.eq.s32.totalorder %s17, 1
    %p184 = por %p182, %p183
    %p185 = scmp.ne.s32.totalorder %s176, %s177
    %p186 = scmp.eq.s32.totalorder %s17, 0
    %p187 = por %p185, %p186
    %p188 = scmp.ne.s32.totalorder %s176, %s177
    %p189 = scmp.eq.s32.totalorder %s18, 1
    %p190 = por %p188, %p189
    %p192 = scmp.ne.s32.totalorder %s177, %s191
    %p193 = scmp.eq.s32.totalorder %s18, 0
    %p194 = por %p192, %p193
    %s195 = ssub.s32 %s19, %s31
    %p196 = scmp.eq.s32.totalorder %s195, 0
    %s198 = sadd.s32 %s197, 1
    %s199 = scalar_select %p196, %s197, %s198
    %p202 = pneg %p196
    %p203 = scmp.eq.s32.totalorder %s12, 1
    %p204 = por %p202, %p203
    %p205 = scmp.ne.s32.totalorder %s197, %s200
    %p206 = scmp.eq.s32.totalorder %s12, 0
    %p207 = por %p205, %p206
    %p208 = scmp.ne.s32.totalorder %s197, %s200
    %p209 = scmp.eq.s32.totalorder %s17, 1
    %p210 = por %p208, %p209
    %p211 = scmp.ne.s32.totalorder %s200, %s201
    %p212 = scmp.eq.s32.totalorder %s17, 0
    %p213 = por %p211, %p212
    %p214 = scmp.ne.s32.totalorder %s200, %s201
    %p215 = scmp.eq.s32.totalorder %s18, 1
    %p216 = por %p214, %p215
    %p218 = scmp.ne.s32.totalorder %s201, %s217
    %p219 = scmp.eq.s32.totalorder %s18, 0
    %p220 = por %p218, %p219
    %p221 = scmp.le.s32.totalorder 1, %s12
    %p222 = scmp.lt.s32.totalorder %s12, 3
    %p223 = pnand %p221, %p222
    %p224 = pneg %p223
    // Predicated region
    $region9: #{sep_residual_block.4} parent=5 // pred_check
      _
    $region10: #{sep_residual_block.4} parent=5 // pred_check_branch
      %226 = sbr.rel (%p223) target = $region12
    $region11: #{sep_residual_block.4} parent=5 // pred_region
      %s227 = ssub.s32 %s12, 1
      // Predicated region
      $region13: #{sep_residual_block.4} parent=11 // pred_check
        %p228 = pneg %p145
      $region14: #{sep_residual_block.4} parent=11 // pred_check_branch
        %230 = sbr.rel (%p228) target = $region16
      $region15: #{sep_residual_block.4} parent=11 // pred_region
        _
      $region16: #{sep_residual_block.4} parent=11 // pred_fallthru
        _
      // Predicated region
      $region17: #{sep_residual_block.4} parent=11 // pred_check
        %p231 = pneg %p166
      $region18: #{sep_residual_block.4} parent=11 // pred_check_branch
        %233 = sbr.rel (%p231) target = $region20
      $region19: #{sep_residual_block.4} parent=11 // pred_region
        _
      $region20: #{sep_residual_block.4} parent=11 // pred_fallthru
        _
      // Predicated region
      $region21: #{sep_residual_block.4} parent=11 // pred_check
        %p234 = pneg %p187
      $region22: #{sep_residual_block.4} parent=11 // pred_check_branch
        %236 = sbr.rel (%p234) target = $region24
      $region23: #{sep_residual_block.4} parent=11 // pred_region
        _
      $region24: #{sep_residual_block.4} parent=11 // pred_fallthru
        _
    $region12: #{sep_residual_block.4} parent=5 // pred_fallthru
      _
    %p237 = scmp.lt.s32.totalorder %s12, 2
    // Predicated region
    $region25: #{sep_residual_block.4} parent=5 // pred_check
      %p238 = pneg %p237
    $region26: #{sep_residual_block.4} parent=5 // pred_check_branch
      %240 = sbr.rel (%p238) target = $region28
    $region27: #{sep_residual_block.4} parent=5 // pred_region
      // Predicated region
      $region29: #{sep_residual_block.4} parent=27 // pred_check
        %p241 = pneg %p46
      $region30: #{sep_residual_block.4} parent=27 // pred_check_branch
        %243 = sbr.rel (%p241) target = $region32
      $region31: #{sep_residual_block.4} parent=27 // pred_region
        %s244 = smul.u32 2, %s20
        %p245 = scmp.lt.s32.totalorder %s19, 1
        %s246 = scalar_select %p245, %s19, 1
        %p247 = scmp.lt.s32.totalorder %s244, 1
        %s248 = scalar_select %p247, %s244, 1
        %s249 = smul.addr %s246, 2
        %s250 = sadd.s32 %s248, %s249
        %s251 = smul.addr %s250, 8
        %s252 = scalar_lea.vmem %s0, %s251
        %s253 = smul.u32 2, %s20
      $region32: #{sep_residual_block.4} parent=27 // pred_fallthru
        _
      // Predicated region
      $region33: #{sep_residual_block.4} parent=27 // pred_check
        %p254 = pneg %p82
      $region34: #{sep_residual_block.4} parent=27 // pred_check_branch
        %256 = sbr.rel (%p254) target = $region36
      $region35: #{sep_residual_block.4} parent=27 // pred_region
        %s257 = smul.u32 %s20, 2
        %s258 = ssub.s32 %s257, 1
        %p259 = scmp.gt.s32.totalorder %s258, 0
        %s260 = scalar_select %p259, %s258, 0
        %p261 = scmp.lt.s32.totalorder %s19, 1
        %s262 = scalar_select %p261, %s19, 1
        %p263 = scmp.lt.s32.totalorder %s260, 1
        %s264 = scalar_select %p263, %s260, 1
        %s265 = smul.addr %s262, 2
        %s266 = sadd.s32 %s264, %s265
        %s267 = smul.addr %s266, 8
        %s268 = scalar_lea.vmem %s1, %s267
        %s269 = smul.u32 %s20, 2
        %s270 = ssub.s32 %s269, 1
        %p271 = scmp.gt.s32.totalorder %s270, 0
        %s272 = scalar_select %p271, %s270, 0
      $region36: #{sep_residual_block.4} parent=27 // pred_fallthru
        _
      // Predicated region
      $region37: #{sep_residual_block.4} parent=27 // pred_check
        %p273 = pneg %p118
      $region38: #{sep_residual_block.4} parent=27 // pred_check_branch
        %275 = sbr.rel (%p273) target = $region40
      $region39: #{sep_residual_block.4} parent=27 // pred_region
        %s276 = sadd.s32 %s20, 1
        %s277 = smul.u32 %s276, 2
        %p278 = scmp.lt.s32.totalorder %s277, 1
        %s279 = scalar_select %p278, %s277, 1
        %p280 = scmp.lt.s32.totalorder %s19, 1
        %s281 = scalar_select %p280, %s19, 1
        %p282 = scmp.lt.s32.totalorder %s279, 1
        %s283 = scalar_select %p282, %s279, 1
        %s284 = smul.addr %s281, 2
        %s285 = sadd.s32 %s283, %s284
        %s286 = smul.addr %s285, 8
        %s287 = scalar_lea.vmem %s2, %s286
        %s288 = sadd.s32 %s20, 1
        %s289 = smul.u32 %s288, 2
        %p290 = scmp.lt.s32.totalorder %s289, 1
        %s291 = scalar_select %p290, %s289, 1
      $region40: #{sep_residual_block.4} parent=27 // pred_fallthru
        _
    $region28: #{sep_residual_block.4} parent=5 // pred_fallthru
      _
    %p292 = scmp.le.s32.totalorder 1, %s12
    %p293 = scmp.lt.s32.totalorder %s12, 3
    %p294 = pnand %p292, %p293
    %p295 = pneg %p294
    // Predicated region
    $region41: #{sep_residual_block.4} parent=5 // pred_check
      _
    $region42: #{sep_residual_block.4} parent=5 // pred_check_branch
      %297 = sbr.rel (%p294) target = $region44
    $region43: #{sep_residual_block.4} parent=5 // pred_region
      %s298 = ssub.s32 %s12, 1
      %s299 = smul.u32 2, %s22
      %p300 = scmp.lt.s32.totalorder %s21, 1
      %s301 = scalar_select %p300, %s21, 1
      %p302 = scmp.lt.s32.totalorder %s299, 1
      %s303 = scalar_select %p302, %s299, 1
      %s304 = smul.addr %s301, 2
      %s305 = sadd.s32 %s303, %s304
      %s306 = smul.addr %s305, 8
      %s307 = scalar_lea.vmem %s0, %s306
      %p308 = pneg %p52
      %p309 = pneg %p49
      %s310 = smul.u32 %s22, 2
      %s311 = ssub.s32 %s310, 1
      %p312 = scmp.gt.s32.totalorder %s311, 0
      %s313 = scalar_select %p312, %s311, 0
      %p314 = scmp.lt.s32.totalorder %s21, 1
      %s315 = scalar_select %p314, %s21, 1
      %p316 = scmp.lt.s32.totalorder %s313, 1
      %s317 = scalar_select %p316, %s313, 1
      %s318 = smul.addr %s315, 2
      %s319 = sadd.s32 %s317, %s318
      %s320 = smul.addr %s319, 8
      %s321 = scalar_lea.vmem %s1, %s320
      %p322 = pneg %p88
      %p323 = pneg %p85
      %s324 = sadd.s32 %s22, 1
      %s325 = smul.u32 %s324, 2
      %p326 = scmp.lt.s32.totalorder %s325, 1
      %s327 = scalar_select %p326, %s325, 1
      %p328 = scmp.lt.s32.totalorder %s21, 1
      %s329 = scalar_select %p328, %s21, 1
      %p330 = scmp.lt.s32.totalorder %s327, 1
      %s331 = scalar_select %p330, %s327, 1
      %s332 = smul.addr %s329, 2
      %s333 = sadd.s32 %s331, %s332
      %s334 = smul.addr %s333, 8
      %s335 = scalar_lea.vmem %s2, %s334
      %p336 = pneg %p124
      %p337 = pneg %p121
      %p338 = pneg %p145
      %p339 = pneg %p142
      %p340 = pneg %p166
      %p341 = pneg %p163
      %p342 = pneg %p187
      %p343 = pneg %p184
      %p344 = pneg %p213
      %p345 = pneg %p210
      %p346 = scmp.lt.s32.totalorder %s21, 1
      %s347 = scalar_select %p346, %s21, 1
      %s348 = smul.addr %s347, 2
      %s349 = scalar_lea.vmem %s6, %s348
      %s350 = smul.u32 2, %s22
      %p351 = scmp.lt.s32.totalorder %s21, 1
      %s352 = scalar_select %p351, %s21, 1
      %p353 = scmp.lt.s32.totalorder %s350, 1
      %s354 = scalar_select %p353, %s350, 1
      %s355 = smul.addr %s352, 2
      %s356 = sadd.s32 %s354, %s355
      %s357 = smul.addr %s356, 8
      %s358 = scalar_lea.vmem %s0, %s357
      %s359 = smul.u32 2, %s22
      %s360 = smul.u32 %s22, 2
      %s361 = ssub.s32 %s360, 1
      %p362 = scmp.gt.s32.totalorder %s361, 0
      %s363 = scalar_select %p362, %s361, 0
      %p364 = scmp.lt.s32.totalorder %s21, 1
      %s365 = scalar_select %p364, %s21, 1
      %p366 = scmp.lt.s32.totalorder %s363, 1
      %s367 = scalar_select %p366, %s363, 1
      %s368 = smul.addr %s365, 2
      %s369 = sadd.s32 %s367, %s368
      %s370 = smul.addr %s369, 8
      %s371 = scalar_lea.vmem %s1, %s370
      %s372 = smul.u32 %s22, 2
      %s373 = ssub.s32 %s372, 1
      %p374 = scmp.gt.s32.totalorder %s373, 0
      %s375 = scalar_select %p374, %s373, 0
      %s376 = sadd.s32 %s22, 1
      %s377 = smul.u32 %s376, 2
      %p378 = scmp.lt.s32.totalorder %s377, 1
      %s379 = scalar_select %p378, %s377, 1
      %p380 = scmp.lt.s32.totalorder %s21, 1
      %s381 = scalar_select %p380, %s21, 1
      %p382 = scmp.lt.s32.totalorder %s379, 1
      %s383 = scalar_select %p382, %s379, 1
      %s384 = smul.addr %s381, 2
      %s385 = sadd.s32 %s383, %s384
      %s386 = smul.addr %s385, 8
      %s387 = scalar_lea.vmem %s2, %s386
      %s388 = sadd.s32 %s22, 1
      %s389 = smul.u32 %s388, 2
      %p390 = scmp.lt.s32.totalorder %s389, 1
      %s391 = scalar_select %p390, %s389, 1
      %p392 = scmp.lt.s32.totalorder %s21, 1
      %s393 = scalar_select %p392, %s21, 1
      %s394 = smul.addr %s393, 2
      %s395 = scalar_lea.vmem %s6, %s394
      %v396 = vld [vmem:[%s358] sm:$0xff]
      %v397 = vld [vmem:[%s358 + $0x8] sm:$0xff]
      %v398 = vld [vmem:[%s371] sm:$0xff]
      %v399 = vld [vmem:[%s387] sm:$0xff]
      %p400 = scmp.gt.s32.totalorder %s22, 0
      %s401 = scalar_select %p400, 1, 0
      %v402 = vstv %s401
      %vm403 = vcmp.eq.s32.totalorder %v402, 1
      %v405 = vrot.slane %v396, 2
      %v407 = vsel %vm403, %v398, %v405
      %p408 = scmp.lt.s32.totalorder %s22, 0
      %s409 = scalar_select %p408, 1, 0
      %v410 = vstv %s409
      %vm411 = vcmp.eq.s32.totalorder %v410, 1
      %v413 = vrot.slane %v397, 6
      %v415 = vsel %vm411, %v399, %v413
      %v417 = vrot.slane %v407, 7
      %vm419 = vcmask 1040384
      %v420 = vrot.slane %v396, 7
      %v421 = vrot.slane %v397, 7
      %v422 = vsel %vm419, %v420, %v421
      %v427 = vrot.slane %v415, 7
      %v429 = vsel %vm419, %v417, %v420
      %v430 = vsel %vm419, %v421, %v427
      %v431 = vmax.f32 %v429, 0.0
      %v432 = vmax.f32 %v422, 0.0
      %v433 = vmax.f32 %v430, 0.0
      %437 = vrot.lane.b32.xlu0 %v431, 124
      %v438 = vpop.permute.xlu0 %437
      %439 = vrot.lane.b32.xlu0 %v432, 124
      %v440 = vpop.permute.xlu0 %439
      %441 = vrot.lane.b32.xlu0 %v433, 124
      %v442 = vpop.permute.xlu0 %441
      %446 = vrot.lane.b32.xlu0 %v431, 4
      %v447 = vpop.permute.xlu0 %446
      %448 = vrot.lane.b32.xlu0 %v432, 4
      %v449 = vpop.permute.xlu0 %448
      %450 = vrot.lane.b32.xlu0 %v433, 4
      %v451 = vpop.permute.xlu0 %450
      %vm455 = vcmask 31744
      %v456 = vsel %vm455, %v438, %v447
      %v457 = vsel %vm455, %v440, %v449
      %v458 = vsel %vm455, %v442, %v451
      %vm459 = vcmask 490496
      %v460 = vsel %vm459, %v438, %v447
      %v461 = vsel %vm459, %v440, %v449
      %v462 = vsel %vm459, %v442, %v451
      %v463 = vld [vmem:[%s3] sm:$0x7]
      %v464 = vld [vmem:[%s3 + $0x4] sm:$0x7]
      %v465 = vld [vmem:[%s3 + $0x8] sm:$0x7]
      %v466 = vperm.slane %v463, 0
      %v467 = vmul.f32 %v456, %v466
      %v468 = vmul.f32 %v457, %v466
      %v469 = vadd.f32 %v467, 0.0
      %v470 = vadd.f32 %v468, 0.0
      %v471 = vperm.slane %v463, 1
      %v472 = vmul.f32 %v431, %v471
      %v473 = vmul.f32 %v432, %v471
      %v474 = vadd.f32 %v469, %v472
      %v475 = vadd.f32 %v470, %v473
      %v476 = vperm.slane %v463, 2
      %v477 = vmul.f32 %v460, %v476
      %v478 = vmul.f32 %v461, %v476
      %v479 = vadd.f32 %v474, %v477
      %v480 = vadd.f32 %v475, %v478
      %v481 = vperm.slane %v464, 0
      %v482 = vmul.f32 %v456, %v481
      %v483 = vmul.f32 %v457, %v481
      %v484 = vmul.f32 %v458, %v481
      %vm488 = vcmask 1046528
      %v489 = vrot.slane %v482, 1
      %v490 = vrot.slane %v483, 1
      %v491 = vsel %vm488, %v489, %v490
      %v492 = vrot.slane %v484, 1
      %v493 = vsel %vm488, %v490, %v492
      %v496 = vadd.f32 %v479, %v491
      %v497 = vadd.f32 %v480, %v493
      %v498 = vperm.slane %v464, 1
      %v499 = vmul.f32 %v431, %v498
      %v500 = vmul.f32 %v432, %v498
      %v501 = vmul.f32 %v433, %v498
      %v505 = vrot.slane %v499, 1
      %v506 = vrot.slane %v500, 1
      %v507 = vsel %vm488, %v505, %v506
      %v508 = vrot.slane %v501, 1
      %v509 = vsel %vm488, %v506, %v508
      %v512 = vadd.f32 %v496, %v507
      %v513 = vadd.f32 %v497, %v509
      %v514 = vperm.slane %v464, 2
      %v515 = vmul.f32 %v460, %v514
      %v516 = vmul.f32 %v461, %v514
      %v517 = vmul.f32 %v462, %v514
      %v521 = vrot.slane %v515, 1
      %v522 = vrot.slane %v516, 1
      %v523 = vsel %vm488, %v521, %v522
      %v524 = vrot.slane %v517, 1
      %v525 = vsel %vm488, %v522, %v524
      %v528 = vadd.f32 %v512, %v523
      %v529 = vadd.f32 %v513, %v525
      %v530 = vperm.slane %v465, 0
      %v531 = vmul.f32 %v456, %v530
      %v532 = vmul.f32 %v457, %v530
      %v533 = vmul.f32 %v458, %v530
      %vm537 = vcmask 1045504
      %v538 = vrot.slane %v531, 2
      %v539 = vrot.slane %v532, 2
      %v540 = vsel %vm537, %v538, %v539
      %v541 = vrot.slane %v533, 2
      %v542 = vsel %vm537, %v539, %v541
      %v545 = vadd.f32 %v528, %v540
      %v546 = vadd.f32 %v529, %v542
      %v547 = vperm.slane %v465, 1
      %v548 = vmul.f32 %v431, %v547
      %v549 = vmul.f32 %v432, %v547
      %v550 = vmul.f32 %v433, %v547
      %v554 = vrot.slane %v548, 2
      %v555 = vrot.slane %v549, 2
      %v556 = vsel %vm537, %v554, %v555
      %v557 = vrot.slane %v550, 2
      %v558 = vsel %vm537, %v555, %v557
      %v561 = vadd.f32 %v545, %v556
      %v562 = vadd.f32 %v546, %v558
      %v563 = vperm.slane %v465, 2
      %v564 = vmul.f32 %v460, %v563
      %v565 = vmul.f32 %v461, %v563
      %v566 = vmul.f32 %v462, %v563
      %v570 = vrot.slane %v564, 2
      %v571 = vrot.slane %v565, 2
      %v572 = vsel %vm537, %v570, %v571
      %v573 = vrot.slane %v566, 2
      %v574 = vsel %vm537, %v571, %v573
      %v577 = vadd.f32 %v561, %v572
      %v578 = vadd.f32 %v562, %v574
      %v579 = vld [vmem:[%s4] sm:$0x3]
      %v580 = vperm.slane %v579, 0
      %v581 = vmul.f32 %v577, %v580
      %v582 = vmul.f32 %v578, %v580
      %v583 = vperm.slane %v579, 1
      %v584 = vadd.f32 %v581, %v583
      %v585 = vadd.f32 %v582, %v583
      %v586 = vmax.f32 %v584, 0.0
      %v587 = vmax.f32 %v585, 0.0
      %v588 = vld [vmem:[%s5] sm:$0x7f]
      %591 = vrot.lane.b32.xlu0 %v586, 67
      %v592 = vpop.permute.xlu0 %591
      %593 = vrot.lane.b32.xlu0 %v587, 67
      %v594 = vpop.permute.xlu0 %593
      %597 = vrot.lane.b32.xlu0 %v586, 3
      %v598 = vpop.permute.xlu0 %597
      %599 = vrot.lane.b32.xlu0 %v587, 3
      %v600 = vpop.permute.xlu0 %599
      %vm603 = vcmask 23552
      %v604 = vsel %vm603, %v592, %v598
      %v605 = vsel %vm603, %v594, %v600
      %v606 = vperm.slane %v588, 0
      %v607 = vmul.f32 %v604, %v606
      %v608 = vmul.f32 %v605, %v606
      %v609 = vadd.f32 %v607, 0.0
      %v610 = vadd.f32 %v608, 0.0
      %611 = vrot.lane.b32.xlu0 %v586, 66
      %v612 = vpop.permute.xlu0 %611
      %613 = vrot.lane.b32.xlu0 %v587, 66
      %v614 = vpop.permute.xlu0 %613
      %617 = vrot.lane.b32.xlu0 %v586, 2
      %v618 = vpop.permute.xlu0 %617
      %619 = vrot.lane.b32.xlu0 %v587, 2
      %v620 = vpop.permute.xlu0 %619
      %vm623 = vcmask 15360
      %v624 = vsel %vm623, %v612, %v618
      %v625 = vsel %vm623, %v614, %v620
      %v626 = vperm.slane %v588, 1
      %v627 = vmul.f32 %v624, %v626
      %v628 = vmul.f32 %v625, %v626
      %v629 = vadd.f32 %v609, %v627
      %v630 = vadd.f32 %v610, %v628
      %631 = vrot.lane.b32.xlu0 %v586, 65
      %v632 = vpop.permute.xlu0 %631
      %633 = vrot.lane.b32.xlu0 %v587, 65
      %v634 = vpop.permute.xlu0 %633
      %637 = vrot.lane.b32.xlu0 %v586, 1
      %v638 = vpop.permute.xlu0 %637
      %639 = vrot.lane.b32.xlu0 %v587, 1
      %v640 = vpop.permute.xlu0 %639
      %vm643 = vcmask 7168
      %v644 = vsel %vm643, %v632, %v638
      %v645 = vsel %vm643, %v634, %v640
      %v646 = vperm.slane %v588, 2
      %v647 = vmul.f32 %v644, %v646
      %v648 = vmul.f32 %v645, %v646
      %v649 = vadd.f32 %v629, %v647
      %v650 = vadd.f32 %v630, %v648
      %v651 = vperm.slane %v588, 3
      %v652 = vmul.f32 %v586, %v651
      %v653 = vmul.f32 %v587, %v651
      %v654 = vadd.f32 %v649, %v652
      %v655 = vadd.f32 %v650, %v653
      %656 = vrot.lane.b32.xlu0 %v586, 127
      %v657 = vpop.permute.xlu0 %656
      %658 = vrot.lane.b32.xlu0 %v587, 127
      %v659 = vpop.permute.xlu0 %658
      %662 = vrot.lane.b32.xlu0 %v586, 63
      %v663 = vpop.permute.xlu0 %662
      %664 = vrot.lane.b32.xlu0 %v587, 63
      %v665 = vpop.permute.xlu0 %664
      %vm668 = vcmask 515072
      %v669 = vsel %vm668, %v657, %v663
      %v670 = vsel %vm668, %v659, %v665
      %v671 = vperm.slane %v588, 4
      %v672 = vmul.f32 %v669, %v671
      %v673 = vmul.f32 %v670, %v671
      %v674 = vadd.f32 %v654, %v672
      %v675 = vadd.f32 %v655, %v673
      %676 = vrot.lane.b32.xlu0 %v586, 126
      %v677 = vpop.permute.xlu0 %676
      %678 = vrot.lane.b32.xlu0 %v587, 126
      %v679 = vpop.permute.xlu0 %678
      %682 = vrot.lane.b32.xlu0 %v586, 62
      %v683 = vpop.permute.xlu0 %682
      %684 = vrot.lane.b32.xlu0 %v587, 62
      %v685 = vpop.permute.xlu0 %684
      %vm688 = vcmask 506880
      %v689 = vsel %vm688, %v677, %v683
      %v690 = vsel %vm688, %v679, %v685
      %v691 = vperm.slane %v588, 5
      %v692 = vmul.f32 %v689, %v691
      %v693 = vmul.f32 %v690, %v691
      %v694 = vadd.f32 %v674, %v692
      %v695 = vadd.f32 %v675, %v693
      %696 = vrot.lane.b32.xlu0 %v586, 125
      %v697 = vpop.permute.xlu0 %696
      %698 = vrot.lane.b32.xlu0 %v587, 125
      %v699 = vpop.permute.xlu0 %698
      %702 = vrot.lane.b32.xlu0 %v586, 61
      %v703 = vpop.permute.xlu0 %702
      %704 = vrot.lane.b32.xlu0 %v587, 61
      %v705 = vpop.permute.xlu0 %704
      %vm708 = vcmask 498688
      %v709 = vsel %vm708, %v697, %v703
      %v710 = vsel %vm708, %v699, %v705
      %v711 = vperm.slane %v588, 6
      %v712 = vmul.f32 %v709, %v711
      %v713 = vmul.f32 %v710, %v711
      %v714 = vadd.f32 %v694, %v712
      %v715 = vadd.f32 %v695, %v713
      %vm716 = vcmask 523264
      %v717 = vsel %vm716, %v714, 0.0
      %v718 = vsel %vm716, %v715, 0.0
      %v719 = vadd.f32 %v717, %v718
      %v720 = vrot.slane %v719, 4
      %v721 = vadd.f32 %v719, %v720
      %v722 = vrot.slane %v721, 2
      %v723 = vadd.f32 %v721, %v722
      %v724 = vrot.slane %v723, 1
      %v725 = vadd.f32 %v723, %v724
      %v726 = vmul.f32 %v714, %v714
      %v727 = vmul.f32 %v715, %v715
      %v728 = vsel %vm716, %v726, 0.0
      %v729 = vsel %vm716, %v727, 0.0
      %v730 = vadd.f32 %v728, %v729
      %v731 = vrot.slane %v730, 4
      %v732 = vadd.f32 %v730, %v731
      %v733 = vrot.slane %v732, 2
      %v734 = vadd.f32 %v732, %v733
      %v735 = vrot.slane %v734, 1
      %v736 = vadd.f32 %v734, %v735
      %v737 = vsel %vm419, %v725, %v736
      %p738 = scmp.eq.s32.totalorder %s22, 0
      // Predicated region
      $region45: #{sep_residual_block.4} parent=43 // pred_check
        %p739 = pneg %p738
      $region46: #{sep_residual_block.4} parent=43 // pred_check_branch
        %741 = sbr.rel (%p739) target = $region48
      $region47: #{sep_residual_block.4} parent=43 // pred_region
        %vm742 = vcmask 517120
        %743 = vst.msk [vmem:[%s395] sm:$0x3] %vm742, 0.0
      $region48: #{sep_residual_block.4} parent=43 // pred_fallthru
        _
      %v744 = vld [vmem:[%s395] sm:$0x3]
      %v745 = vadd.f32 %v744, %v737
      %vm746 = vcmask 517120
      %747 = vst.msk [vmem:[%s395] sm:$0x3] %vm746, %v745
      %p748 = scmp.lt.s32.totalorder %s21, 1
      %s749 = scalar_select %p748, %s21, 1
      %s750 = smul.addr %s749, 2
      %s751 = scalar_lea.vmem %s6, %s750
      // Predicated region
      $region49: #{sep_residual_block.4} parent=43 // pred_check
        %p752 = pneg %p210
      $region50: #{sep_residual_block.4} parent=43 // pred_check_branch
        %754 = sbr.rel (%p752) target = $region52
      $region51: #{sep_residual_block.4} parent=43 // pred_region
        _
      $region52: #{sep_residual_block.4} parent=43 // pred_fallthru
        _
    $region44: #{sep_residual_block.4} parent=5 // pred_fallthru
      _
    %p755 = scmp.le.s32.totalorder 2, %s12
    // Predicated region
    $region53: #{sep_residual_block.4} parent=5 // pred_check
      %p756 = pneg %p755
    $region54: #{sep_residual_block.4} parent=5 // pred_check_branch
      %758 = sbr.rel (%p756) target = $region56
    $region55: #{sep_residual_block.4} parent=5 // pred_region
      %s759 = ssub.s32 %s12, 2
      // Predicated region
      $region57: #{sep_residual_block.4} parent=55 // pred_check
        %p760 = pneg %p216
      $region58: #{sep_residual_block.4} parent=55 // pred_check_branch
        %762 = sbr.rel (%p760) target = $region60
      $region59: #{sep_residual_block.4} parent=55 // pred_region
        %p763 = scmp.lt.s32.totalorder %s23, 1
        %s764 = scalar_select %p763, %s23, 1
        %s765 = smul.addr %s764, 2
        %s766 = scalar_lea.vmem %s6, %s765
      $region60: #{sep_residual_block.4} parent=55 // pred_fallthru
        _
    $region56: #{sep_residual_block.4} parent=5 // pred_fallthru
      _
  $region6: #{sep_residual_block.4} parent=0 // loop_footer
    %s16 = sadd.s32 1, %s12
  $region7: #{sep_residual_block.4} parent=0 // loop_footer_branch
    %11 = sbr.rel target = $region3
  $region8: #{sep_residual_block.4} parent=0 // loop_exit
    _

// kernel: sep_residual_block.5
$region0: #{sep_residual_block.5}
  #allocation0 [shape = 'u32[]', space=smem, size = 0x4, offset = 0x4, fixed_abs, tag = 'smem constant byte address 0x4 - core index']
  #allocation1 [shape = 'u32[72,128]{1,0:T(1,128)}', space=vmem, size = 0x9000, scoped, tag = 'internal scratch']
  %s0 = inlined_call_operand.vmem [shape: f32[2,16,64], index: 0, kind: input, shape index: {}, may-alias: {0,1,2}]
  %s1 = inlined_call_operand.vmem [shape: f32[2,16,64], index: 1, kind: input, shape index: {}, may-alias: {0,1,2}]
  %s2 = inlined_call_operand.vmem [shape: f32[2,16,64], index: 2, kind: input, shape index: {}, may-alias: {0,1,2}]
  %s3 = inlined_call_operand.vmem [shape: f32[3,3,64], index: 3, kind: input, shape index: {}]
  %s4 = inlined_call_operand.vmem [shape: f32[2,64], index: 4, kind: input, shape index: {}]
  %s5 = inlined_call_operand.vmem [shape: f32[7,64], index: 5, kind: input, shape index: {}]
  %s6 = inlined_call_operand.vmem [shape: f32[2,64], index: 6, kind: input, shape index: {}]
  %s7 = inlined_call_operand.vmem [shape: f32[2,16,64], index: 7, kind: output, shape index: {}]
  %s8 = sld [smem:[#allocation0]]
  $region61: #{sep_residual_block.5} parent=0
    _
  %s10 = ssub.s32 1, %s8
  %s11 = scalar_select 0, %s10, %s8
  loop: start=0, step=1, limit=4
  $region2: #{sep_residual_block.5} parent=0 // loop_pre_header
    _
  $region3: #{sep_residual_block.5} parent=0 // loop_header
    %s13 = sphi 0, %s17
    %p14 = scmp.ge.s32.totalorder %s13, 4
    %s20 = sphi 0, %s32
    %s21 = sphi 0, %s28
    %s22 = sphi 0, %s20
    %s23 = sphi 0, %s21
    %s24 = sphi 0, %s22
    %s25 = sphi 0, %s23
    %s37 = sphi 0, %s39
    %s40 = sphi 0, %s37
    %s41 = sphi 0, %s40
    %s57 = sphi 0, %s41
    %s73 = sphi 0, %s75
    %s76 = sphi 0, %s73
    %s77 = sphi 0, %s76
    %s93 = sphi 0, %s77
    %s109 = sphi 0, %s111
    %s112 = sphi 0, %s109
    %s113 = sphi 0, %s112
    %s129 = sphi 0, %s113
    %s133 = sphi 0, %s133
    %s135 = sphi 0, %s133
    %s136 = sphi 0, %s135
    %s150 = sphi 0, %s136
    %s154 = sphi 0, %s154
    %s156 = sphi 0, %s154
    %s157 = sphi 0, %s156
    %s171 = sphi 0, %s157
    %s175 = sphi 0, %s175
    %s177 = sphi 0, %s175
    %s178 = sphi 0, %s177
    %s192 = sphi 0, %s178
    %s196 = sphi 0, %s196
    %s198 = sphi 0, %s196
    %s199 = sphi 0, %s198
    %s213 = sphi 0, %s199
    %s221 = sphi 0, %s223
    %s224 = sphi 0, %s221
    %s225 = sphi 0, %s224
    %s241 = sphi 0, %s225
  $region4: #{sep_residual_block.5} parent=0 // loop_header_branch
    %16 = sbr.rel (%p14) target = $region8
  $region5: #{sep_residual_block.5} parent=0 // loop_body
    %s18 = ssub.s32 %s13, 1
    %s19 = ssub.s32 %s13, 2
    %s26 = sadd.s32 1, %s21
    %p27 = scmp.ge.s32.totalorder %s26, 1
    %s28 = scalar_select %p27, 0, %s26
    %s29 = sadd.s32 1, %s20
    %s30 = scalar_select %p27, %s29, %s20
    %p31 = scmp.ge.s32.totalorder %s30, 2
    %s32 = scalar_select %p31, 0, %s30
    %s33 = ssub.s32 %s20, %s32
    %s34 = ssub.s32 %s21, %s28
    %s35 = sor.u32 %s33, %s34
    %p36 = scmp.eq.s32.totalorder %s35, 0
    %s38 = sadd.s32 %s37, 1
    %s39 = scalar_select %p36, %s37, %s38
    %p42 = pneg %p36
    %p43 = scmp.eq.s32.totalorder %s13, 1
    %p44 = por %p42, %p43
    %p45 = scmp.ne.s32.totalorder %s37, %s40
    %p46 = scmp.eq.s32.totalorder %s13, 0
    %p47 = por %p45, %p46
    %p48 = scmp.ne.s32.totalorder %s37, %s40
    %p49 = scmp.eq.s32.totalorder %s18, 1
    %p50 = por %p48, %p49
    %p51 = scmp.ne.s32.totalorder %s40, %s41
    %p52 = scmp.eq.s32.totalorder %s18, 0
    %p53 = por %p51, %p52
    %p54 = scmp.ne.s32.totalorder %s40, %s41
    %p55 = scmp.eq.s32.totalorder %s19, 1
    %p56 = por %p54, %p55
    %p58 = scmp.ne.s32.totalorder %s41, %s57
    %p59 = scmp.eq.s32.totalorder %s19, 0
    %p60 = por %p58, %p59
    %s61 = smul.u32 %s21, 2
    %s62 = ssub.s32 %s61, 1
    %p63 = scmp.gt.s32.totalorder %s62, 0
    %s64 = scalar_select %p63, %s62, 0
    %s65 = smul.u32 %s28, 2
    %s66 = ssub.s32 %s65, 1
    %p67 = scmp.gt.s32.totalorder %s66, 0
    %s68 = scalar_select %p67, %s66, 0
    %s69 = ssub.s32 %s20, %s32
    %s70 = ssub.s32 %s64, %s68
    %s71 = sor.u32 %s69, %s70
    %p72 = scmp.eq.s32.totalorder %s71, 0
    %s74 = sadd.s32 %s73, 1
    %s75 = scalar_select %p72, %s73, %s74
    %p78 = pneg %p72
    %p79 = scmp.eq.s32.totalorder %s13, 1
    %p80 = por %p78, %p79
    %p81 = scmp.ne.s32.totalorder %s73, %s76
    %p82 = scmp.eq.s32.totalorder %s13, 0
    %p83 = por %p81, %p82
    %p84 = scmp.ne.s32.totalorder %s73, %s76
    %p85 = scmp.eq.s32.totalorder %s18, 1
    %p86 = por %p84, %p85
    %p87 = scmp.ne.s32.totalorder %s76, %s77
    %p88 = scmp.eq.s32.totalorder %s18, 0
    %p89 = por %p87, %p88
    %p90 = scmp.ne.s32.totalorder %s76, %s77
    %p91 = scmp.eq.s32.totalorder %s19, 1
    %p92 = por %p90, %p91
    %p94 = scmp.ne.s32.totalorder %s77, %s93
    %p95 = scmp.eq.s32.totalorder %s19, 0
    %p96 = por %p94, %p95
    %s97 = sadd.s32 %s21, 1
    %s98 = smul.u32 %s97, 2
    %p99 = scmp.lt.s32.totalorder %s98, 1
    %s100 = scalar_select %p99, %s98, 1
    %s101 = sadd.s32 %s28, 1
    %s102 = smul.u32 %s101, 2
    %p103 = scmp.lt.s32.totalorder %s102, 1
    %s104 = scalar_select %p103, %s102, 1
    %s105 = ssub.s32 %s20, %s32
    %s106 = ssub.s32 %s100, %s104
    %s107 = sor.u32 %s105, %s106
    %p108 = scmp.eq.s32.totalorder %s107, 0
    %s110 = sadd.s32 %s109, 1
    %s111 = scalar_select %p108, %s109, %s110
    %p114 = pneg %p108
    %p115 = scmp.eq.s32.totalorder %s13, 1
    %p116 = por %p114, %p115
    %p117 = scmp.ne.s32.totalorder %s109, %s112
    %p118 = scmp.eq.s32.totalorder %s13, 0
    %p119 = por %p117, %p118
    %p120 = scmp.ne.s32.totalorder %s109, %s112
    %p121 = scmp.eq.s32.totalorder %s18, 1
    %p122 = por %p120, %p121
    %p123 = scmp.ne.s32.totalorder %s112, %s113
    %p124 = scmp.eq.s32.totalorder %s18, 0
    %p125 = por %p123, %p124
    %p126 = scmp.ne.s32.totalorder %s112, %s113
    %p127 = scmp.eq.s32.totalorder %s19, 1
    %p128 = por %p126, %p127
    %p130 = scmp.ne.s32.totalorder %s113, %s129
    %p131 = scmp.eq.s32.totalorder %s19, 0
    %p132 = por %p130, %p131
    %s134 = sadd.s32 %s133, 1
    %p137 = scmp.eq.s32.totalorder %s13, 1
    %p138 = scmp.ne.s32.totalorder %s133, %s135
    %p139 = scmp.eq.s32.totalorder %s13, 0
    %p140 = por %p138, %p139
    %p141 = scmp.ne.s32.totalorder %s133, %s135
    %p142 = scmp.eq.s32.totalorder %s18, 1
    %p143 = por %p141, %p142
    %p144 = scmp.ne.s32.totalorder %s135, %s136
    %p145 = scmp.eq.s32.totalorder %s18, 0
    %p146 = por %p144, %p145
    %p147 = scmp.ne.s32.totalorder %s135, %s136
    %p148 = scmp.eq.s32.totalorder %s19, 1
    %p149 = por %p147, %p148
    %p151 = scmp.ne.s32.totalorder %s136, %s150
    %p152 = scmp.eq.s32.totalorder %s19, 0
    %p153 = por %p151, %p152
    %s155 = sadd.s32 %s154, 1
    %p158 = scmp.eq.s32.totalorder %s13, 1
    %p159 = scmp.ne.s32.totalorder %s154, %s156
    %p160 = scmp.eq.s32.totalorder %s13, 0
    %p161 = por %p159, %p160
    %p162 = scmp.ne.s32.totalorder %s154, %s156
    %p163 = scmp.eq.s32.totalorder %s18, 1
    %p164 = por %p162, %p163
    %p165 = scmp.ne.s32.totalorder %s156, %s157
    %p166 = scmp.eq.s32.totalorder %s18, 0
    %p167 = por %p165, %p166
    %p168 = scmp.ne.s32.totalorder %s156, %s157
    %p169 = scmp.eq.s32.totalorder %s19, 1
    %p170 = por %p168, %p169
    %p172 = scmp.ne.s32.totalorder %s157, %s171
    %p173 = scmp.eq.s32.totalorder %s19, 0
    %p174 = por %p172, %p173
    %s176 = sadd.s32 %s175, 1
    %p179 = scmp.eq.s32.totalorder %s13, 1
    %p180 = scmp.ne.s32.totalorder %s175, %s177
    %p181 = scmp.eq.s32.totalorder %s13, 0
    %p182 = por %p180, %p181
    %p183 = scmp.ne.s32.totalorder %s175, %s177
    %p184 = scmp.eq.s32.totalorder %s18, 1
    %p185 = por %p183, %p184
    %p186 = scmp.ne.s32.totalorder %s177, %s178
    %p187 = scmp.eq.s32.totalorder %s18, 0
    %p188 = por %p186, %p187
    %p189 = scmp.ne.s32.totalorder %s177, %s178
    %p190 = scmp.eq.s32.totalorder %s19, 1
    %p191 = por %p189, %p190
    %p193 = scmp.ne.s32.totalorder %s178, %s192
    %p194 = scmp.eq.s32.totalorder %s19, 0
    %p195 = por %p193, %p194
    %s197 = sadd.s32 %s196, 1
    %p200 = scmp.eq.s32.totalorder %s13, 1
    %p201 = scmp.ne.s32.totalorder %s196, %s198
    %p202 = scmp.eq.s32.totalorder %s13, 0
    %p203 = por %p201, %p202
    %p204 = scmp.ne.s32.totalorder %s196, %s198
    %p205 = scmp.eq.s32.totalorder %s18, 1
    %p206 = por %p204, %p205
    %p207 = scmp.ne.s32.totalorder %s198, %s199
    %p208 = scmp.eq.s32.totalorder %s18, 0
    %p209 = por %p207, %p208
    %p210 = scmp.ne.s32.totalorder %s198, %s199
    %p211 = scmp.eq.s32.totalorder %s19, 1
    %p212 = por %p210, %p211
    %p214 = scmp.ne.s32.totalorder %s199, %s213
    %p215 = scmp.eq.s32.totalorder %s19, 0
    %p216 = por %p214, %p215
    %s217 = ssub.s32 %s20, %s32
    %s218 = ssub.s32 %s21, %s28
    %s219 = sor.u32 %s217, %s218
    %p220 = scmp.eq.s32.totalorder %s219, 0
    %s222 = sadd.s32 %s221, 1
    %s223 = scalar_select %p220, %s221, %s222
    %p226 = pneg %p220
    %p227 = scmp.eq.s32.totalorder %s13, 1
    %p228 = por %p226, %p227
    %p229 = scmp.ne.s32.totalorder %s221, %s224
    %p230 = scmp.eq.s32.totalorder %s13, 0
    %p231 = por %p229, %p230
    %p232 = scmp.ne.s32.totalorder %s221, %s224
    %p233 = scmp.eq.s32.totalorder %s18, 1
    %p234 = por %p232, %p233
    %p235 = scmp.ne.s32.totalorder %s224, %s225
    %p236 = scmp.eq.s32.totalorder %s18, 0
    %p237 = por %p235, %p236
    %p238 = scmp.ne.s32.totalorder %s224, %s225
    %p239 = scmp.eq.s32.totalorder %s19, 1
    %p240 = por %p238, %p239
    %p242 = scmp.ne.s32.totalorder %s225, %s241
    %p243 = scmp.eq.s32.totalorder %s19, 0
    %p244 = por %p242, %p243
    %p245 = scmp.le.s32.totalorder 1, %s13
    %p246 = scmp.lt.s32.totalorder %s13, 3
    %p247 = pnand %p245, %p246
    %p248 = pneg %p247
    // Predicated region
    $region9: #{sep_residual_block.5} parent=5 // pred_check
      _
    $region10: #{sep_residual_block.5} parent=5 // pred_check_branch
      %250 = sbr.rel (%p247) target = $region12
    $region11: #{sep_residual_block.5} parent=5 // pred_region
      %s251 = ssub.s32 %s13, 1
      // Predicated region
      $region13: #{sep_residual_block.5} parent=11 // pred_check
        %p252 = pneg %p146
      $region14: #{sep_residual_block.5} parent=11 // pred_check_branch
        %254 = sbr.rel (%p252) target = $region16
      $region15: #{sep_residual_block.5} parent=11 // pred_region
        _
      $region16: #{sep_residual_block.5} parent=11 // pred_fallthru
        _
      // Predicated region
      $region17: #{sep_residual_block.5} parent=11 // pred_check
        %p255 = pneg %p167
      $region18: #{sep_residual_block.5} parent=11 // pred_check_branch
        %257 = sbr.rel (%p255) target = $region20
      $region19: #{sep_residual_block.5} parent=11 // pred_region
        _
      $region20: #{sep_residual_block.5} parent=11 // pred_fallthru
        _
      // Predicated region
      $region21: #{sep_residual_block.5} parent=11 // pred_check
        %p258 = pneg %p188
      $region22: #{sep_residual_block.5} parent=11 // pred_check_branch
        %260 = sbr.rel (%p258) target = $region24
      $region23: #{sep_residual_block.5} parent=11 // pred_region
        _
      $region24: #{sep_residual_block.5} parent=11 // pred_fallthru
        _
      // Predicated region
      $region25: #{sep_residual_block.5} parent=11 // pred_check
        %p261 = pneg %p209
      $region26: #{sep_residual_block.5} parent=11 // pred_check_branch
        %263 = sbr.rel (%p261) target = $region28
      $region27: #{sep_residual_block.5} parent=11 // pred_region
        _
      $region28: #{sep_residual_block.5} parent=11 // pred_fallthru
        _
    $region12: #{sep_residual_block.5} parent=5 // pred_fallthru
      _
    %p264 = scmp.lt.s32.totalorder %s13, 2
    // Predicated region
    $region29: #{sep_residual_block.5} parent=5 // pred_check
      %p265 = pneg %p264
    $region30: #{sep_residual_block.5} parent=5 // pred_check_branch
      %267 = sbr.rel (%p265) target = $region32
    $region31: #{sep_residual_block.5} parent=5 // pred_region
      // Predicated region
      $region33: #{sep_residual_block.5} parent=31 // pred_check
        %p268 = pneg %p47
      $region34: #{sep_residual_block.5} parent=31 // pred_check_branch
        %270 = sbr.rel (%p268) target = $region36
      $region35: #{sep_residual_block.5} parent=31 // pred_region
        %s271 = smul.u32 2, %s21
        %p272 = scmp.lt.s32.totalorder %s20, 1
        %s273 = scalar_select %p272, %s20, 1
        %p274 = scmp.lt.s32.totalorder %s271, 1
        %s275 = scalar_select %p274, %s271, 1
        %s276 = smul.addr %s273, 2
        %s277 = sadd.s32 %s275, %s276
        %s278 = smul.addr %s277, 8
        %s279 = scalar_lea.vmem %s0, %s278
        %s280 = smul.u32 2, %s21
      $region36: #{sep_residual_block.5} parent=31 // pred_fallthru
        _
      // Predicated region
      $region37: #{sep_residual_block.5} parent=31 // pred_check
        %p281 = pneg %p83
      $region38: #{sep_residual_block.5} parent=31 // pred_check_branch
        %283 = sbr.rel (%p281) target = $region40
      $region39: #{sep_residual_block.5} parent=31 // pred_region
        %s284 = smul.u32 %s21, 2
        %s285 = ssub.s32 %s284, 1
        %p286 = scmp.gt.s32.totalorder %s285, 0
        %s287 = scalar_select %p286, %s285, 0
        %p288 = scmp.lt.s32.totalorder %s20, 1
        %s289 = scalar_select %p288, %s20, 1
        %p290 = scmp.lt.s32.totalorder %s287, 1
        %s291 = scalar_select %p290, %s287, 1
        %s292 = smul.addr %s289, 2
        %s293 = sadd.s32 %s291, %s292
        %s294 = smul.addr %s293, 8
        %s295 = scalar_lea.vmem %s1, %s294
        %s296 = smul.u32 %s21, 2
        %s297 = ssub.s32 %s296, 1
        %p298 = scmp.gt.s32.totalorder %s297, 0
        %s299 = scalar_select %p298, %s297, 0
      $region40: #{sep_residual_block.5} parent=31 // pred_fallthru
        _
      // Predicated region
      $region41: #{sep_residual_block.5} parent=31 // pred_check
        %p300 = pneg %p119
      $region42: #{sep_residual_block.5} parent=31 // pred_check_branch
        %302 = sbr.rel (%p300) target = $region44
      $region43: #{sep_residual_block.5} parent=31 // pred_region
        %s303 = sadd.s32 %s21, 1
        %s304 = smul.u32 %s303, 2
        %p305 = scmp.lt.s32.totalorder %s304, 1
        %s306 = scalar_select %p305, %s304, 1
        %p307 = scmp.lt.s32.totalorder %s20, 1
        %s308 = scalar_select %p307, %s20, 1
        %p309 = scmp.lt.s32.totalorder %s306, 1
        %s310 = scalar_select %p309, %s306, 1
        %s311 = smul.addr %s308, 2
        %s312 = sadd.s32 %s310, %s311
        %s313 = smul.addr %s312, 8
        %s314 = scalar_lea.vmem %s2, %s313
        %s315 = sadd.s32 %s21, 1
        %s316 = smul.u32 %s315, 2
        %p317 = scmp.lt.s32.totalorder %s316, 1
        %s318 = scalar_select %p317, %s316, 1
      $region44: #{sep_residual_block.5} parent=31 // pred_fallthru
        _
    $region32: #{sep_residual_block.5} parent=5 // pred_fallthru
      _
    %p319 = scmp.le.s32.totalorder 1, %s13
    %p320 = scmp.lt.s32.totalorder %s13, 3
    %p321 = pnand %p319, %p320
    %p322 = pneg %p321
    // Predicated region
    $region45: #{sep_residual_block.5} parent=5 // pred_check
      _
    $region46: #{sep_residual_block.5} parent=5 // pred_check_branch
      %324 = sbr.rel (%p321) target = $region48
    $region47: #{sep_residual_block.5} parent=5 // pred_region
      %s325 = ssub.s32 %s13, 1
      %s326 = smul.u32 2, %s23
      %p327 = scmp.lt.s32.totalorder %s22, 1
      %s328 = scalar_select %p327, %s22, 1
      %p329 = scmp.lt.s32.totalorder %s326, 1
      %s330 = scalar_select %p329, %s326, 1
      %s331 = smul.addr %s328, 2
      %s332 = sadd.s32 %s330, %s331
      %s333 = smul.addr %s332, 8
      %s334 = scalar_lea.vmem %s0, %s333
      %p335 = pneg %p53
      %p336 = pneg %p50
      %s337 = smul.u32 %s23, 2
      %s338 = ssub.s32 %s337, 1
      %p339 = scmp.gt.s32.totalorder %s338, 0
      %s340 = scalar_select %p339, %s338, 0
      %p341 = scmp.lt.s32.totalorder %s22, 1
      %s342 = scalar_select %p341, %s22, 1
      %p343 = scmp.lt.s32.totalorder %s340, 1
      %s344 = scalar_select %p343, %s340, 1
      %s345 = smul.addr %s342, 2
      %s346 = sadd.s32 %s344, %s345
      %s347 = smul.addr %s346, 8
      %s348 = scalar_lea.vmem %s1, %s347
      %p349 = pneg %p89
      %p350 = pneg %p86
      %s351 = sadd.s32 %s23, 1
      %s352 = smul.u32 %s351, 2
      %p353 = scmp.lt.s32.totalorder %s352, 1
      %s354 = scalar_select %p353, %s352, 1
      %p355 = scmp.lt.s32.totalorder %s22, 1
      %s356 = scalar_select %p355, %s22, 1
      %p357 = scmp.lt.s32.totalorder %s354, 1
      %s358 = scalar_select %p357, %s354, 1
      %s359 = smul.addr %s356, 2
      %s360 = sadd.s32 %s358, %s359
      %s361 = smul.addr %s360, 8
      %s362 = scalar_lea.vmem %s2, %s361
      %p363 = pneg %p125
      %p364 = pneg %p122
      %p365 = pneg %p146
      %p366 = pneg %p143
      %p367 = pneg %p167
      %p368 = pneg %p164
      %p369 = pneg %p188
      %p370 = pneg %p185
      %p371 = pneg %p209
      %p372 = pneg %p206
      %p373 = pneg %p237
      %p374 = pneg %p234
      %s375 = smul.u32 2, %s23
      %p376 = scmp.lt.s32.totalorder %s22, 1
      %s377 = scalar_select %p376, %s22, 1
      %p378 = scmp.lt.s32.totalorder %s375, 1
      %s379 = scalar_select %p378, %s375, 1
      %s380 = smul.addr %s377, 2
      %s381 = sadd.s32 %s379, %s380
      %s382 = smul.addr %s381, 8
      %s383 = scalar_lea.vmem %s7, %s382
      %s384 = smul.u32 2, %s23
      %p385 = scmp.lt.s32.totalorder %s22, 1
      %s386 = scalar_select %p385, %s22, 1
      %p387 = scmp.lt.s32.totalorder %s384, 1
      %s388 = scalar_select %p387, %s384, 1
      %s389 = smul.addr %s386, 2
      %s390 = sadd.s32 %s388, %s389
      %s391 = smul.addr %s390, 8
      %s392 = scalar_lea.vmem %s0, %s391
      %s393 = smul.u32 2, %s23
      %s394 = smul.u32 %s23, 2
      %s395 = ssub.s32 %s394, 1
      %p396 = scmp.gt.s32.totalorder %s395, 0
      %s397 = scalar_select %p396, %s395, 0
      %p398 = scmp.lt.s32.totalorder %s22, 1
      %s399 = scalar_select %p398, %s22, 1
      %p400 = scmp.lt.s32.totalorder %s397, 1
      %s401 = scalar_select %p400, %s397, 1
      %s402 = smul.addr %s399, 2
      %s403 = sadd.s32 %s401, %s402
      %s404 = smul.addr %s403, 8
      %s405 = scalar_lea.vmem %s1, %s404
      %s406 = smul.u32 %s23, 2
      %s407 = ssub.s32 %s406, 1
      %p408 = scmp.gt.s32.totalorder %s407, 0
      %s409 = scalar_select %p408, %s407, 0
      %s410 = sadd.s32 %s23, 1
      %s411 = smul.u32 %s410, 2
      %p412 = scmp.lt.s32.totalorder %s411, 1
      %s413 = scalar_select %p412, %s411, 1
      %p414 = scmp.lt.s32.totalorder %s22, 1
      %s415 = scalar_select %p414, %s22, 1
      %p416 = scmp.lt.s32.totalorder %s413, 1
      %s417 = scalar_select %p416, %s413, 1
      %s418 = smul.addr %s415, 2
      %s419 = sadd.s32 %s417, %s418
      %s420 = smul.addr %s419, 8
      %s421 = scalar_lea.vmem %s2, %s420
      %s422 = sadd.s32 %s23, 1
      %s423 = smul.u32 %s422, 2
      %p424 = scmp.lt.s32.totalorder %s423, 1
      %s425 = scalar_select %p424, %s423, 1
      %s426 = smul.u32 2, %s23
      %p427 = scmp.lt.s32.totalorder %s22, 1
      %s428 = scalar_select %p427, %s22, 1
      %p429 = scmp.lt.s32.totalorder %s426, 1
      %s430 = scalar_select %p429, %s426, 1
      %s431 = smul.addr %s428, 2
      %s432 = sadd.s32 %s430, %s431
      %s433 = smul.addr %s432, 8
      %s434 = scalar_lea.vmem %s7, %s433
      %s435 = smul.u32 2, %s23
      %v436 = vld [vmem:[%s392] sm:$0xff]
      %v437 = vld [vmem:[%s392 + $0x8] sm:$0xff]
      %v438 = vld [vmem:[%s405] sm:$0xff]
      %v439 = vld [vmem:[%s421] sm:$0xff]
      %p440 = scmp.gt.s32.totalorder %s23, 0
      %s441 = scalar_select %p440, 1, 0
      %v442 = vstv %s441
      %vm443 = vcmp.eq.s32.totalorder %v442, 1
      %v445 = vrot.slane %v436, 2
      %v447 = vsel %vm443, %v438, %v445
      %p448 = scmp.lt.s32.totalorder %s23, 0
      %s449 = scalar_select %p448, 1, 0
      %v450 = vstv %s449
      %vm451 = vcmp.eq.s32.totalorder %v450, 1
      %v453 = vrot.slane %v437, 6
      %v455 = vsel %vm451, %v439, %v453
      %v457 = vrot.slane %v447, 7
      %vm459 = vcmask 1040384
      %v460 = vrot.slane %v436, 7
      %v461 = vrot.slane %v437, 7
      %v462 = vsel %vm459, %v460, %v461
      %v467 = vrot.slane %v455, 7
      %v469 = vsel %vm459, %v457, %v460
      %v470 = vsel %vm459, %v461, %v467
      %v471 = vmax.f32 %v469, 0.0
      %v472 = vmax.f32 %v462, 0.0
      %v473 = vmax.f32 %v470, 0.0
      %477 = vrot.lane.b32.xlu0 %v471, 124
      %v478 = vpop.permute.xlu0 %477
      %479 = vrot.lane.b32.xlu0 %v472, 124
      %v480 = vpop.permute.xlu0 %479
      %481 = vrot.lane.b32.xlu0 %v473, 124
      %v482 = vpop.permute.xlu0 %481
      %486 = vrot.lane.b32.xlu0 %v471, 4
      %v487 = vpop.permute.xlu0 %486
      %488 = vrot.lane.b32.xlu0 %v472, 4
      %v489 = vpop.permute.xlu0 %488
      %490 = vrot.lane.b32.xlu0 %v473, 4
      %v491 = vpop.permute.xlu0 %490
      %vm495 = vcmask 31744
      %v496 = vsel %vm495, %v478, %v487
      %v497 = vsel %vm495, %v480, %v489
      %v498 = vsel %vm495, %v482, %v491
      %vm499 = vcmask 490496
      %v500 = vsel %vm499, %v478, %v487
      %v501 = vsel %vm499, %v480, %v489
      %v502 = vsel %vm499, %v482, %v491
      %v503 = vld [vmem:[%s3] sm:$0x7]
      %v504 = vld [vmem:[%s3 + $0x4] sm:$0x7]
      %v505 = vld [vmem:[%s3 + $0x8] sm:$0x7]
      %v506 = vperm.slane %v503, 0
      %v507 = vmul.f32 %v496, %v506
      %v508 = vmul.f32 %v497, %v506
      %v509 = vadd.f32 %v507, 0.0
      %v510 = vadd.f32 %v508, 0.0
      %v511 = vperm.slane %v503, 1
      %v512 = vmul.f32 %v471, %v511
      %v513 = vmul.f32 %v472, %v511
      %v514 = vadd.f32 %v509, %v512
      %v515 = vadd.f32 %v510, %v513
      %v516 = vperm.slane %v503, 2
      %v517 = vmul.f32 %v500, %v516
      %v518 = vmul.f32 %v501, %v516
      %v519 = vadd.f32 %v514, %v517
      %v520 = vadd.f32 %v515, %v518
      %v521 = vperm.slane %v504, 0
      %v522 = vmul.f32 %v496, %v521
      %v523 = vmul.f32 %v497, %v521
      %v524 = vmul.f32 %v498, %v521
      %vm528 = vcmask 1046528
      %v529 = vrot.slane %v522, 1
      %v530 = vrot.slane %v523, 1
      %v531 = vsel %vm528, %v529, %v530
      %v532 = vrot.slane %v524, 1
      %v533 = vsel %vm528, %v530, %v532
      %v536 = vadd.f32 %v519, %v531
      %v537 = vadd.f32 %v520, %v533
      %v538 = vperm.slane %v504, 1
      %v539 = vmul.f32 %v471, %v538
      %v540 = vmul.f32 %v472, %v538
      %v541 = vmul.f32 %v473, %v538
      %v545 = vrot.slane %v539, 1
      %v546 = vrot.slane %v540, 1
      %v547 = vsel %vm528, %v545, %v546
      %v548 = vrot.slane %v541, 1
      %v549 = vsel %vm528, %v546, %v548
      %v552 = vadd.f32 %v536, %v547
      %v553 = vadd.f32 %v537, %v549
      %v554 = vperm.slane %v504, 2
      %v555 = vmul.f32 %v500, %v554
      %v556 = vmul.f32 %v501, %v554
      %v557 = vmul.f32 %v502, %v554
      %v561 = vrot.slane %v555, 1
      %v562 = vrot.slane %v556, 1
      %v563 = vsel %vm528, %v561, %v562
      %v564 = vrot.slane %v557, 1
      %v565 = vsel %vm528, %v562, %v564
      %v568 = vadd.f32 %v552, %v563
      %v569 = vadd.f32 %v553, %v565
      %v570 = vperm.slane %v505, 0
      %v571 = vmul.f32 %v496, %v570
      %v572 = vmul.f32 %v497, %v570
      %v573 = vmul.f32 %v498, %v570
      %vm577 = vcmask 1045504
      %v578 = vrot.slane %v571, 2
      %v579 = vrot.slane %v572, 2
      %v580 = vsel %vm577, %v578, %v579
      %v581 = vrot.slane %v573, 2
      %v582 = vsel %vm577, %v579, %v581
      %v585 = vadd.f32 %v568, %v580
      %v586 = vadd.f32 %v569, %v582
      %v587 = vperm.slane %v505, 1
      %v588 = vmul.f32 %v471, %v587
      %v589 = vmul.f32 %v472, %v587
      %v590 = vmul.f32 %v473, %v587
      %v594 = vrot.slane %v588, 2
      %v595 = vrot.slane %v589, 2
      %v596 = vsel %vm577, %v594, %v595
      %v597 = vrot.slane %v590, 2
      %v598 = vsel %vm577, %v595, %v597
      %v601 = vadd.f32 %v585, %v596
      %v602 = vadd.f32 %v586, %v598
      %v603 = vperm.slane %v505, 2
      %v604 = vmul.f32 %v500, %v603
      %v605 = vmul.f32 %v501, %v603
      %v606 = vmul.f32 %v502, %v603
      %v610 = vrot.slane %v604, 2
      %v611 = vrot.slane %v605, 2
      %v612 = vsel %vm577, %v610, %v611
      %v613 = vrot.slane %v606, 2
      %v614 = vsel %vm577, %v611, %v613
      %v617 = vadd.f32 %v601, %v612
      %v618 = vadd.f32 %v602, %v614
      %v619 = vld [vmem:[%s4] sm:$0x3]
      %v620 = vld [vmem:[%s6] sm:$0x3]
      %v621 = vperm.slane %v619, 0
      %v622 = vmul.f32 %v617, %v621
      %v623 = vmul.f32 %v618, %v621
      %v624 = vperm.slane %v619, 1
      %v625 = vadd.f32 %v622, %v624
      %v626 = vadd.f32 %v623, %v624
      %v627 = vmax.f32 %v625, 0.0
      %v628 = vmax.f32 %v626, 0.0
      %v629 = vld [vmem:[%s5] sm:$0x7f]
      %632 = vrot.lane.b32.xlu0 %v627, 67
      %v633 = vpop.permute.xlu0 %632
      %634 = vrot.lane.b32.xlu0 %v628, 67
      %v635 = vpop.permute.xlu0 %634
      %638 = vrot.lane.b32.xlu0 %v627, 3
      %v639 = vpop.permute.xlu0 %638
      %640 = vrot.lane.b32.xlu0 %v628, 3
      %v641 = vpop.permute.xlu0 %640
      %vm644 = vcmask 23552
      %v645 = vsel %vm644, %v633, %v639
      %v646 = vsel %vm644, %v635, %v641
      %v647 = vperm.slane %v629, 0
      %v648 = vmul.f32 %v645, %v647
      %v649 = vmul.f32 %v646, %v647
      %v650 = vadd.f32 %v648, 0.0
      %v651 = vadd.f32 %v649, 0.0
      %652 = vrot.lane.b32.xlu0 %v627, 66
      %v653 = vpop.permute.xlu0 %652
      %654 = vrot.lane.b32.xlu0 %v628, 66
      %v655 = vpop.permute.xlu0 %654
      %658 = vrot.lane.b32.xlu0 %v627, 2
      %v659 = vpop.permute.xlu0 %658
      %660 = vrot.lane.b32.xlu0 %v628, 2
      %v661 = vpop.permute.xlu0 %660
      %vm664 = vcmask 15360
      %v665 = vsel %vm664, %v653, %v659
      %v666 = vsel %vm664, %v655, %v661
      %v667 = vperm.slane %v629, 1
      %v668 = vmul.f32 %v665, %v667
      %v669 = vmul.f32 %v666, %v667
      %v670 = vadd.f32 %v650, %v668
      %v671 = vadd.f32 %v651, %v669
      %672 = vrot.lane.b32.xlu0 %v627, 65
      %v673 = vpop.permute.xlu0 %672
      %674 = vrot.lane.b32.xlu0 %v628, 65
      %v675 = vpop.permute.xlu0 %674
      %678 = vrot.lane.b32.xlu0 %v627, 1
      %v679 = vpop.permute.xlu0 %678
      %680 = vrot.lane.b32.xlu0 %v628, 1
      %v681 = vpop.permute.xlu0 %680
      %vm684 = vcmask 7168
      %v685 = vsel %vm684, %v673, %v679
      %v686 = vsel %vm684, %v675, %v681
      %v687 = vperm.slane %v629, 2
      %v688 = vmul.f32 %v685, %v687
      %v689 = vmul.f32 %v686, %v687
      %v690 = vadd.f32 %v670, %v688
      %v691 = vadd.f32 %v671, %v689
      %v692 = vperm.slane %v629, 3
      %v693 = vmul.f32 %v627, %v692
      %v694 = vmul.f32 %v628, %v692
      %v695 = vadd.f32 %v690, %v693
      %v696 = vadd.f32 %v691, %v694
      %697 = vrot.lane.b32.xlu0 %v627, 127
      %v698 = vpop.permute.xlu0 %697
      %699 = vrot.lane.b32.xlu0 %v628, 127
      %v700 = vpop.permute.xlu0 %699
      %703 = vrot.lane.b32.xlu0 %v627, 63
      %v704 = vpop.permute.xlu0 %703
      %705 = vrot.lane.b32.xlu0 %v628, 63
      %v706 = vpop.permute.xlu0 %705
      %vm709 = vcmask 515072
      %v710 = vsel %vm709, %v698, %v704
      %v711 = vsel %vm709, %v700, %v706
      %v712 = vperm.slane %v629, 4
      %v713 = vmul.f32 %v710, %v712
      %v714 = vmul.f32 %v711, %v712
      %v715 = vadd.f32 %v695, %v713
      %v716 = vadd.f32 %v696, %v714
      %717 = vrot.lane.b32.xlu0 %v627, 126
      %v718 = vpop.permute.xlu0 %717
      %719 = vrot.lane.b32.xlu0 %v628, 126
      %v720 = vpop.permute.xlu0 %719
      %723 = vrot.lane.b32.xlu0 %v627, 62
      %v724 = vpop.permute.xlu0 %723
      %725 = vrot.lane.b32.xlu0 %v628, 62
      %v726 = vpop.permute.xlu0 %725
      %vm729 = vcmask 506880
      %v730 = vsel %vm729, %v718, %v724
      %v731 = vsel %vm729, %v720, %v726
      %v732 = vperm.slane %v629, 5
      %v733 = vmul.f32 %v730, %v732
      %v734 = vmul.f32 %v731, %v732
      %v735 = vadd.f32 %v715, %v733
      %v736 = vadd.f32 %v716, %v734
      %737 = vrot.lane.b32.xlu0 %v627, 125
      %v738 = vpop.permute.xlu0 %737
      %739 = vrot.lane.b32.xlu0 %v628, 125
      %v740 = vpop.permute.xlu0 %739
      %743 = vrot.lane.b32.xlu0 %v627, 61
      %v744 = vpop.permute.xlu0 %743
      %745 = vrot.lane.b32.xlu0 %v628, 61
      %v746 = vpop.permute.xlu0 %745
      %vm749 = vcmask 498688
      %v750 = vsel %vm749, %v738, %v744
      %v751 = vsel %vm749, %v740, %v746
      %v752 = vperm.slane %v629, 6
      %v753 = vmul.f32 %v750, %v752
      %v754 = vmul.f32 %v751, %v752
      %v755 = vadd.f32 %v735, %v753
      %v756 = vadd.f32 %v736, %v754
      %v757 = vperm.slane %v620, 0
      %v758 = vmul.f32 %v755, %v757
      %v759 = vmul.f32 %v756, %v757
      %v760 = vadd.f32 %v436, %v758
      %v761 = vadd.f32 %v437, %v759
      %v762 = vperm.slane %v620, 1
      %v763 = vadd.f32 %v760, %v762
      %v764 = vadd.f32 %v761, %v762
      %vm765 = vcmask 523264
      %766 = vst.msk [vmem:[%s434] sm:$0xff] %vm765, %v763
      %767 = vst.msk [vmem:[%s434 + $0x8] sm:$0xff] %vm765, %v764
      %s768 = smul.u32 2, %s23
      %p769 = scmp.lt.s32.totalorder %s22, 1
      %s770 = scalar_select %p769, %s22, 1
      %p771 = scmp.lt.s32.totalorder %s768, 1
      %s772 = scalar_select %p771, %s768, 1
      %s773 = smul.addr %s770, 2
      %s774 = sadd.s32 %s772, %s773
      %s775 = smul.addr %s774, 8
      %s776 = scalar_lea.vmem %s7, %s775
      // Predicated region
      $region49: #{sep_residual_block.5} parent=47 // pred_check
        %p777 = pneg %p234
      $region50: #{sep_residual_block.5} parent=47 // pred_check_branch
        %779 = sbr.rel (%p777) target = $region52
      $region51: #{sep_residual_block.5} parent=47 // pred_region
        %s780 = smul.u32 2, %s23
      $region52: #{sep_residual_block.5} parent=47 // pred_fallthru
        _
    $region48: #{sep_residual_block.5} parent=5 // pred_fallthru
      _
    %p781 = scmp.le.s32.totalorder 2, %s13
    // Predicated region
    $region53: #{sep_residual_block.5} parent=5 // pred_check
      %p782 = pneg %p781
    $region54: #{sep_residual_block.5} parent=5 // pred_check_branch
      %784 = sbr.rel (%p782) target = $region56
    $region55: #{sep_residual_block.5} parent=5 // pred_region
      %s785 = ssub.s32 %s13, 2
      // Predicated region
      $region57: #{sep_residual_block.5} parent=55 // pred_check
        %p786 = pneg %p240
      $region58: #{sep_residual_block.5} parent=55 // pred_check_branch
        %788 = sbr.rel (%p786) target = $region60
      $region59: #{sep_residual_block.5} parent=55 // pred_region
        %s789 = smul.u32 2, %s25
        %p790 = scmp.lt.s32.totalorder %s24, 1
        %s791 = scalar_select %p790, %s24, 1
        %p792 = scmp.lt.s32.totalorder %s789, 1
        %s793 = scalar_select %p792, %s789, 1
        %s794 = smul.addr %s791, 2
        %s795 = sadd.s32 %s793, %s794
        %s796 = smul.addr %s795, 8
        %s797 = scalar_lea.vmem %s7, %s796
      $region60: #{sep_residual_block.5} parent=55 // pred_fallthru
        _
    $region56: #{sep_residual_block.5} parent=5 // pred_fallthru
      _
  $region6: #{sep_residual_block.5} parent=0 // loop_footer
    %s17 = sadd.s32 1, %s13
  $region7: #{sep_residual_block.5} parent=0 // loop_footer_branch
    %12 = sbr.rel target = $region3
  $region8: #{sep_residual_block.5} parent=0 // loop_exit
    _

// kernel: sep_residual_block.3
$region0: #{sep_residual_block.3}
  #allocation0 [shape = 'u32[]', space=smem, size = 0x4, offset = 0x4, fixed_abs, tag = 'smem constant byte address 0x4 - core index']
  #allocation1 [shape = 'u32[72,128]{1,0:T(1,128)}', space=vmem, size = 0x9000, scoped, tag = 'internal scratch']
  %s0 = inlined_call_operand.vmem [shape: f32[2,16,64], index: 0, kind: input, shape index: {}, may-alias: {0,1,2}]
  %s1 = inlined_call_operand.vmem [shape: f32[2,16,64], index: 1, kind: input, shape index: {}, may-alias: {0,1,2}]
  %s2 = inlined_call_operand.vmem [shape: f32[2,16,64], index: 2, kind: input, shape index: {}, may-alias: {0,1,2}]
  %s3 = inlined_call_operand.vmem [shape: f32[3,3,64], index: 3, kind: input, shape index: {}]
  %s4 = inlined_call_operand.vmem [shape: f32[2,2,64], index: 4, kind: output, shape index: {}]
  %s5 = sld [smem:[#allocation0]]
  $region53: #{sep_residual_block.3} parent=0
    _
  %s7 = ssub.s32 1, %s5
  %s8 = scalar_select 0, %s7, %s5
  loop: start=0, step=1, limit=4
  $region2: #{sep_residual_block.3} parent=0 // loop_pre_header
    _
  $region3: #{sep_residual_block.3} parent=0 // loop_header
    %s10 = sphi 0, %s14
    %p11 = scmp.ge.s32.totalorder %s10, 4
    %s17 = sphi 0, %s29
    %s18 = sphi 0, %s25
    %s19 = sphi 0, %s17
    %s20 = sphi 0, %s18
    %s21 = sphi 0, %s19
    %s22 = sphi 0, %s20
    %s34 = sphi 0, %s36
    %s37 = sphi 0, %s34
    %s38 = sphi 0, %s37
    %s54 = sphi 0, %s38
    %s70 = sphi 0, %s72
    %s73 = sphi 0, %s70
    %s74 = sphi 0, %s73
    %s90 = sphi 0, %s74
    %s106 = sphi 0, %s108
    %s109 = sphi 0, %s106
    %s110 = sphi 0, %s109
    %s126 = sphi 0, %s110
    %s130 = sphi 0, %s130
    %s132 = sphi 0, %s130
    %s133 = sphi 0, %s132
    %s147 = sphi 0, %s133
    %s153 = sphi 0, %s155
    %s156 = sphi 0, %s153
    %s157 = sphi 0, %s156
    %s173 = sphi 0, %s157
  $region4: #{sep_residual_block.3} parent=0 // loop_header_branch
    %13 = sbr.rel (%p11) target = $region8
  $region5: #{sep_residual_block.3} parent=0 // loop_body
    %s15 = ssub.s32 %s10, 1
    %s16 = ssub.s32 %s10, 2
    %s23 = sadd.s32 1, %s18
    %p24 = scmp.ge.s32.totalorder %s23, 1
    %s25 = scalar_select %p24, 0, %s23
    %s26 = sadd.s32 1, %s17
    %s27 = scalar_select %p24, %s26, %s17
    %p28 = scmp.ge.s32.totalorder %s27, 2
    %s29 = scalar_select %p28, 0, %s27
    %s30 = ssub.s32 %s17, %s29
    %s31 = ssub.s32 %s18, %s25
    %s32 = sor.u32 %s30, %s31
    %p33 = scmp.eq.s32.totalorder %s32, 0
    %s35 = sadd.s32 %s34, 1
    %s36 = scalar_select %p33, %s34, %s35
    %p39 = pneg %p33
    %p40 = scmp.eq.s32.totalorder %s10, 1
    %p41 = por %p39, %p40
    %p42 = scmp.ne.s32.totalorder %s34, %s37
    %p43 = scmp.eq.s32.totalorder %s10, 0
    %p44 = por %p42, %p43
    %p45 = scmp.ne.s32.totalorder %s34, %s37
    %p46 = scmp.eq.s32.totalorder %s15, 1
    %p47 = por %p45, %p46
    %p48 = scmp.ne.s32.totalorder %s37, %s38
    %p49 = scmp.eq.s32.totalorder %s15, 0
    %p50 = por %p48, %p49
    %p51 = scmp.ne.s32.totalorder %s37, %s38
    %p52 = scmp.eq.s32.totalorder %s16, 1
    %p53 = por %p51, %p52
    %p55 = scmp.ne.s32.totalorder %s38, %s54
    %p56 = scmp.eq.s32.totalorder %s16, 0
    %p57 = por %p55, %p56
    %s58 = smul.u32 %s18, 2
    %s59 = ssub.s32 %s58, 1
    %p60 = scmp.gt.s32.totalorder %s59, 0
    %s61 = scalar_select %p60, %s59, 0
    %s62 = smul.u32 %s25, 2
    %s63 = ssub.s32 %s62, 1
    %p64 = scmp.gt.s32.totalorder %s63, 0
    %s65 = scalar_select %p64, %s63, 0
    %s66 = ssub.s32 %s17, %s29
    %s67 = ssub.s32 %s61, %s65
    %s68 = sor.u32 %s66, %s67
    %p69 = scmp.eq.s32.totalorder %s68, 0
    %s71 = sadd.s32 %s70, 1
    %s72 = scalar_select %p69, %s70, %s71
    %p75 = pneg %p69
    %p76 = scmp.eq.s32.totalorder %s10, 1
    %p77 = por %p75, %p76
    %p78 = scmp.ne.s32.totalorder %s70, %s73
    %p79 = scmp.eq.s32.totalorder %s10, 0
    %p80 = por %p78, %p79
    %p81 = scmp.ne.s32.totalorder %s70, %s73
    %p82 = scmp.eq.s32.totalorder %s15, 1
    %p83 = por %p81, %p82
    %p84 = scmp.ne.s32.totalorder %s73, %s74
    %p85 = scmp.eq.s32.totalorder %s15, 0
    %p86 = por %p84, %p85
    %p87 = scmp.ne.s32.totalorder %s73, %s74
    %p88 = scmp.eq.s32.totalorder %s16, 1
    %p89 = por %p87, %p88
    %p91 = scmp.ne.s32.totalorder %s74, %s90
    %p92 = scmp.eq.s32.totalorder %s16, 0
    %p93 = por %p91, %p92
    %s94 = sadd.s32 %s18, 1
    %s95 = smul.u32 %s94, 2
    %p96 = scmp.lt.s32.totalorder %s95, 1
    %s97 = scalar_select %p96, %s95, 1
    %s98 = sadd.s32 %s25, 1
    %s99 = smul.u32 %s98, 2
    %p100 = scmp.lt.s32.totalorder %s99, 1
    %s101 = scalar_select %p100, %s99, 1
    %s102 = ssub.s32 %s17, %s29
    %s103 = ssub.s32 %s97, %s101
    %s104 = sor.u32 %s102, %s103
    %p105 = scmp.eq.s32.totalorder %s104, 0
    %s107 = sadd.s32 %s106, 1
    %s108 = scalar_select %p105, %s106, %s107
    %p111 = pneg %p105
    %p112 = scmp.eq.s32.totalorder %s10, 1
    %p113 = por %p111, %p112
    %p114 = scmp.ne.s32.totalorder %s106, %s109
    %p115 = scmp.eq.s32.totalorder %s10, 0
    %p116 = por %p114, %p115
    %p117 = scmp.ne.s32.totalorder %s106, %s109
    %p118 = scmp.eq.s32.totalorder %s15, 1
    %p119 = por %p117, %p118
    %p120 = scmp.ne.s32.totalorder %s109, %s110
    %p121 = scmp.eq.s32.totalorder %s15, 0
    %p122 = por %p120, %p121
    %p123 = scmp.ne.s32.totalorder %s109, %s110
    %p124 = scmp.eq.s32.totalorder %s16, 1
    %p125 = por %p123, %p124
    %p127 = scmp.ne.s32.totalorder %s110, %s126
    %p128 = scmp.eq.s32.totalorder %s16, 0
    %p129 = por %p127, %p128
    %s131 = sadd.s32 %s130, 1
    %p134 = scmp.eq.s32.totalorder %s10, 1
    %p135 = scmp.ne.s32.totalorder %s130, %s132
    %p136 = scmp.eq.s32.totalorder %s10, 0
    %p137 = por %p135, %p136
    %p138 = scmp.ne.s32.totalorder %s130, %s132
    %p139 = scmp.eq.s32.totalorder %s15, 1
    %p140 = por %p138, %p139
    %p141 = scmp.ne.s32.totalorder %s132, %s133
    %p142 = scmp.eq.s32.totalorder %s15, 0
    %p143 = por %p141, %p142
    %p144 = scmp.ne.s32.totalorder %s132, %s133
    %p145 = scmp.eq.s32.totalorder %s16, 1
    %p146 = por %p144, %p145
    %p148 = scmp.ne.s32.totalorder %s133, %s147
    %p149 = scmp.eq.s32.totalorder %s16, 0
    %p150 = por %p148, %p149
    %s151 = ssub.s32 %s17, %s29
    %p152 = scmp.eq.s32.totalorder %s151, 0
    %s154 = sadd.s32 %s153, 1
    %s155 = scalar_select %p152, %s153, %s154
    %p158 = pneg %p152
    %p159 = scmp.eq.s32.totalorder %s10, 1
    %p160 = por %p158, %p159
    %p161 = scmp.ne.s32.totalorder %s153, %s156
    %p162 = scmp.eq.s32.totalorder %s10, 0
    %p163 = por %p161, %p162
    %p164 = scmp.ne.s32.totalorder %s153, %s156
    %p165 = scmp.eq.s32.totalorder %s15, 1
    %p166 = por %p164, %p165
    %p167 = scmp.ne.s32.totalorder %s156, %s157
    %p168 = scmp.eq.s32.totalorder %s15, 0
    %p169 = por %p167, %p168
    %p170 = scmp.ne.s32.totalorder %s156, %s157
    %p171 = scmp.eq.s32.totalorder %s16, 1
    %p172 = por %p170, %p171
    %p174 = scmp.ne.s32.totalorder %s157, %s173
    %p175 = scmp.eq.s32.totalorder %s16, 0
    %p176 = por %p174, %p175
    %p177 = scmp.le.s32.totalorder 1, %s10
    %p178 = scmp.lt.s32.totalorder %s10, 3
    %p179 = pnand %p177, %p178
    %p180 = pneg %p179
    // Predicated region
    $region9: #{sep_residual_block.3} parent=5 // pred_check
      _
    $region10: #{sep_residual_block.3} parent=5 // pred_check_branch
      %182 = sbr.rel (%p179) target = $region12
    $region11: #{sep_residual_block.3} parent=5 // pred_region
      %s183 = ssub.s32 %s10, 1
      // Predicated region
      $region13: #{sep_residual_block.3} parent=11 // pred_check
        %p184 = pneg %p143
      $region14: #{sep_residual_block.3} parent=11 // pred_check_branch
        %186 = sbr.rel (%p184) target = $region16
      $region15: #{sep_residual_block.3} parent=11 // pred_region
        _
      $region16: #{sep_residual_block.3} parent=11 // pred_fallthru
        _
    $region12: #{sep_residual_block.3} parent=5 // pred_fallthru
      _
    %p187 = scmp.lt.s32.totalorder %s10, 2
    // Predicated region
    $region17: #{sep_residual_block.3} parent=5 // pred_check
      %p188 = pneg %p187
    $region18: #{sep_residual_block.3} parent=5 // pred_check_branch
      %190 = sbr.rel (%p188) target = $region20
    $region19: #{sep_residual_block.3} parent=5 // pred_region
      // Predicated region
      $region21: #{sep_residual_block.3} parent=19 // pred_check
        %p191 = pneg %p44
      $region22: #{sep_residual_block.3} parent=19 // pred_check_branch
        %193 = sbr.rel (%p191) target = $region24
      $region23: #{sep_residual_block.3} parent=19 // pred_region
        %s194 = smul.u32 2, %s18
        %p195 = scmp.lt.s32.totalorder %s17, 1
        %s196 = scalar_select %p195, %s17, 1
        %p197 = scmp.lt.s32.totalorder %s194, 1
        %s198 = scalar_select %p197, %s194, 1
        %s199 = smul.addr %s196, 2
        %s200 = sadd.s32 %s198, %s199
        %s201 = smul.addr %s200, 8
        %s202 = scalar_lea.vmem %s0, %s201
        %s203 = smul.u32 2, %s18
      $region24: #{sep_residual_block.3} parent=19 // pred_fallthru
        _
      // Predicated region
      $region25: #{sep_residual_block.3} parent=19 // pred_check
        %p204 = pneg %p80
      $region26: #{sep_residual_block.3} parent=19 // pred_check_branch
        %206 = sbr.rel (%p204) target = $region28
      $region27: #{sep_residual_block.3} parent=19 // pred_region
        %s207 = smul.u32 %s18, 2
        %s208 = ssub.s32 %s207, 1
        %p209 = scmp.gt.s32.totalorder %s208, 0
        %s210 = scalar_select %p209, %s208, 0
        %p211 = scmp.lt.s32.totalorder %s17, 1
        %s212 = scalar_select %p211, %s17, 1
        %p213 = scmp.lt.s32.totalorder %s210, 1
        %s214 = scalar_select %p213, %s210, 1
        %s215 = smul.addr %s212, 2
        %s216 = sadd.s32 %s214, %s215
        %s217 = smul.addr %s216, 8
        %s218 = scalar_lea.vmem %s1, %s217
        %s219 = smul.u32 %s18, 2
        %s220 = ssub.s32 %s219, 1
        %p221 = scmp.gt.s32.totalorder %s220, 0
        %s222 = scalar_select %p221, %s220, 0
      $region28: #{sep_residual_block.3} parent=19 // pred_fallthru
        _
      // Predicated region
      $region29: #{sep_residual_block.3} parent=19 // pred_check
        %p223 = pneg %p116
      $region30: #{sep_residual_block.3} parent=19 // pred_check_branch
        %225 = sbr.rel (%p223) target = $region32
      $region31: #{sep_residual_block.3} parent=19 // pred_region
        %s226 = sadd.s32 %s18, 1
        %s227 = smul.u32 %s226, 2
        %p228 = scmp.lt.s32.totalorder %s227, 1
        %s229 = scalar_select %p228, %s227, 1
        %p230 = scmp.lt.s32.totalorder %s17, 1
        %s231 = scalar_select %p230, %s17, 1
        %p232 = scmp.lt.s32.totalorder %s229, 1
        %s233 = scalar_select %p232, %s229, 1
        %s234 = smul.addr %s231, 2
        %s235 = sadd.s32 %s233, %s234
        %s236 = smul.addr %s235, 8
        %s237 = scalar_lea.vmem %s2, %s236
        %s238 = sadd.s32 %s18, 1
        %s239 = smul.u32 %s238, 2
        %p240 = scmp.lt.s32.totalorder %s239, 1
        %s241 = scalar_select %p240, %s239, 1
      $region32: #{sep_residual_block.3} parent=19 // pred_fallthru
        _
    $region20: #{sep_residual_block.3} parent=5 // pred_fallthru
      _
    %p242 = scmp.le.s32.totalorder 1, %s10
    %p243 = scmp.lt.s32.totalorder %s10, 3
    %p244 = pnand %p242, %p243
    %p245 = pneg %p244
    // Predicated region
    $region33: #{sep_residual_block.3} parent=5 // pred_check
      _
    $region34: #{sep_residual_block.3} parent=5 // pred_check_branch
      %247 = sbr.rel (%p244) target = $region36
    $region35: #{sep_residual_block.3} parent=5 // pred_region
      %s248 = ssub.s32 %s10, 1
      %s249 = smul.u32 2, %s20
      %p250 = scmp.lt.s32.totalorder %s19, 1
      %s251 = scalar_select %p250, %s19, 1
      %p252 = scmp.lt.s32.totalorder %s249, 1
      %s253 = scalar_select %p252, %s249, 1
      %s254 = smul.addr %s251, 2
      %s255 = sadd.s32 %s253, %s254
      %s256 = smul.addr %s255, 8
      %s257 = scalar_lea.vmem %s0, %s256
      %p258 = pneg %p50
      %p259 = pneg %p47
      %s260 = smul.u32 %s20, 2
      %s261 = ssub.s32 %s260, 1
      %p262 = scmp.gt.s32.totalorder %s261, 0
      %s263 = scalar_select %p262, %s261, 0
      %p264 = scmp.lt.s32.totalorder %s19, 1
      %s265 = scalar_select %p264, %s19, 1
      %p266 = scmp.lt.s32.totalorder %s263, 1
      %s267 = scalar_select %p266, %s263, 1
      %s268 = smul.addr %s265, 2
      %s269 = sadd.s32 %s267, %s268
      %s270 = smul.addr %s269, 8
      %s271 = scalar_lea.vmem %s1, %s270
      %p272 = pneg %p86
      %p273 = pneg %p83
      %s274 = sadd.s32 %s20, 1
      %s275 = smul.u32 %s274, 2
      %p276 = scmp.lt.s32.totalorder %s275, 1
      %s277 = scalar_select %p276, %s275, 1
      %p278 = scmp.lt.s32.totalorder %s19, 1
      %s279 = scalar_select %p278, %s19, 1
      %p280 = scmp.lt.s32.totalorder %s277, 1
      %s281 = scalar_select %p280, %s277, 1
      %s282 = smul.addr %s279, 2
      %s283 = sadd.s32 %s281, %s282
      %s284 = smul.addr %s283, 8
      %s285 = scalar_lea.vmem %s2, %s284
      %p286 = pneg %p122
      %p287 = pneg %p119
      %p288 = pneg %p143
      %p289 = pneg %p140
      %p290 = pneg %p169
      %p291 = pneg %p166
      %p292 = scmp.lt.s32.totalorder %s19, 1
      %s293 = scalar_select %p292, %s19, 1
      %s294 = smul.addr %s293, 2
      %s295 = scalar_lea.vmem %s4, %s294
      %s296 = smul.u32 2, %s20
      %p297 = scmp.lt.s32.totalorder %s19, 1
      %s298 = scalar_select %p297, %s19, 1
      %p299 = scmp.lt.s32.totalorder %s296, 1
      %s300 = scalar_select %p299, %s296, 1
      %s301 = smul.addr %s298, 2
      %s302 = sadd.s32 %s300, %s301
      %s303 = smul.addr %s302, 8
      %s304 = scalar_lea.vmem %s0, %s303
      %s305 = smul.u32 2, %s20
      %s306 = smul.u32 %s20, 2
      %s307 = ssub.s32 %s306, 1
      %p308 = scmp.gt.s32.totalorder %s307, 0
      %s309 = scalar_select %p308, %s307, 0
      %p310 = scmp.lt.s32.totalorder %s19, 1
      %s311 = scalar_select %p310, %s19, 1
      %p312 = scmp.lt.s32.totalorder %s309, 1
      %s313 = scalar_select %p312, %s309, 1
      %s314 = smul.addr %s311, 2
      %s315 = sadd.s32 %s313, %s314
      %s316 = smul.addr %s315, 8
      %s317 = scalar_lea.vmem %s1, %s316
      %s318 = smul.u32 %s20, 2
      %s319 = ssub.s32 %s318, 1
      %p320 = scmp.gt.s32.totalorder %s319, 0
      %s321 = scalar_select %p320, %s319, 0
      %s322 = sadd.s32 %s20, 1
      %s323 = smul.u32 %s322, 2
      %p324 = scmp.lt.s32.totalorder %s323, 1
      %s325 = scalar_select %p324, %s323, 1
      %p326 = scmp.lt.s32.totalorder %s19, 1
      %s327 = scalar_select %p326, %s19, 1
      %p328 = scmp.lt.s32.totalorder %s325, 1
      %s329 = scalar_select %p328, %s325, 1
      %s330 = smul.addr %s327, 2
      %s331 = sadd.s32 %s329, %s330
      %s332 = smul.addr %s331, 8
      %s333 = scalar_lea.vmem %s2, %s332
      %s334 = sadd.s32 %s20, 1
      %s335 = smul.u32 %s334, 2
      %p336 = scmp.lt.s32.totalorder %s335, 1
      %s337 = scalar_select %p336, %s335, 1
      %p338 = scmp.lt.s32.totalorder %s19, 1
      %s339 = scalar_select %p338, %s19, 1
      %s340 = smul.addr %s339, 2
      %s341 = scalar_lea.vmem %s4, %s340
      %v342 = vld [vmem:[%s304] sm:$0xff]
      %v343 = vld [vmem:[%s304 + $0x8] sm:$0xff]
      %v344 = vld [vmem:[%s317] sm:$0xff]
      %v345 = vld [vmem:[%s333] sm:$0xff]
      %p346 = scmp.gt.s32.totalorder %s20, 0
      %s347 = scalar_select %p346, 1, 0
      %v348 = vstv %s347
      %vm349 = vcmp.eq.s32.totalorder %v348, 1
      %v351 = vrot.slane %v342, 2
      %v353 = vsel %vm349, %v344, %v351
      %p354 = scmp.lt.s32.totalorder %s20, 0
      %s355 = scalar_select %p354, 1, 0
      %v356 = vstv %s355
      %vm357 = vcmp.eq.s32.totalorder %v356, 1
      %v359 = vrot.slane %v343, 6
      %v361 = vsel %vm357, %v345, %v359
      %v363 = vrot.slane %v353, 7
      %vm365 = vcmask 1040384
      %v366 = vrot.slane %v342, 7
      %v367 = vrot.slane %v343, 7
      %v368 = vsel %vm365, %v366, %v367
      %v373 = vrot.slane %v361, 7
      %v375 = vsel %vm365, %v363, %v366
      %v376 = vsel %vm365, %v367, %v373
      %v377 = vmax.f32 %v375, 0.0
      %v378 = vmax.f32 %v368, 0.0
      %v379 = vmax.f32 %v376, 0.0
      %383 = vrot.lane.b32.xlu0 %v377, 124
      %v384 = vpop.permute.xlu0 %383
      %385 = vrot.lane.b32.xlu0 %v378, 124
      %v386 = vpop.permute.xlu0 %385
      %387 = vrot.lane.b32.xlu0 %v379, 124
      %v388 = vpop.permute.xlu0 %387
      %392 = vrot.lane.b32.xlu0 %v377, 4
      %v393 = vpop.permute.xlu0 %392
      %394 = vrot.lane.b32.xlu0 %v378, 4
      %v395 = vpop.permute.xlu0 %394
      %396 = vrot.lane.b32.xlu0 %v379, 4
      %v397 = vpop.permute.xlu0 %396
      %vm401 = vcmask 31744
      %v402 = vsel %vm401, %v384, %v393
      %v403 = vsel %vm401, %v386, %v395
      %v404 = vsel %vm401, %v388, %v397
      %vm405 = vcmask 490496
      %v406 = vsel %vm405, %v384, %v393
      %v407 = vsel %vm405, %v386, %v395
      %v408 = vsel %vm405, %v388, %v397
      %v409 = vld [vmem:[%s3] sm:$0x7]
      %v410 = vld [vmem:[%s3 + $0x4] sm:$0x7]
      %v411 = vld [vmem:[%s3 + $0x8] sm:$0x7]
      %v412 = vperm.slane %v409, 0
      %v413 = vmul.f32 %v402, %v412
      %v414 = vmul.f32 %v403, %v412
      %v415 = vadd.f32 %v413, 0.0
      %v416 = vadd.f32 %v414, 0.0
      %v417 = vperm.slane %v409, 1
      %v418 = vmul.f32 %v377, %v417
      %v419 = vmul.f32 %v378, %v417
      %v420 = vadd.f32 %v415, %v418
      %v421 = vadd.f32 %v416, %v419
      %v422 = vperm.slane %v409, 2
      %v423 = vmul.f32 %v406, %v422
      %v424 = vmul.f32 %v407, %v422
      %v425 = vadd.f32 %v420, %v423
      %v426 = vadd.f32 %v421, %v424
      %v427 = vperm.slane %v410, 0
      %v428 = vmul.f32 %v402, %v427
      %v429 = vmul.f32 %v403, %v427
      %v430 = vmul.f32 %v404, %v427
      %vm434 = vcmask 1046528
      %v435 = vrot.slane %v428, 1
      %v436 = vrot.slane %v429, 1
      %v437 = vsel %vm434, %v435, %v436
      %v438 = vrot.slane %v430, 1
      %v439 = vsel %vm434, %v436, %v438
      %v442 = vadd.f32 %v425, %v437
      %v443 = vadd.f32 %v426, %v439
      %v444 = vperm.slane %v410, 1
      %v445 = vmul.f32 %v377, %v444
      %v446 = vmul.f32 %v378, %v444
      %v447 = vmul.f32 %v379, %v444
      %v451 = vrot.slane %v445, 1
      %v452 = vrot.slane %v446, 1
      %v453 = vsel %vm434, %v451, %v452
      %v454 = vrot.slane %v447, 1
      %v455 = vsel %vm434, %v452, %v454
      %v458 = vadd.f32 %v442, %v453
      %v459 = vadd.f32 %v443, %v455
      %v460 = vperm.slane %v410, 2
      %v461 = vmul.f32 %v406, %v460
      %v462 = vmul.f32 %v407, %v460
      %v463 = vmul.f32 %v408, %v460
      %v467 = vrot.slane %v461, 1
      %v468 = vrot.slane %v462, 1
      %v469 = vsel %vm434, %v467, %v468
      %v470 = vrot.slane %v463, 1
      %v471 = vsel %vm434, %v468, %v470
      %v474 = vadd.f32 %v458, %v469
      %v475 = vadd.f32 %v459, %v471
      %v476 = vperm.slane %v411, 0
      %v477 = vmul.f32 %v402, %v476
      %v478 = vmul.f32 %v403, %v476
      %v479 = vmul.f32 %v404, %v476
      %vm483 = vcmask 1045504
      %v484 = vrot.slane %v477, 2
      %v485 = vrot.slane %v478, 2
      %v486 = vsel %vm483, %v484, %v485
      %v487 = vrot.slane %v479, 2
      %v488 = vsel %vm483, %v485, %v487
      %v491 = vadd.f32 %v474, %v486
      %v492 = vadd.f32 %v475, %v488
      %v493 = vperm.slane %v411, 1
      %v494 = vmul.f32 %v377, %v493
      %v495 = vmul.f32 %v378, %v493
      %v496 = vmul.f32 %v379, %v493
      %v500 = vrot.slane %v494, 2
      %v501 = vrot.slane %v495, 2
      %v502 = vsel %vm483, %v500, %v501
      %v503 = vrot.slane %v496, 2
      %v504 = vsel %vm483, %v501, %v503
      %v507 = vadd.f32 %v491, %v502
      %v508 = vadd.f32 %v492, %v504
      %v509 = vperm.slane %v411, 2
      %v510 = vmul.f32 %v406, %v509
      %v511 = vmul.f32 %v407, %v509
      %v512 = vmul.f32 %v408, %v509
      %v516 = vrot.slane %v510, 2
      %v517 = vrot.slane %v511, 2
      %v518 = vsel %vm483, %v516, %v517
      %v519 = vrot.slane %v512, 2
      %v520 = vsel %vm483, %v517, %v519
      %v523 = vadd.f32 %v507, %v518
      %v524 = vadd.f32 %v508, %v520
      %vm525 = vcmask 523264
      %v526 = vsel %vm525, %v523, 0.0
      %v527 = vsel %vm525, %v524, 0.0
      %v528 = vadd.f32 %v526, %v527
      %v529 = vrot.slane %v528, 4
      %v530 = vadd.f32 %v528, %v529
      %v531 = vrot.slane %v530, 2
      %v532 = vadd.f32 %v530, %v531
      %v533 = vrot.slane %v532, 1
      %v534 = vadd.f32 %v532, %v533
      %v535 = vmul.f32 %v523, %v523
      %v536 = vmul.f32 %v524, %v524
      %v537 = vsel %vm525, %v535, 0.0
      %v538 = vsel %vm525, %v536, 0.0
      %v539 = vadd.f32 %v537, %v538
      %v540 = vrot.slane %v539, 4
      %v541 = vadd.f32 %v539, %v540
      %v542 = vrot.slane %v541, 2
      %v543 = vadd.f32 %v541, %v542
      %v544 = vrot.slane %v543, 1
      %v545 = vadd.f32 %v543, %v544
      %v546 = vsel %vm365, %v534, %v545
      %p547 = scmp.eq.s32.totalorder %s20, 0
      // Predicated region
      $region37: #{sep_residual_block.3} parent=35 // pred_check
        %p548 = pneg %p547
      $region38: #{sep_residual_block.3} parent=35 // pred_check_branch
        %550 = sbr.rel (%p548) target = $region40
      $region39: #{sep_residual_block.3} parent=35 // pred_region
        %vm551 = vcmask 517120
        %552 = vst.msk [vmem:[%s341] sm:$0x3] %vm551, 0.0
      $region40: #{sep_residual_block.3} parent=35 // pred_fallthru
        _
      %v553 = vld [vmem:[%s341] sm:$0x3]
      %v554 = vadd.f32 %v553, %v546
      %vm555 = vcmask 517120
      %556 = vst.msk [vmem:[%s341] sm:$0x3] %vm555, %v554
      %p557 = scmp.lt.s32.totalorder %s19, 1
      %s558 = scalar_select %p557, %s19, 1
      %s559 = smul.addr %s558, 2
      %s560 = scalar_lea.vmem %s4, %s559
      // Predicated region
      $region41: #{sep_residual_block.3} parent=35 // pred_check
        %p561 = pneg %p166
      $region42: #{sep_residual_block.3} parent=35 // pred_check_branch
        %563 = sbr.rel (%p561) target = $region44
      $region43: #{sep_residual_block.3} parent=35 // pred_region
        _
      $region44: #{sep_residual_block.3} parent=35 // pred_fallthru
        _
    $region36: #{sep_residual_block.3} parent=5 // pred_fallthru
      _
    %p564 = scmp.le.s32.totalorder 2, %s10
    // Predicated region
    $region45: #{sep_residual_block.3} parent=5 // pred_check
      %p565 = pneg %p564
    $region46: #{sep_residual_block.3} parent=5 // pred_check_branch
      %567 = sbr.rel (%p565) target = $region48
    $region47: #{sep_residual_block.3} parent=5 // pred_region
      %s568 = ssub.s32 %s10, 2
      // Predicated region
      $region49: #{sep_residual_block.3} parent=47 // pred_check
        %p569 = pneg %p172
      $region50: #{sep_residual_block.3} parent=47 // pred_check_branch
        %571 = sbr.rel (%p569) target = $region52
      $region51: #{sep_residual_block.3} parent=47 // pred_region
        %p572 = scmp.lt.s32.totalorder %s21, 1
        %s573 = scalar_select %p572, %s21, 1
        %s574 = smul.addr %s573, 2
        %s575 = scalar_lea.vmem %s4, %s574
      $region52: #{sep_residual_block.3} parent=47 // pred_fallthru
        _
    $region48: #{sep_residual_block.3} parent=5 // pred_fallthru
      _
  $region6: #{sep_residual_block.3} parent=0 // loop_footer
    %s14 = sadd.s32 1, %s10
  $region7: #{sep_residual_block.3} parent=0 // loop_footer_branch
    %9 = sbr.rel target = $region3
  $region8: #{sep_residual_block.3} parent=0 // loop_exit
    _

</llo_original>
